<compile_context>
chip_gen: v7x
topology: tpu7x:2x2x1
jax: 0.10.0
libtpu: 0.0.40
codegen_flags: <defaults>
</compile_context>

<pallas_src>
import functools
import math

import jax
import jax.numpy as jnp
from jax.experimental import pallas as pl
from jax.experimental.pallas import tpu as pltpu


def _decoder_kernel(W, eps, inv_rw,
                    xtaps_ref, win_ref, bin_ref,
                    gamma_ref, beta_ref,
                    w1_ref, b1_ref, w2_ref, b2_ref,
                    wout_ref, bout_ref,
                    out_ref, act_ref):
    i = pl.program_id(0)
    RW, C = act_ref.shape

    # ---- deconv_in (first grid step only):
    # ConvTranspose2d(1, C, k=(1,3), dilation=(1,3), padding=(0,3)) as (RW,3)@(3,C).
    @pl.when(i == 0)
    def _():
        act_ref[...] = (
            jnp.dot(xtaps_ref[...], win_ref[...],
                    preferred_element_type=jnp.float32) + bin_ref[...])

    # ---- shift-validity masks: built ONCE per grid step as (RW, 1), broadcast in where.
    w_idx = jax.lax.broadcasted_iota(jnp.int32, (RW, 1), 0) % W
    mask_m3 = w_idx >= 3            # p may read a[p-3] without crossing a row edge
    mask_p3 = w_idx < (W - 3)       # p may read a[p+3]

    def taps(a):
        """(RW, 3C) bf16 tap operand for the dilated 1x3 conv, built in-register.

        pltpu.roll keeps the +/-3 row shifts on the XLU (otherwise idle here); the
        wrapped-around rows are exactly the rows the masks zero, so the roll needs
        no explicit zero padding.  No VMEM scratch round-trip.
        """
        s_m3 = jnp.where(mask_m3, pltpu.roll(a, shift=3, axis=0), 0.0)       # a[p-3]
        s_p3 = jnp.where(mask_p3, pltpu.roll(a, shift=RW - 3, axis=0), 0.0)  # a[p+3]
        return jnp.concatenate([s_m3, a, s_p3], axis=1).astype(jnp.bfloat16)

    # ---- ResBlock i: BN (training-mode batch stats) -> conv1 -> relu -> conv2 -> +id -> relu.
    a = act_ref[...]                                            # (RW, C) f32
    mean = jnp.sum(a, axis=0, keepdims=True) * inv_rw           # (1, C)
    ex2 = jnp.sum(a * a, axis=0, keepdims=True) * inv_rw        # (1, C), same read of `a`
    var = jnp.maximum(ex2 - mean * mean, 0.0)                   # clamp cancellation < 0
    scale = gamma_ref[...] * jax.lax.rsqrt(var + eps)           # folded BN affine
    shift = beta_ref[...] - mean * scale
    xn = a * scale + shift                                      # f32 identity for residual

    # Each dilated conv is ONE (RW,3C)@(3C,C) MXU matmul; bf16 operands, f32 accumulation.
    h = jnp.dot(taps(xn), w1_ref[...],
                preferred_element_type=jnp.float32) + b1_ref[...]
    h = jnp.maximum(h, 0.0)
    h = jnp.dot(taps(h), w2_ref[...],
                preferred_element_type=jnp.float32) + b2_ref[...]
    h = jnp.maximum(h + xn, 0.0)

    last = pl.num_programs(0) - 1

    @pl.when(i < last)
    def _():
        act_ref[...] = h                 # skip the resident writeback on the final step

    # ---- deconv_out (last step): ConvTranspose2d(C, 1, k=(1,2), stride=(1,2)).
    # y[2w + k] = sum_ci act[w, ci] * wout[ci, k] + b  -> (RW, 2), interleaved outside.
    @pl.when(i == last)
    def _():
        out_ref[...] = (
            jnp.dot(h, wout_ref[...], preferred_element_type=jnp.float32)
            + bout_ref[...])


def _round_up(v, m):
    return (v + m - 1) // m * m


def _padded_bytes(shape, dtype=jnp.float32):
    """VMEM footprint of one buffer under the native (8*(32/bits), 128) tiling."""
    itemsize = jnp.dtype(dtype).itemsize
    sublane = 8 * (4 // itemsize)
    shape = tuple(shape)
    if len(shape) < 2:
        shape = (1,) + shape
    *lead, s, l = shape
    return (math.prod(lead or (1,)) * _round_up(s, sublane)
            * _round_up(max(l, 1), 128) * itemsize)


def _vmem_capacity_bytes():
    """Physical VMEM of the attached TPU; conservative 64 MiB fallback (v7x)."""
    try:
        info = pltpu.get_tpu_info()
        for name in ("vmem_capacity_bytes", "vmem_size_bytes", "vmem_bytes"):
            cap = getattr(info, name, None)
            if cap:
                return int(cap)
    except Exception:
        pass
    return 64 << 20


def decoder_forward(x, params, *, n_filters, n_blocks):
    """x: (N, 1, H, W) float32 (NCHW, like the PyTorch module). Returns (N, 1, H, 2W)."""
    N, cin, H, W = x.shape
    assert cin == 1
    assert n_blocks >= 1, "kernel writes its output on the last ResBlock grid step"
    assert W > 3, "dilation-3 taps assume W > 3"
    C = n_filters
    RW = N * H * W

    (win, bin_, gamma, beta, w1, b1, w2, b2, wout, bout) = params

    # ---- layout plumbing (zero FLOPs): tap matrix for deconv_in ----
    # xtaps[p, k] = x[p + (3, 0, -3)[k]] within each (n, h) row, zero padded at row edges.
    x3 = x.reshape(N, H, W).astype(jnp.float32)
    xp3 = jnp.pad(x3[..., 3:], ((0, 0), (0, 0), (0, 3)))     # x[w + 3]
    xm3 = jnp.pad(x3[..., :-3], ((0, 0), (0, 0), (3, 0)))    # x[w - 3]
    xtaps = jnp.stack([xp3, x3, xm3], axis=-1).reshape(RW, 3)

    # Conv weights flattened to (3C, C) and cast to bf16 (MXU-native rate, half the DMA).
    w1f = w1.reshape(n_blocks, 3 * C, C).astype(jnp.bfloat16)
    w2f = w2.reshape(n_blocks, 3 * C, C).astype(jnp.bfloat16)

    kernel = functools.partial(_decoder_kernel, W, 1e-5, 1.0 / RW)

    # ---- explicit VMEM budget (conservative: double-buffered blocks + resident scratch) ----
    f32, bf16 = jnp.float32, jnp.bfloat16
    blocks = [((RW, 3), f32), ((3, C), f32), ((1, C), f32), ((1, C), f32), ((1, C), f32),
              ((3 * C, C), bf16), ((1, C), f32), ((3 * C, C), bf16), ((1, C), f32),
              ((C, 2), f32), ((1, 1), f32), ((RW, 2), f32)]
    vmem_needed = (sum(2 * _padded_bytes(s, d) for s, d in blocks)
                   + _padded_bytes((RW, C), f32))
    # Cap at 87.5% of the chip's real capacity (headroom for Mosaic internal scratch).
    vmem_limit = int(min(int(0.875 * _vmem_capacity_bytes()),
                         max(32 << 20, 2 * vmem_needed)))

    args = (xtaps, win, bin_, gamma, beta, w1f, b1, w2f, b2, wout, bout)

    def call(single_buffer_invariant):
        # Grid-invariant blocks only need one pipeline buffer; the second is dead VMEM.
        inv = ({"pipeline_mode": pl.Buffered(1)} if single_buffer_invariant else {})
        in_specs = [
            pl.BlockSpec((RW, 3), lambda i: (0, 0), **inv),              # deconv_in taps
            pl.BlockSpec((3, C), lambda i: (0, 0), **inv),               # deconv_in weight
            pl.BlockSpec((1, C), lambda i: (0, 0), **inv),               # deconv_in bias
            pl.BlockSpec((None, 1, C), lambda i: (i, 0, 0)),             # bn gamma (per block)
            pl.BlockSpec((None, 1, C), lambda i: (i, 0, 0)),             # bn beta
            pl.BlockSpec((None, 3 * C, C), lambda i: (i, 0, 0)),         # conv1 weight (bf16)
            pl.BlockSpec((None, 1, C), lambda i: (i, 0, 0)),             # conv1 bias
            pl.BlockSpec((None, 3 * C, C), lambda i: (i, 0, 0)),         # conv2 weight (bf16)
            pl.BlockSpec((None, 1, C), lambda i: (i, 0, 0)),             # conv2 bias
            pl.BlockSpec((C, 2), lambda i: (0, 0), **inv),               # deconv_out weight
            pl.BlockSpec((1, 1), lambda i: (0, 0), **inv),               # deconv_out bias
        ]
        out_spec = pl.BlockSpec((RW, 2), lambda i: (0, 0), **inv)
        return pl.pallas_call(
            kernel,
            out_shape=jax.ShapeDtypeStruct((RW, 2), jnp.float32),
            grid_spec=pltpu.PrefetchScalarGridSpec(
                num_scalar_prefetch=0,
                grid=(n_blocks,),
                in_specs=in_specs,
                out_specs=out_spec,
                scratch_shapes=[pltpu.VMEM((RW, C), jnp.float32)]),      # resident activation
            compiler_params=pltpu.CompilerParams(
                dimension_semantics=("arbitrary",),
                vmem_limit_bytes=vmem_limit),
        )(*args)

    try:
        out = call(True)
    except Exception:
        # Fallback for Pallas builds that reject pipeline_mode=Buffered(1).
        out = call(False)

    # (RW, 2) -> (N, H, W, 2) -> interleave -> (N, 1, H, 2W)
    y = out.reshape(N, H, W, 2).reshape(N, H, 2 * W)
    return y[:, None, :, :]


def _reference_decoder(x, params, n_blocks):
    """Pure-JAX (XLA conv) reference matching PyTorch Decoder.forward in training mode."""
    win, bin_, gamma, beta, w1, b1, w2, b2, wout, bout = params
    N, _, H, W = x.shape
    C = win.shape[1]
    dn = ("NCHW", "OIHW", "NCHW")
    hi = jax.lax.Precision.HIGHEST
    eps = 1e-5

    # deconv_in == conv(flipped kernel, rhs_dilation 3, padding 3)
    w_in_conv = jnp.transpose(win[::-1, :], (1, 0))[:, None, None, :]    # (C,1,1,3)
    h = jax.lax.conv_general_dilated(
        x, w_in_conv, window_strides=(1, 1), padding=[(0, 0), (3, 3)],
        rhs_dilation=(1, 3), dimension_numbers=dn, precision=hi) + bin_.reshape(1, C, 1, 1)

    def res_conv(a, w, b):
        wc = jnp.transpose(w, (2, 1, 0))[:, :, None, :]                  # (Co,Ci,1,3)
        return jax.lax.conv_general_dilated(
            a, wc, window_strides=(1, 1), padding=[(0, 0), (3, 3)],
            rhs_dilation=(1, 3), dimension_numbers=dn, precision=hi) + b.reshape(1, C, 1, 1)

    for blk in range(n_blocks):
        mean = jnp.mean(h, axis=(0, 2, 3), keepdims=True)
        var = jnp.mean((h - mean) ** 2, axis=(0, 2, 3), keepdims=True)
        hn = (h - mean) * jax.lax.rsqrt(var + eps)
        hn = hn * gamma[blk].reshape(1, C, 1, 1) + beta[blk].reshape(1, C, 1, 1)
        o = jax.nn.relu(res_conv(hn, w1[blk], b1[blk]))
        o = res_conv(o, w2[blk], b2[blk]) + hn
        h = jax.nn.relu(o)

    # deconv_out == conv(flipped kernel, lhs_dilation 2, padding 1)
    w_out_conv = wout[:, ::-1][None, :, None, :]                          # (1,C,1,2)
    y = jax.lax.conv_general_dilated(
        h, w_out_conv, window_strides=(1, 1), padding=[(0, 0), (1, 1)],
        lhs_dilation=(1, 2), dimension_numbers=dn, precision=hi) + bout[0, 0]
    return y


if __name__ == "__main__":
    n_filters, n_blocks = 32, 2
    N, H, W = 2, 4, 16
    C = n_filters

    key = jax.random.PRNGKey(0)
    ks = jax.random.split(key, 11)
    f32 = jnp.float32
    # Parameter layouts (mapping from PyTorch):
    #   win[k, c]        == deconv_in.weight[0, c, 0, k]        (ConvTranspose2d(1, C, (1,3)))
    #   w1[b, k, ci, co] == blocks[b].conv1.weight[co, ci, 0, k]
    #   wout[ci, k]      == deconv_out.weight[ci, 0, 0, k]      (ConvTranspose2d(C, 1, (1,2)))
    win = 0.1 * jax.random.normal(ks[0], (3, C), f32)
    bin_ = 0.1 * jax.random.normal(ks[1], (1, C), f32)
    gamma = 1.0 + 0.1 * jax.random.normal(ks[2], (n_blocks, 1, C), f32)
    beta = 0.1 * jax.random.normal(ks[3], (n_blocks, 1, C), f32)
    w1 = 0.1 * jax.random.normal(ks[4], (n_blocks, 3, C, C), f32)
    b1 = 0.1 * jax.random.normal(ks[5], (n_blocks, 1, C), f32)
    w2 = 0.1 * jax.random.normal(ks[6], (n_blocks, 3, C, C), f32)
    b2 = 0.1 * jax.random.normal(ks[7], (n_blocks, 1, C), f32)
    wout = 0.1 * jax.random.normal(ks[8], (C, 2), f32)
    bout = 0.1 * jax.random.normal(ks[9], (1, 1), f32)
    x = jax.random.normal(ks[10], (N, 1, H, W), f32)

    params = (win, bin_, gamma, beta, w1, b1, w2, b2, wout, bout)

    y = decoder_forward(x, params, n_filters=n_filters, n_blocks=n_blocks)
    y = jax.block_until_ready(y)
    assert y.shape == (N, 1, H, 2 * W), y.shape

    # Cross-check against a pure-XLA reference of the same module.
    # Tolerance is sized for bf16 MXU operands in the ResBlock convs (f32 accumulation)
    # vs. a Precision.HIGHEST f32 reference; logic/layout bugs would produce O(1) errors.
    y_ref = jax.block_until_ready(_reference_decoder(x, params, n_blocks))
    err = float(jnp.max(jnp.abs(y - y_ref)))
    scale = float(jnp.max(jnp.abs(y_ref)))
    assert err < 5e-2 * (1.0 + scale), (err, scale)

    print("KERNEL_OK")
</pallas_src>

<mosaic_0001>
module attributes {stable_mosaic.version = 11 : i64} {
  func.func @_decoder_kernel(%arg0: i32, %arg1: memref<128x3xf32, #tpu.memory_space<vmem>>, %arg2: memref<3x32xf32, #tpu.memory_space<vmem>>, %arg3: memref<1x32xf32, #tpu.memory_space<vmem>>, %arg4: memref<1x1x32xf32, #tpu.memory_space<vmem>>, %arg5: memref<1x1x32xf32, #tpu.memory_space<vmem>>, %arg6: memref<1x96x32xbf16, #tpu.memory_space<vmem>>, %arg7: memref<1x1x32xf32, #tpu.memory_space<vmem>>, %arg8: memref<1x96x32xbf16, #tpu.memory_space<vmem>>, %arg9: memref<1x1x32xf32, #tpu.memory_space<vmem>>, %arg10: memref<32x2xf32, #tpu.memory_space<vmem>>, %arg11: memref<1x1xf32, #tpu.memory_space<vmem>>, %arg12: memref<128x2xf32, #tpu.memory_space<vmem>>, %arg13: memref<128x32xf32, #tpu.memory_space<vmem>>) attributes {dimension_semantics = [#tpu.dimension_semantics<arbitrary>], iteration_bounds = array<i64: 2>, scalar_prefetch = 0 : i64, scratch_operands = 1 : i64, tpu.core_type = #tpu.core_type<tc>, window_params = [{pipeline_mode = #tpu.pipeline_mode<synchronous>, transform_indices = @transform_0, window_bounds = array<i64: 128, 3>}, {pipeline_mode = #tpu.pipeline_mode<synchronous>, transform_indices = @transform_1, window_bounds = array<i64: 3, 32>}, {pipeline_mode = #tpu.pipeline_mode<synchronous>, transform_indices = @transform_2, window_bounds = array<i64: 1, 32>}, {transform_indices = @transform_3, window_bounds = array<i64: 1, 1, 32>}, {transform_indices = @transform_4, window_bounds = array<i64: 1, 1, 32>}, {transform_indices = @transform_5, window_bounds = array<i64: 1, 96, 32>}, {transform_indices = @transform_6, window_bounds = array<i64: 1, 1, 32>}, {transform_indices = @transform_7, window_bounds = array<i64: 1, 96, 32>}, {transform_indices = @transform_8, window_bounds = array<i64: 1, 1, 32>}, {pipeline_mode = #tpu.pipeline_mode<synchronous>, transform_indices = @transform_9, window_bounds = array<i64: 32, 2>}, {pipeline_mode = #tpu.pipeline_mode<synchronous>, transform_indices = @transform_10, window_bounds = array<i64: 1, 1>}, {pipeline_mode = #tpu.pipeline_mode<synchronous>, transform_indices = @transform_11, window_bounds = array<i64: 128, 2>}]} {
    %c0_i32 = arith.constant 0 : i32
    %0 = arith.cmpi eq, %arg0, %c0_i32 : i32
    %1 = arith.extui %0 : i1 to i32
    %c0_i32_0 = arith.constant 0 : i32
    %2 = arith.cmpi ne, %1, %c0_i32_0 : i32
    scf.if %2 {
      %c0_44 = arith.constant 0 : index
      %c0_45 = arith.constant 0 : index
      %101 = vector.load %arg1[%c0_44, %c0_45] : memref<128x3xf32, #tpu.memory_space<vmem>>, vector<128x3xf32>
      %c0_46 = arith.constant 0 : index
      %c0_47 = arith.constant 0 : index
      %102 = vector.load %arg2[%c0_46, %c0_47] : memref<3x32xf32, #tpu.memory_space<vmem>>, vector<3x32xf32>
      %cst_48 = arith.constant dense<0.000000e+00> : vector<128x32xf32>
      %103 = tpu.matmul %101, %102, %cst_48 {dimension_numbers = #tpu.dot_dimension_numbers<[1], [0], [0], [1], [0, 0, 1, 1], [], []>} : vector<128x3xf32>, vector<3x32xf32>, vector<128x32xf32> -> vector<128x32xf32>
      %c0_49 = arith.constant 0 : index
      %c0_50 = arith.constant 0 : index
      %104 = vector.load %arg3[%c0_49, %c0_50] : memref<1x32xf32, #tpu.memory_space<vmem>>, vector<1x32xf32>
      %105 = vector.broadcast %104 : vector<1x32xf32> to vector<128x32xf32>
      %106 = arith.addf %103, %105 : vector<128x32xf32>
      %c0_51 = arith.constant 0 : index
      %c0_52 = arith.constant 0 : index
      %107 = vector.load %arg13[%c0_51, %c0_52] : memref<128x32xf32, #tpu.memory_space<vmem>>, vector<128x32xf32>
      tpu.vector_store %arg13[%c0_51, %c0_52], %106 {strides = array<i32>} : memref<128x32xf32, #tpu.memory_space<vmem>>, vector<128x32xf32>,
    } else {
    }
    %3 = tpu.iota {dimensions = array<i32: 0>} : vector<128x1xi32>
    %c16_i32 = arith.constant 16 : i32
    %c0_i32_1 = arith.constant 0 : i32
    %4 = arith.cmpi eq, %c16_i32, %c0_i32_1 : i32
    %c1_i32 = arith.constant 1 : i32
    %5 = arith.select %4, %c1_i32, %c16_i32 : i32
    %6 = vector.broadcast %5 : i32 to vector<128x1xi32>
    %7 = arith.remsi %3, %6 : vector<128x1xi32>
    %c0_i32_2 = arith.constant 0 : i32
    %8 = vector.broadcast %c0_i32_2 : i32 to vector<128x1xi32>
    %9 = arith.cmpi ne, %7, %8 : vector<128x1xi32>
    %c0_i32_3 = arith.constant 0 : i32
    %10 = vector.broadcast %c0_i32_3 : i32 to vector<128x1xi32>
    %11 = arith.cmpi slt, %7, %10 : vector<128x1xi32>
    %c0_i32_4 = arith.constant 0 : i32
    %12 = arith.cmpi slt, %5, %c0_i32_4 : i32
    %13 = vector.broadcast %12 : i1 to vector<128x1xi1>
    %14 = vector.broadcast %13 : vector<128x1xi1> to vector<128x1xi1>
    %15 = arith.xori %11, %14 : vector<128x1xi1>
    %16 = arith.andi %15, %9 : vector<128x1xi1>
    %17 = vector.broadcast %5 : i32 to vector<128x1xi32>
    %18 = arith.addi %7, %17 : vector<128x1xi32>
    %19 = arith.select %16, %18, %7 : vector<128x1xi1>, vector<128x1xi32>
    %c3_i32 = arith.constant 3 : i32
    %20 = vector.broadcast %c3_i32 : i32 to vector<128x1xi32>
    %21 = arith.cmpi sge, %19, %20 : vector<128x1xi32>
    %c13_i32 = arith.constant 13 : i32
    %22 = vector.broadcast %c13_i32 : i32 to vector<128x1xi32>
    %23 = arith.cmpi slt, %19, %22 : vector<128x1xi32>
    %c0 = arith.constant 0 : index
    %c0_5 = arith.constant 0 : index
    %24 = vector.load %arg13[%c0, %c0_5] : memref<128x32xf32, #tpu.memory_space<vmem>>, vector<128x32xf32>
    %cst = arith.constant dense<0.000000e+00> : vector<32xf32>
    %25 = vector.multi_reduction <add>, %24, %cst [0] : vector<128x32xf32> to vector<32xf32>
    %26 = vector.shape_cast %25 : vector<32xf32> to vector<1x32xf32>
    %cst_6 = arith.constant 7.812500e-03 : f32
    %27 = vector.broadcast %cst_6 : f32 to vector<1x32xf32>
    %28 = arith.mulf %26, %27 : vector<1x32xf32>
    %29 = arith.mulf %24, %24 : vector<128x32xf32>
    %cst_7 = arith.constant dense<0.000000e+00> : vector<32xf32>
    %30 = vector.multi_reduction <add>, %29, %cst_7 [0] : vector<128x32xf32> to vector<32xf32>
    %31 = vector.shape_cast %30 : vector<32xf32> to vector<1x32xf32>
    %cst_8 = arith.constant 7.812500e-03 : f32
    %32 = vector.broadcast %cst_8 : f32 to vector<1x32xf32>
    %33 = arith.mulf %31, %32 : vector<1x32xf32>
    %34 = arith.mulf %28, %28 : vector<1x32xf32>
    %35 = arith.subf %33, %34 : vector<1x32xf32>
    %cst_9 = arith.constant 0.000000e+00 : f32
    %36 = vector.broadcast %cst_9 : f32 to vector<1x32xf32>
    %37 = arith.maximumf %35, %36 : vector<1x32xf32>
    %c0_10 = arith.constant 0 : index
    %c0_11 = arith.constant 0 : index
    %c0_12 = arith.constant 0 : index
    %38 = vector.load %arg4[%c0_10, %c0_11, %c0_12] : memref<1x1x32xf32, #tpu.memory_space<vmem>>, vector<1x1x32xf32>
    %39 = vector.shape_cast %38 : vector<1x1x32xf32> to vector<1x32xf32>
    %cst_13 = arith.constant 9.99999974E-6 : f32
    %40 = vector.broadcast %cst_13 : f32 to vector<1x32xf32>
    %41 = arith.addf %37, %40 : vector<1x32xf32>
    %42 = math.rsqrt %41 : vector<1x32xf32>
    %43 = arith.mulf %39, %42 : vector<1x32xf32>
    %c0_14 = arith.constant 0 : index
    %c0_15 = arith.constant 0 : index
    %c0_16 = arith.constant 0 : index
    %44 = vector.load %arg5[%c0_14, %c0_15, %c0_16] : memref<1x1x32xf32, #tpu.memory_space<vmem>>, vector<1x1x32xf32>
    %45 = vector.shape_cast %44 : vector<1x1x32xf32> to vector<1x32xf32>
    %46 = arith.mulf %28, %43 : vector<1x32xf32>
    %47 = arith.subf %45, %46 : vector<1x32xf32>
    %48 = vector.broadcast %43 : vector<1x32xf32> to vector<128x32xf32>
    %49 = arith.mulf %24, %48 : vector<128x32xf32>
    %50 = vector.broadcast %47 : vector<1x32xf32> to vector<128x32xf32>
    %51 = arith.addf %49, %50 : vector<128x32xf32>
    %c3_i32_17 = arith.constant 3 : i32
    %52 = tpu.dynamic_rotate %51 by %c3_i32_17 dim 0 : vector<128x32xf32>, i32 -> vector<128x32xf32>
    %cst_18 = arith.constant 0.000000e+00 : f32
    %53 = vector.shape_cast %21 : vector<128x1xi1> to vector<128x1xi1>
    %54 = vector.broadcast %53 : vector<128x1xi1> to vector<128x32xi1>
    %55 = vector.broadcast %cst_18 : f32 to vector<128x32xf32>
    %56 = arith.select %54, %52, %55 : vector<128x32xi1>, vector<128x32xf32>
    %c125_i32 = arith.constant 125 : i32
    %57 = tpu.dynamic_rotate %51 by %c125_i32 dim 0 : vector<128x32xf32>, i32 -> vector<128x32xf32>
    %cst_19 = arith.constant 0.000000e+00 : f32
    %58 = vector.shape_cast %23 : vector<128x1xi1> to vector<128x1xi1>
    %59 = vector.broadcast %58 : vector<128x1xi1> to vector<128x32xi1>
    %60 = vector.broadcast %cst_19 : f32 to vector<128x32xf32>
    %61 = arith.select %59, %57, %60 : vector<128x32xi1>, vector<128x32xf32>
    %62 = tpu.concatenate %56, %51, %61 in 1 : vector<128x32xf32>, vector<128x32xf32>, vector<128x32xf32> -> vector<128x96xf32>
    %63 = arith.truncf %62 : vector<128x96xf32> to vector<128x96xbf16>
    %c0_20 = arith.constant 0 : index
    %c0_21 = arith.constant 0 : index
    %c0_22 = arith.constant 0 : index
    %64 = vector.load %arg6[%c0_20, %c0_21, %c0_22] : memref<1x96x32xbf16, #tpu.memory_space<vmem>>, vector<1x96x32xbf16>
    %65 = vector.shape_cast %64 : vector<1x96x32xbf16> to vector<96x32xbf16>
    %cst_23 = arith.constant dense<0.000000e+00> : vector<128x32xf32>
    %66 = tpu.matmul %63, %65, %cst_23 {dimension_numbers = #tpu.dot_dimension_numbers<[1], [0], [0], [1], [0, 0, 1, 1], [], []>} : vector<128x96xbf16>, vector<96x32xbf16>, vector<128x32xf32> -> vector<128x32xf32>
    %c0_24 = arith.constant 0 : index
    %c0_25 = arith.constant 0 : index
    %c0_26 = arith.constant 0 : index
    %67 = vector.load %arg7[%c0_24, %c0_25, %c0_26] : memref<1x1x32xf32, #tpu.memory_space<vmem>>, vector<1x1x32xf32>
    %68 = vector.shape_cast %67 : vector<1x1x32xf32> to vector<1x32xf32>
    %69 = vector.broadcast %68 : vector<1x32xf32> to vector<128x32xf32>
    %70 = arith.addf %66, %69 : vector<128x32xf32>
    %cst_27 = arith.constant 0.000000e+00 : f32
    %71 = vector.broadcast %cst_27 : f32 to vector<128x32xf32>
    %72 = arith.maximumf %70, %71 : vector<128x32xf32>
    %c3_i32_28 = arith.constant 3 : i32
    %73 = tpu.dynamic_rotate %72 by %c3_i32_28 dim 0 : vector<128x32xf32>, i32 -> vector<128x32xf32>
    %cst_29 = arith.constant 0.000000e+00 : f32
    %74 = vector.shape_cast %21 : vector<128x1xi1> to vector<128x1xi1>
    %75 = vector.broadcast %74 : vector<128x1xi1> to vector<128x32xi1>
    %76 = vector.broadcast %cst_29 : f32 to vector<128x32xf32>
    %77 = arith.select %75, %73, %76 : vector<128x32xi1>, vector<128x32xf32>
    %c125_i32_30 = arith.constant 125 : i32
    %78 = tpu.dynamic_rotate %72 by %c125_i32_30 dim 0 : vector<128x32xf32>, i32 -> vector<128x32xf32>
    %cst_31 = arith.constant 0.000000e+00 : f32
    %79 = vector.shape_cast %23 : vector<128x1xi1> to vector<128x1xi1>
    %80 = vector.broadcast %79 : vector<128x1xi1> to vector<128x32xi1>
    %81 = vector.broadcast %cst_31 : f32 to vector<128x32xf32>
    %82 = arith.select %80, %78, %81 : vector<128x32xi1>, vector<128x32xf32>
    %83 = tpu.concatenate %77, %72, %82 in 1 : vector<128x32xf32>, vector<128x32xf32>, vector<128x32xf32> -> vector<128x96xf32>
    %84 = arith.truncf %83 : vector<128x96xf32> to vector<128x96xbf16>
    %c0_32 = arith.constant 0 : index
    %c0_33 = arith.constant 0 : index
    %c0_34 = arith.constant 0 : index
    %85 = vector.load %arg8[%c0_32, %c0_33, %c0_34] : memref<1x96x32xbf16, #tpu.memory_space<vmem>>, vector<1x96x32xbf16>
    %86 = vector.shape_cast %85 : vector<1x96x32xbf16> to vector<96x32xbf16>
    %cst_35 = arith.constant dense<0.000000e+00> : vector<128x32xf32>
    %87 = tpu.matmul %84, %86, %cst_35 {dimension_numbers = #tpu.dot_dimension_numbers<[1], [0], [0], [1], [0, 0, 1, 1], [], []>} : vector<128x96xbf16>, vector<96x32xbf16>, vector<128x32xf32> -> vector<128x32xf32>
    %c0_36 = arith.constant 0 : index
    %c0_37 = arith.constant 0 : index
    %c0_38 = arith.constant 0 : index
    %88 = vector.load %arg9[%c0_36, %c0_37, %c0_38] : memref<1x1x32xf32, #tpu.memory_space<vmem>>, vector<1x1x32xf32>
    %89 = vector.shape_cast %88 : vector<1x1x32xf32> to vector<1x32xf32>
    %90 = vector.broadcast %89 : vector<1x32xf32> to vector<128x32xf32>
    %91 = arith.addf %87, %90 : vector<128x32xf32>
    %92 = arith.addf %91, %51 : vector<128x32xf32>
    %cst_39 = arith.constant 0.000000e+00 : f32
    %93 = vector.broadcast %cst_39 : f32 to vector<128x32xf32>
    %94 = arith.maximumf %92, %93 : vector<128x32xf32>
    %c1_i32_40 = arith.constant 1 : i32
    %95 = arith.cmpi slt, %arg0, %c1_i32_40 : i32
    %96 = arith.extui %95 : i1 to i32
    %c0_i32_41 = arith.constant 0 : i32
    %97 = arith.cmpi ne, %96, %c0_i32_41 : i32
    scf.if %97 {
      %c0_44 = arith.constant 0 : index
      %c0_45 = arith.constant 0 : index
      %101 = vector.load %arg13[%c0_44, %c0_45] : memref<128x32xf32, #tpu.memory_space<vmem>>, vector<128x32xf32>
      tpu.vector_store %arg13[%c0_44, %c0_45], %94 {strides = array<i32>} : memref<128x32xf32, #tpu.memory_space<vmem>>, vector<128x32xf32>,
    } else {
    }
    %c1_i32_42 = arith.constant 1 : i32
    %98 = arith.cmpi eq, %arg0, %c1_i32_42 : i32
    %99 = arith.extui %98 : i1 to i32
    %c0_i32_43 = arith.constant 0 : i32
    %100 = arith.cmpi ne, %99, %c0_i32_43 : i32
    scf.if %100 {
      %c0_44 = arith.constant 0 : index
      %c0_45 = arith.constant 0 : index
      %101 = vector.load %arg10[%c0_44, %c0_45] : memref<32x2xf32, #tpu.memory_space<vmem>>, vector<32x2xf32>
      %cst_46 = arith.constant dense<0.000000e+00> : vector<128x2xf32>
      %102 = tpu.matmul %94, %101, %cst_46 {dimension_numbers = #tpu.dot_dimension_numbers<[1], [0], [0], [1], [0, 0, 1, 1], [], []>} : vector<128x32xf32>, vector<32x2xf32>, vector<128x2xf32> -> vector<128x2xf32>
      %c0_47 = arith.constant 0 : index
      %c0_48 = arith.constant 0 : index
      %103 = vector.load %arg11[%c0_47, %c0_48] : memref<1x1xf32, #tpu.memory_space<vmem>>, vector<1x1xf32>
      %104 = vector.broadcast %103 : vector<1x1xf32> to vector<128x2xf32>
      %105 = arith.addf %102, %104 : vector<128x2xf32>
      %c0_49 = arith.constant 0 : index
      %c0_50 = arith.constant 0 : index
      %106 = vector.load %arg12[%c0_49, %c0_50] : memref<128x2xf32, #tpu.memory_space<vmem>>, vector<128x2xf32>
      tpu.vector_store %arg12[%c0_49, %c0_50], %105 {strides = array<i32>} : memref<128x2xf32, #tpu.memory_space<vmem>>, vector<128x2xf32>,
    } else {
    }
    return
  }
  func.func @transform_0(%arg0: i32) -> (i32, i32) {
    %c0_i32 = arith.constant 0 : i32
    %c0_i32_0 = arith.constant 0 : i32
    %c0_i32_1 = arith.constant 0 : i32
    return %c0_i32, %c0_i32_0 : i32, i32
  }
  func.func @transform_1(%arg0: i32) -> (i32, i32) {
    %c0_i32 = arith.constant 0 : i32
    %c0_i32_0 = arith.constant 0 : i32
    %c0_i32_1 = arith.constant 0 : i32
    return %c0_i32, %c0_i32_0 : i32, i32
  }
  func.func @transform_2(%arg0: i32) -> (i32, i32) {
    %c0_i32 = arith.constant 0 : i32
    %c0_i32_0 = arith.constant 0 : i32
    %c0_i32_1 = arith.constant 0 : i32
    return %c0_i32, %c0_i32_0 : i32, i32
  }
  func.func @transform_3(%arg0: i32) -> (i32, i32, i32) {
    %c0_i32 = arith.constant 0 : i32
    %c0_i32_0 = arith.constant 0 : i32
    %c0_i32_1 = arith.constant 0 : i32
    return %arg0, %c0_i32, %c0_i32_0 : i32, i32, i32
  }
  func.func @transform_4(%arg0: i32) -> (i32, i32, i32) {
    %c0_i32 = arith.constant 0 : i32
    %c0_i32_0 = arith.constant 0 : i32
    %c0_i32_1 = arith.constant 0 : i32
    return %arg0, %c0_i32, %c0_i32_0 : i32, i32, i32
  }
  func.func @transform_5(%arg0: i32) -> (i32, i32, i32) {
    %c0_i32 = arith.constant 0 : i32
    %c0_i32_0 = arith.constant 0 : i32
    %c0_i32_1 = arith.constant 0 : i32
    return %arg0, %c0_i32, %c0_i32_0 : i32, i32, i32
  }
  func.func @transform_6(%arg0: i32) -> (i32, i32, i32) {
    %c0_i32 = arith.constant 0 : i32
    %c0_i32_0 = arith.constant 0 : i32
    %c0_i32_1 = arith.constant 0 : i32
    return %arg0, %c0_i32, %c0_i32_0 : i32, i32, i32
  }
  func.func @transform_7(%arg0: i32) -> (i32, i32, i32) {
    %c0_i32 = arith.constant 0 : i32
    %c0_i32_0 = arith.constant 0 : i32
    %c0_i32_1 = arith.constant 0 : i32
    return %arg0, %c0_i32, %c0_i32_0 : i32, i32, i32
  }
  func.func @transform_8(%arg0: i32) -> (i32, i32, i32) {
    %c0_i32 = arith.constant 0 : i32
    %c0_i32_0 = arith.constant 0 : i32
    %c0_i32_1 = arith.constant 0 : i32
    return %arg0, %c0_i32, %c0_i32_0 : i32, i32, i32
  }
  func.func @transform_9(%arg0: i32) -> (i32, i32) {
    %c0_i32 = arith.constant 0 : i32
    %c0_i32_0 = arith.constant 0 : i32
    %c0_i32_1 = arith.constant 0 : i32
    return %c0_i32, %c0_i32_0 : i32, i32
  }
  func.func @transform_10(%arg0: i32) -> (i32, i32) {
    %c0_i32 = arith.constant 0 : i32
    %c0_i32_0 = arith.constant 0 : i32
    %c0_i32_1 = arith.constant 0 : i32
    return %c0_i32, %c0_i32_0 : i32, i32
  }
  func.func @transform_11(%arg0: i32) -> (i32, i32) {
    %c0_i32 = arith.constant 0 : i32
    %c0_i32_0 = arith.constant 0 : i32
    %c0_i32_1 = arith.constant 0 : i32
    return %c0_i32, %c0_i32_0 : i32, i32
  }
}

module attributes {stable_mosaic.version = 11 : i64} {
  func.func @_decoder_kernel(%arg0: i32, %arg1: memref<128x3xf32, #tpu.memory_space<vmem>>, %arg2: memref<3x32xf32, #tpu.memory_space<vmem>>, %arg3: memref<1x32xf32, #tpu.memory_space<vmem>>, %arg4: memref<1x1x32xf32, #tpu.memory_space<vmem>>, %arg5: memref<1x1x32xf32, #tpu.memory_space<vmem>>, %arg6: memref<1x96x32xbf16, #tpu.memory_space<vmem>>, %arg7: memref<1x1x32xf32, #tpu.memory_space<vmem>>, %arg8: memref<1x96x32xbf16, #tpu.memory_space<vmem>>, %arg9: memref<1x1x32xf32, #tpu.memory_space<vmem>>, %arg10: memref<32x2xf32, #tpu.memory_space<vmem>>, %arg11: memref<1x1xf32, #tpu.memory_space<vmem>>, %arg12: memref<128x2xf32, #tpu.memory_space<vmem>>, %arg13: memref<128x32xf32, #tpu.memory_space<vmem>>) attributes {dimension_semantics = [#tpu.dimension_semantics<arbitrary>], iteration_bounds = array<i64: 2>, scalar_prefetch = 0 : i64, scratch_operands = 1 : i64, tpu.core_type = #tpu.core_type<tc>, window_params = [{pipeline_mode = #tpu.pipeline_mode<synchronous>, transform_indices = @transform_0, window_bounds = array<i64: 128, 3>}, {pipeline_mode = #tpu.pipeline_mode<synchronous>, transform_indices = @transform_1, window_bounds = array<i64: 3, 32>}, {pipeline_mode = #tpu.pipeline_mode<synchronous>, transform_indices = @transform_2, window_bounds = array<i64: 1, 32>}, {transform_indices = @transform_3, window_bounds = array<i64: 1, 1, 32>}, {transform_indices = @transform_4, window_bounds = array<i64: 1, 1, 32>}, {transform_indices = @transform_5, window_bounds = array<i64: 1, 96, 32>}, {transform_indices = @transform_6, window_bounds = array<i64: 1, 1, 32>}, {transform_indices = @transform_7, window_bounds = array<i64: 1, 96, 32>}, {transform_indices = @transform_8, window_bounds = array<i64: 1, 1, 32>}, {pipeline_mode = #tpu.pipeline_mode<synchronous>, transform_indices = @transform_9, window_bounds = array<i64: 32, 2>}, {pipeline_mode = #tpu.pipeline_mode<synchronous>, transform_indices = @transform_10, window_bounds = array<i64: 1, 1>}, {pipeline_mode = #tpu.pipeline_mode<synchronous>, transform_indices = @transform_11, window_bounds = array<i64: 128, 2>}]} {
    %c0_i32 = arith.constant 0 : i32
    %0 = arith.cmpi eq, %arg0, %c0_i32 : i32
    %1 = arith.extui %0 : i1 to i32
    %c0_i32_0 = arith.constant 0 : i32
    %2 = arith.cmpi ne, %1, %c0_i32_0 : i32
    scf.if %2 {
      %c0_44 = arith.constant 0 : index
      %c0_45 = arith.constant 0 : index
      %101 = vector.load %arg1[%c0_44, %c0_45] : memref<128x3xf32, #tpu.memory_space<vmem>>, vector<128x3xf32>
      %c0_46 = arith.constant 0 : index
      %c0_47 = arith.constant 0 : index
      %102 = vector.load %arg2[%c0_46, %c0_47] : memref<3x32xf32, #tpu.memory_space<vmem>>, vector<3x32xf32>
      %cst_48 = arith.constant dense<0.000000e+00> : vector<128x32xf32>
      %103 = tpu.matmul %101, %102, %cst_48 {dimension_numbers = #tpu.dot_dimension_numbers<[1], [0], [0], [1], [0, 0, 1, 1], [], []>} : vector<128x3xf32>, vector<3x32xf32>, vector<128x32xf32> -> vector<128x32xf32>
      %c0_49 = arith.constant 0 : index
      %c0_50 = arith.constant 0 : index
      %104 = vector.load %arg3[%c0_49, %c0_50] : memref<1x32xf32, #tpu.memory_space<vmem>>, vector<1x32xf32>
      %105 = vector.broadcast %104 : vector<1x32xf32> to vector<128x32xf32>
      %106 = arith.addf %103, %105 : vector<128x32xf32>
      %c0_51 = arith.constant 0 : index
      %c0_52 = arith.constant 0 : index
      %107 = vector.load %arg13[%c0_51, %c0_52] : memref<128x32xf32, #tpu.memory_space<vmem>>, vector<128x32xf32>
      tpu.vector_store %arg13[%c0_51, %c0_52], %106 {strides = array<i32>} : memref<128x32xf32, #tpu.memory_space<vmem>>, vector<128x32xf32>,
    } else {
    }
    %3 = tpu.iota {dimensions = array<i32: 0>} : vector<128x1xi32>
    %c16_i32 = arith.constant 16 : i32
    %c0_i32_1 = arith.constant 0 : i32
    %4 = arith.cmpi eq, %c16_i32, %c0_i32_1 : i32
    %c1_i32 = arith.constant 1 : i32
    %5 = arith.select %4, %c1_i32, %c16_i32 : i32
    %6 = vector.broadcast %5 : i32 to vector<128x1xi32>
    %7 = arith.remsi %3, %6 : vector<128x1xi32>
    %c0_i32_2 = arith.constant 0 : i32
    %8 = vector.broadcast %c0_i32_2 : i32 to vector<128x1xi32>
    %9 = arith.cmpi ne, %7, %8 : vector<128x1xi32>
    %c0_i32_3 = arith.constant 0 : i32
    %10 = vector.broadcast %c0_i32_3 : i32 to vector<128x1xi32>
    %11 = arith.cmpi slt, %7, %10 : vector<128x1xi32>
    %c0_i32_4 = arith.constant 0 : i32
    %12 = arith.cmpi slt, %5, %c0_i32_4 : i32
    %13 = vector.broadcast %12 : i1 to vector<128x1xi1>
    %14 = vector.broadcast %13 : vector<128x1xi1> to vector<128x1xi1>
    %15 = arith.xori %11, %14 : vector<128x1xi1>
    %16 = arith.andi %15, %9 : vector<128x1xi1>
    %17 = vector.broadcast %5 : i32 to vector<128x1xi32>
    %18 = arith.addi %7, %17 : vector<128x1xi32>
    %19 = arith.select %16, %18, %7 : vector<128x1xi1>, vector<128x1xi32>
    %c3_i32 = arith.constant 3 : i32
    %20 = vector.broadcast %c3_i32 : i32 to vector<128x1xi32>
    %21 = arith.cmpi sge, %19, %20 : vector<128x1xi32>
    %c13_i32 = arith.constant 13 : i32
    %22 = vector.broadcast %c13_i32 : i32 to vector<128x1xi32>
    %23 = arith.cmpi slt, %19, %22 : vector<128x1xi32>
    %c0 = arith.constant 0 : index
    %c0_5 = arith.constant 0 : index
    %24 = vector.load %arg13[%c0, %c0_5] : memref<128x32xf32, #tpu.memory_space<vmem>>, vector<128x32xf32>
    %cst = arith.constant dense<0.000000e+00> : vector<32xf32>
    %25 = vector.multi_reduction <add>, %24, %cst [0] : vector<128x32xf32> to vector<32xf32>
    %26 = vector.shape_cast %25 : vector<32xf32> to vector<1x32xf32>
    %cst_6 = arith.constant 7.812500e-03 : f32
    %27 = vector.broadcast %cst_6 : f32 to vector<1x32xf32>
    %28 = arith.mulf %26, %27 : vector<1x32xf32>
    %29 = arith.mulf %24, %24 : vector<128x32xf32>
    %cst_7 = arith.constant dense<0.000000e+00> : vector<32xf32>
    %30 = vector.multi_reduction <add>, %29, %cst_7 [0] : vector<128x32xf32> to vector<32xf32>
    %31 = vector.shape_cast %30 : vector<32xf32> to vector<1x32xf32>
    %cst_8 = arith.constant 7.812500e-03 : f32
    %32 = vector.broadcast %cst_8 : f32 to vector<1x32xf32>
    %33 = arith.mulf %31, %32 : vector<1x32xf32>
    %34 = arith.mulf %28, %28 : vector<1x32xf32>
    %35 = arith.subf %33, %34 : vector<1x32xf32>
    %cst_9 = arith.constant 0.000000e+00 : f32
    %36 = vector.broadcast %cst_9 : f32 to vector<1x32xf32>
    %37 = arith.maximumf %35, %36 : vector<1x32xf32>
    %c0_10 = arith.constant 0 : index
    %c0_11 = arith.constant 0 : index
    %c0_12 = arith.constant 0 : index
    %38 = vector.load %arg4[%c0_10, %c0_11, %c0_12] : memref<1x1x32xf32, #tpu.memory_space<vmem>>, vector<1x1x32xf32>
    %39 = vector.shape_cast %38 : vector<1x1x32xf32> to vector<1x32xf32>
    %cst_13 = arith.constant 9.99999974E-6 : f32
    %40 = vector.broadcast %cst_13 : f32 to vector<1x32xf32>
    %41 = arith.addf %37, %40 : vector<1x32xf32>
    %42 = math.rsqrt %41 : vector<1x32xf32>
    %43 = arith.mulf %39, %42 : vector<1x32xf32>
    %c0_14 = arith.constant 0 : index
    %c0_15 = arith.constant 0 : index
    %c0_16 = arith.constant 0 : index
    %44 = vector.load %arg5[%c0_14, %c0_15, %c0_16] : memref<1x1x32xf32, #tpu.memory_space<vmem>>, vector<1x1x32xf32>
    %45 = vector.shape_cast %44 : vector<1x1x32xf32> to vector<1x32xf32>
    %46 = arith.mulf %28, %43 : vector<1x32xf32>
    %47 = arith.subf %45, %46 : vector<1x32xf32>
    %48 = vector.broadcast %43 : vector<1x32xf32> to vector<128x32xf32>
    %49 = arith.mulf %24, %48 : vector<128x32xf32>
    %50 = vector.broadcast %47 : vector<1x32xf32> to vector<128x32xf32>
    %51 = arith.addf %49, %50 : vector<128x32xf32>
    %c3_i32_17 = arith.constant 3 : i32
    %52 = tpu.dynamic_rotate %51 by %c3_i32_17 dim 0 : vector<128x32xf32>, i32 -> vector<128x32xf32>
    %cst_18 = arith.constant 0.000000e+00 : f32
    %53 = vector.shape_cast %21 : vector<128x1xi1> to vector<128x1xi1>
    %54 = vector.broadcast %53 : vector<128x1xi1> to vector<128x32xi1>
    %55 = vector.broadcast %cst_18 : f32 to vector<128x32xf32>
    %56 = arith.select %54, %52, %55 : vector<128x32xi1>, vector<128x32xf32>
    %c125_i32 = arith.constant 125 : i32
    %57 = tpu.dynamic_rotate %51 by %c125_i32 dim 0 : vector<128x32xf32>, i32 -> vector<128x32xf32>
    %cst_19 = arith.constant 0.000000e+00 : f32
    %58 = vector.shape_cast %23 : vector<128x1xi1> to vector<128x1xi1>
    %59 = vector.broadcast %58 : vector<128x1xi1> to vector<128x32xi1>
    %60 = vector.broadcast %cst_19 : f32 to vector<128x32xf32>
    %61 = arith.select %59, %57, %60 : vector<128x32xi1>, vector<128x32xf32>
    %62 = tpu.concatenate %56, %51, %61 in 1 : vector<128x32xf32>, vector<128x32xf32>, vector<128x32xf32> -> vector<128x96xf32>
    %63 = arith.truncf %62 : vector<128x96xf32> to vector<128x96xbf16>
    %c0_20 = arith.constant 0 : index
    %c0_21 = arith.constant 0 : index
    %c0_22 = arith.constant 0 : index
    %64 = vector.load %arg6[%c0_20, %c0_21, %c0_22] : memref<1x96x32xbf16, #tpu.memory_space<vmem>>, vector<1x96x32xbf16>
    %65 = vector.shape_cast %64 : vector<1x96x32xbf16> to vector<96x32xbf16>
    %cst_23 = arith.constant dense<0.000000e+00> : vector<128x32xf32>
    %66 = tpu.matmul %63, %65, %cst_23 {dimension_numbers = #tpu.dot_dimension_numbers<[1], [0], [0], [1], [0, 0, 1, 1], [], []>} : vector<128x96xbf16>, vector<96x32xbf16>, vector<128x32xf32> -> vector<128x32xf32>
    %c0_24 = arith.constant 0 : index
    %c0_25 = arith.constant 0 : index
    %c0_26 = arith.constant 0 : index
    %67 = vector.load %arg7[%c0_24, %c0_25, %c0_26] : memref<1x1x32xf32, #tpu.memory_space<vmem>>, vector<1x1x32xf32>
    %68 = vector.shape_cast %67 : vector<1x1x32xf32> to vector<1x32xf32>
    %69 = vector.broadcast %68 : vector<1x32xf32> to vector<128x32xf32>
    %70 = arith.addf %66, %69 : vector<128x32xf32>
    %cst_27 = arith.constant 0.000000e+00 : f32
    %71 = vector.broadcast %cst_27 : f32 to vector<128x32xf32>
    %72 = arith.maximumf %70, %71 : vector<128x32xf32>
    %c3_i32_28 = arith.constant 3 : i32
    %73 = tpu.dynamic_rotate %72 by %c3_i32_28 dim 0 : vector<128x32xf32>, i32 -> vector<128x32xf32>
    %cst_29 = arith.constant 0.000000e+00 : f32
    %74 = vector.shape_cast %21 : vector<128x1xi1> to vector<128x1xi1>
    %75 = vector.broadcast %74 : vector<128x1xi1> to vector<128x32xi1>
    %76 = vector.broadcast %cst_29 : f32 to vector<128x32xf32>
    %77 = arith.select %75, %73, %76 : vector<128x32xi1>, vector<128x32xf32>
    %c125_i32_30 = arith.constant 125 : i32
    %78 = tpu.dynamic_rotate %72 by %c125_i32_30 dim 0 : vector<128x32xf32>, i32 -> vector<128x32xf32>
    %cst_31 = arith.constant 0.000000e+00 : f32
    %79 = vector.shape_cast %23 : vector<128x1xi1> to vector<128x1xi1>
    %80 = vector.broadcast %79 : vector<128x1xi1> to vector<128x32xi1>
    %81 = vector.broadcast %cst_31 : f32 to vector<128x32xf32>
    %82 = arith.select %80, %78, %81 : vector<128x32xi1>, vector<128x32xf32>
    %83 = tpu.concatenate %77, %72, %82 in 1 : vector<128x32xf32>, vector<128x32xf32>, vector<128x32xf32> -> vector<128x96xf32>
    %84 = arith.truncf %83 : vector<128x96xf32> to vector<128x96xbf16>
    %c0_32 = arith.constant 0 : index
    %c0_33 = arith.constant 0 : index
    %c0_34 = arith.constant 0 : index
    %85 = vector.load %arg8[%c0_32, %c0_33, %c0_34] : memref<1x96x32xbf16, #tpu.memory_space<vmem>>, vector<1x96x32xbf16>
    %86 = vector.shape_cast %85 : vector<1x96x32xbf16> to vector<96x32xbf16>
    %cst_35 = arith.constant dense<0.000000e+00> : vector<128x32xf32>
    %87 = tpu.matmul %84, %86, %cst_35 {dimension_numbers = #tpu.dot_dimension_numbers<[1], [0], [0], [1], [0, 0, 1, 1], [], []>} : vector<128x96xbf16>, vector<96x32xbf16>, vector<128x32xf32> -> vector<128x32xf32>
    %c0_36 = arith.constant 0 : index
    %c0_37 = arith.constant 0 : index
    %c0_38 = arith.constant 0 : index
    %88 = vector.load %arg9[%c0_36, %c0_37, %c0_38] : memref<1x1x32xf32, #tpu.memory_space<vmem>>, vector<1x1x32xf32>
    %89 = vector.shape_cast %88 : vector<1x1x32xf32> to vector<1x32xf32>
    %90 = vector.broadcast %89 : vector<1x32xf32> to vector<128x32xf32>
    %91 = arith.addf %87, %90 : vector<128x32xf32>
    %92 = arith.addf %91, %51 : vector<128x32xf32>
    %cst_39 = arith.constant 0.000000e+00 : f32
    %93 = vector.broadcast %cst_39 : f32 to vector<128x32xf32>
    %94 = arith.maximumf %92, %93 : vector<128x32xf32>
    %c1_i32_40 = arith.constant 1 : i32
    %95 = arith.cmpi slt, %arg0, %c1_i32_40 : i32
    %96 = arith.extui %95 : i1 to i32
    %c0_i32_41 = arith.constant 0 : i32
    %97 = arith.cmpi ne, %96, %c0_i32_41 : i32
    scf.if %97 {
      %c0_44 = arith.constant 0 : index
      %c0_45 = arith.constant 0 : index
      %101 = vector.load %arg13[%c0_44, %c0_45] : memref<128x32xf32, #tpu.memory_space<vmem>>, vector<128x32xf32>
      tpu.vector_store %arg13[%c0_44, %c0_45], %94 {strides = array<i32>} : memref<128x32xf32, #tpu.memory_space<vmem>>, vector<128x32xf32>,
    } else {
    }
    %c1_i32_42 = arith.constant 1 : i32
    %98 = arith.cmpi eq, %arg0, %c1_i32_42 : i32
    %99 = arith.extui %98 : i1 to i32
    %c0_i32_43 = arith.constant 0 : i32
    %100 = arith.cmpi ne, %99, %c0_i32_43 : i32
    scf.if %100 {
      %c0_44 = arith.constant 0 : index
      %c0_45 = arith.constant 0 : index
      %101 = vector.load %arg10[%c0_44, %c0_45] : memref<32x2xf32, #tpu.memory_space<vmem>>, vector<32x2xf32>
      %cst_46 = arith.constant dense<0.000000e+00> : vector<128x2xf32>
      %102 = tpu.matmul %94, %101, %cst_46 {dimension_numbers = #tpu.dot_dimension_numbers<[1], [0], [0], [1], [0, 0, 1, 1], [], []>} : vector<128x32xf32>, vector<32x2xf32>, vector<128x2xf32> -> vector<128x2xf32>
      %c0_47 = arith.constant 0 : index
      %c0_48 = arith.constant 0 : index
      %103 = vector.load %arg11[%c0_47, %c0_48] : memref<1x1xf32, #tpu.memory_space<vmem>>, vector<1x1xf32>
      %104 = vector.broadcast %103 : vector<1x1xf32> to vector<128x2xf32>
      %105 = arith.addf %102, %104 : vector<128x2xf32>
      %c0_49 = arith.constant 0 : index
      %c0_50 = arith.constant 0 : index
      %106 = vector.load %arg12[%c0_49, %c0_50] : memref<128x2xf32, #tpu.memory_space<vmem>>, vector<128x2xf32>
      tpu.vector_store %arg12[%c0_49, %c0_50], %105 {strides = array<i32>} : memref<128x2xf32, #tpu.memory_space<vmem>>, vector<128x2xf32>,
    } else {
    }
    return
  }
  func.func @transform_0(%arg0: i32) -> (i32, i32) {
    %c0_i32 = arith.constant 0 : i32
    %c0_i32_0 = arith.constant 0 : i32
    %c0_i32_1 = arith.constant 0 : i32
    return %c0_i32, %c0_i32_0 : i32, i32
  }
  func.func @transform_1(%arg0: i32) -> (i32, i32) {
    %c0_i32 = arith.constant 0 : i32
    %c0_i32_0 = arith.constant 0 : i32
    %c0_i32_1 = arith.constant 0 : i32
    return %c0_i32, %c0_i32_0 : i32, i32
  }
  func.func @transform_2(%arg0: i32) -> (i32, i32) {
    %c0_i32 = arith.constant 0 : i32
    %c0_i32_0 = arith.constant 0 : i32
    %c0_i32_1 = arith.constant 0 : i32
    return %c0_i32, %c0_i32_0 : i32, i32
  }
  func.func @transform_3(%arg0: i32) -> (i32, i32, i32) {
    %c0_i32 = arith.constant 0 : i32
    %c0_i32_0 = arith.constant 0 : i32
    %c0_i32_1 = arith.constant 0 : i32
    return %arg0, %c0_i32, %c0_i32_0 : i32, i32, i32
  }
  func.func @transform_4(%arg0: i32) -> (i32, i32, i32) {
    %c0_i32 = arith.constant 0 : i32
    %c0_i32_0 = arith.constant 0 : i32
    %c0_i32_1 = arith.constant 0 : i32
    return %arg0, %c0_i32, %c0_i32_0 : i32, i32, i32
  }
  func.func @transform_5(%arg0: i32) -> (i32, i32, i32) {
    %c0_i32 = arith.constant 0 : i32
    %c0_i32_0 = arith.constant 0 : i32
    %c0_i32_1 = arith.constant 0 : i32
    return %arg0, %c0_i32, %c0_i32_0 : i32, i32, i32
  }
  func.func @transform_6(%arg0: i32) -> (i32, i32, i32) {
    %c0_i32 = arith.constant 0 : i32
    %c0_i32_0 = arith.constant 0 : i32
    %c0_i32_1 = arith.constant 0 : i32
    return %arg0, %c0_i32, %c0_i32_0 : i32, i32, i32
  }
  func.func @transform_7(%arg0: i32) -> (i32, i32, i32) {
    %c0_i32 = arith.constant 0 : i32
    %c0_i32_0 = arith.constant 0 : i32
    %c0_i32_1 = arith.constant 0 : i32
    return %arg0, %c0_i32, %c0_i32_0 : i32, i32, i32
  }
  func.func @transform_8(%arg0: i32) -> (i32, i32, i32) {
    %c0_i32 = arith.constant 0 : i32
    %c0_i32_0 = arith.constant 0 : i32
    %c0_i32_1 = arith.constant 0 : i32
    return %arg0, %c0_i32, %c0_i32_0 : i32, i32, i32
  }
  func.func @transform_9(%arg0: i32) -> (i32, i32) {
    %c0_i32 = arith.constant 0 : i32
    %c0_i32_0 = arith.constant 0 : i32
    %c0_i32_1 = arith.constant 0 : i32
    return %c0_i32, %c0_i32_0 : i32, i32
  }
  func.func @transform_10(%arg0: i32) -> (i32, i32) {
    %c0_i32 = arith.constant 0 : i32
    %c0_i32_0 = arith.constant 0 : i32
    %c0_i32_1 = arith.constant 0 : i32
    return %c0_i32, %c0_i32_0 : i32, i32
  }
  func.func @transform_11(%arg0: i32) -> (i32, i32) {
    %c0_i32 = arith.constant 0 : i32
    %c0_i32_0 = arith.constant 0 : i32
    %c0_i32_1 = arith.constant 0 : i32
    return %c0_i32, %c0_i32_0 : i32, i32
  }
}

</mosaic_0001>

<llo_original>
// kernel: tpu_custom_call.1
$region0: #{tpu_custom_call.1}
  #allocation0 [shape = 'u32[]', space=smem, size = 0x4, offset = 0x4, fixed_abs, tag = 'smem constant byte address 0x4 - core index']
  #allocation1 [shape = 'u32[144,128]{1,0:T(1,128)}', space=vmem, size = 0x12000, scoped, tag = 'internal scratch']
  #allocation2 [shape = 'f32[128,32]{1,0:T(8,128)}', space=vmem, size = 0x10000, scoped, tag = 'scratch operand']
  #allocation3 [shape = 'f32[1,1]{1,0:T(1,128)S(1)}', space=vmem, size = 0x200, scoped, tag = 'scoped memory for tpu_custom_call.1']
  %s0 = inlined_call_operand.vmem [shape: f32[128,3], index: 0, kind: input, shape index: {}]
  %s1 = inlined_call_operand.vmem [shape: f32[3,32], index: 1, kind: input, shape index: {}]
  %s2 = inlined_call_operand.vmem [shape: f32[1,32], index: 2, kind: input, shape index: {}]
  %s3 = inlined_call_operand.vmem [shape: f32[2,1,32], index: 3, kind: input, shape index: {}]
  %s4 = inlined_call_operand.vmem [shape: f32[2,1,32], index: 4, kind: input, shape index: {}]
  %s5 = inlined_call_operand.vmem [shape: bf16[2,96,32], index: 5, kind: input, shape index: {}]
  %s6 = inlined_call_operand.vmem [shape: f32[2,1,32], index: 6, kind: input, shape index: {}]
  %s7 = inlined_call_operand.vmem [shape: bf16[2,96,32], index: 7, kind: input, shape index: {}]
  %s8 = inlined_call_operand.vmem [shape: f32[2,1,32], index: 8, kind: input, shape index: {}]
  %s9 = inlined_call_operand.vmem [shape: f32[32,2], index: 9, kind: input, shape index: {}]
  %s10 = inlined_call_operand.<no memory space> [shape: f32[1,1], index: 10, kind: input, shape index: {}]
  %s11 = inlined_call_operand.vmem [shape: f32[128,2], index: 11, kind: output, shape index: {}]
  %s12 = sld [smem:[#allocation0]]
  $region89: #{tpu_custom_call.1} parent=0
    _
  %s14 = ssub.s32 1, %s12
  %s15 = scalar_select 0, %s14, %s12
  %v16 = vstv %s10
  %17 = vst [vmem:[#allocation3] sm:$0x1] %v16
  loop: start=0, step=1, limit=4
  $region2: #{tpu_custom_call.1} parent=0 // loop_pre_header
    _
  $region3: #{tpu_custom_call.1} parent=0 // loop_header
    %s19 = sphi 0, %s23
    %p20 = scmp.ge.s32.totalorder %s19, 4
    %s27 = sphi 0, %s27
    %s29 = sphi 0, %s27
    %s30 = sphi 0, %s29
    %s44 = sphi 0, %s30
    %s48 = sphi 0, %s48
    %s50 = sphi 0, %s48
    %s51 = sphi 0, %s50
    %s65 = sphi 0, %s51
    %s69 = sphi 0, %s69
    %s71 = sphi 0, %s69
    %s72 = sphi 0, %s71
    %s86 = sphi 0, %s72
    %s92 = sphi 0, %s94
    %s95 = sphi 0, %s92
    %s96 = sphi 0, %s95
    %s112 = sphi 0, %s96
    %s118 = sphi 0, %s120
    %s121 = sphi 0, %s118
    %s122 = sphi 0, %s121
    %s138 = sphi 0, %s122
    %s144 = sphi 0, %s146
    %s147 = sphi 0, %s144
    %s148 = sphi 0, %s147
    %s164 = sphi 0, %s148
    %s170 = sphi 0, %s172
    %s173 = sphi 0, %s170
    %s174 = sphi 0, %s173
    %s190 = sphi 0, %s174
    %s196 = sphi 0, %s198
    %s199 = sphi 0, %s196
    %s200 = sphi 0, %s199
    %s216 = sphi 0, %s200
    %s222 = sphi 0, %s224
    %s225 = sphi 0, %s222
    %s226 = sphi 0, %s225
    %s242 = sphi 0, %s226
    %s246 = sphi 0, %s246
    %s248 = sphi 0, %s246
    %s249 = sphi 0, %s248
    %s263 = sphi 0, %s249
    %s267 = sphi 0, %s267
    %s269 = sphi 0, %s267
    %s270 = sphi 0, %s269
    %s284 = sphi 0, %s270
    %s288 = sphi 0, %s288
    %s290 = sphi 0, %s288
    %s291 = sphi 0, %s290
    %s305 = sphi 0, %s291
  $region4: #{tpu_custom_call.1} parent=0 // loop_header_branch
    %22 = sbr.rel (%p20) target = $region8
  $region5: #{tpu_custom_call.1} parent=0 // loop_body
    %s24 = ssub.s32 %s19, 1
    %s25 = ssub.s32 %s19, 2
    %s26 = sadd.s32 %s19, 1
    %s28 = sadd.s32 %s27, 1
    %p31 = scmp.eq.s32.totalorder %s19, 1
    %p32 = scmp.ne.s32.totalorder %s27, %s29
    %p33 = scmp.eq.s32.totalorder %s19, 0
    %p34 = por %p32, %p33
    %p35 = scmp.ne.s32.totalorder %s27, %s29
    %p36 = scmp.eq.s32.totalorder %s24, 1
    %p37 = por %p35, %p36
    %p38 = scmp.ne.s32.totalorder %s29, %s30
    %p39 = scmp.eq.s32.totalorder %s24, 0
    %p40 = por %p38, %p39
    %p41 = scmp.ne.s32.totalorder %s29, %s30
    %p42 = scmp.eq.s32.totalorder %s25, 1
    %p43 = por %p41, %p42
    %p45 = scmp.ne.s32.totalorder %s30, %s44
    %p46 = scmp.eq.s32.totalorder %s25, 0
    %p47 = por %p45, %p46
    %s49 = sadd.s32 %s48, 1
    %p52 = scmp.eq.s32.totalorder %s19, 1
    %p53 = scmp.ne.s32.totalorder %s48, %s50
    %p54 = scmp.eq.s32.totalorder %s19, 0
    %p55 = por %p53, %p54
    %p56 = scmp.ne.s32.totalorder %s48, %s50
    %p57 = scmp.eq.s32.totalorder %s24, 1
    %p58 = por %p56, %p57
    %p59 = scmp.ne.s32.totalorder %s50, %s51
    %p60 = scmp.eq.s32.totalorder %s24, 0
    %p61 = por %p59, %p60
    %p62 = scmp.ne.s32.totalorder %s50, %s51
    %p63 = scmp.eq.s32.totalorder %s25, 1
    %p64 = por %p62, %p63
    %p66 = scmp.ne.s32.totalorder %s51, %s65
    %p67 = scmp.eq.s32.totalorder %s25, 0
    %p68 = por %p66, %p67
    %s70 = sadd.s32 %s69, 1
    %p73 = scmp.eq.s32.totalorder %s19, 1
    %p74 = scmp.ne.s32.totalorder %s69, %s71
    %p75 = scmp.eq.s32.totalorder %s19, 0
    %p76 = por %p74, %p75
    %p77 = scmp.ne.s32.totalorder %s69, %s71
    %p78 = scmp.eq.s32.totalorder %s24, 1
    %p79 = por %p77, %p78
    %p80 = scmp.ne.s32.totalorder %s71, %s72
    %p81 = scmp.eq.s32.totalorder %s24, 0
    %p82 = por %p80, %p81
    %p83 = scmp.ne.s32.totalorder %s71, %s72
    %p84 = scmp.eq.s32.totalorder %s25, 1
    %p85 = por %p83, %p84
    %p87 = scmp.ne.s32.totalorder %s72, %s86
    %p88 = scmp.eq.s32.totalorder %s25, 0
    %p89 = por %p87, %p88
    %s90 = ssub.s32 %s19, %s26
    %p91 = scmp.eq.s32.totalorder %s90, 0
    %s93 = sadd.s32 %s92, 1
    %s94 = scalar_select %p91, %s92, %s93
    %p97 = pneg %p91
    %p98 = scmp.eq.s32.totalorder %s19, 1
    %p99 = por %p97, %p98
    %p100 = scmp.ne.s32.totalorder %s92, %s95
    %p101 = scmp.eq.s32.totalorder %s19, 0
    %p102 = por %p100, %p101
    %p103 = scmp.ne.s32.totalorder %s92, %s95
    %p104 = scmp.eq.s32.totalorder %s24, 1
    %p105 = por %p103, %p104
    %p106 = scmp.ne.s32.totalorder %s95, %s96
    %p107 = scmp.eq.s32.totalorder %s24, 0
    %p108 = por %p106, %p107
    %p109 = scmp.ne.s32.totalorder %s95, %s96
    %p110 = scmp.eq.s32.totalorder %s25, 1
    %p111 = por %p109, %p110
    %p113 = scmp.ne.s32.totalorder %s96, %s112
    %p114 = scmp.eq.s32.totalorder %s25, 0
    %p115 = por %p113, %p114
    %s116 = ssub.s32 %s19, %s26
    %p117 = scmp.eq.s32.totalorder %s116, 0
    %s119 = sadd.s32 %s118, 1
    %s120 = scalar_select %p117, %s118, %s119
    %p123 = pneg %p117
    %p124 = scmp.eq.s32.totalorder %s19, 1
    %p125 = por %p123, %p124
    %p126 = scmp.ne.s32.totalorder %s118, %s121
    %p127 = scmp.eq.s32.totalorder %s19, 0
    %p128 = por %p126, %p127
    %p129 = scmp.ne.s32.totalorder %s118, %s121
    %p130 = scmp.eq.s32.totalorder %s24, 1
    %p131 = por %p129, %p130
    %p132 = scmp.ne.s32.totalorder %s121, %s122
    %p133 = scmp.eq.s32.totalorder %s24, 0
    %p134 = por %p132, %p133
    %p135 = scmp.ne.s32.totalorder %s121, %s122
    %p136 = scmp.eq.s32.totalorder %s25, 1
    %p137 = por %p135, %p136
    %p139 = scmp.ne.s32.totalorder %s122, %s138
    %p140 = scmp.eq.s32.totalorder %s25, 0
    %p141 = por %p139, %p140
    %s142 = ssub.s32 %s19, %s26
    %p143 = scmp.eq.s32.totalorder %s142, 0
    %s145 = sadd.s32 %s144, 1
    %s146 = scalar_select %p143, %s144, %s145
    %p149 = pneg %p143
    %p150 = scmp.eq.s32.totalorder %s19, 1
    %p151 = por %p149, %p150
    %p152 = scmp.ne.s32.totalorder %s144, %s147
    %p153 = scmp.eq.s32.totalorder %s19, 0
    %p154 = por %p152, %p153
    %p155 = scmp.ne.s32.totalorder %s144, %s147
    %p156 = scmp.eq.s32.totalorder %s24, 1
    %p157 = por %p155, %p156
    %p158 = scmp.ne.s32.totalorder %s147, %s148
    %p159 = scmp.eq.s32.totalorder %s24, 0
    %p160 = por %p158, %p159
    %p161 = scmp.ne.s32.totalorder %s147, %s148
    %p162 = scmp.eq.s32.totalorder %s25, 1
    %p163 = por %p161, %p162
    %p165 = scmp.ne.s32.totalorder %s148, %s164
    %p166 = scmp.eq.s32.totalorder %s25, 0
    %p167 = por %p165, %p166
    %s168 = ssub.s32 %s19, %s26
    %p169 = scmp.eq.s32.totalorder %s168, 0
    %s171 = sadd.s32 %s170, 1
    %s172 = scalar_select %p169, %s170, %s171
    %p175 = pneg %p169
    %p176 = scmp.eq.s32.totalorder %s19, 1
    %p177 = por %p175, %p176
    %p178 = scmp.ne.s32.totalorder %s170, %s173
    %p179 = scmp.eq.s32.totalorder %s19, 0
    %p180 = por %p178, %p179
    %p181 = scmp.ne.s32.totalorder %s170, %s173
    %p182 = scmp.eq.s32.totalorder %s24, 1
    %p183 = por %p181, %p182
    %p184 = scmp.ne.s32.totalorder %s173, %s174
    %p185 = scmp.eq.s32.totalorder %s24, 0
    %p186 = por %p184, %p185
    %p187 = scmp.ne.s32.totalorder %s173, %s174
    %p188 = scmp.eq.s32.totalorder %s25, 1
    %p189 = por %p187, %p188
    %p191 = scmp.ne.s32.totalorder %s174, %s190
    %p192 = scmp.eq.s32.totalorder %s25, 0
    %p193 = por %p191, %p192
    %s194 = ssub.s32 %s19, %s26
    %p195 = scmp.eq.s32.totalorder %s194, 0
    %s197 = sadd.s32 %s196, 1
    %s198 = scalar_select %p195, %s196, %s197
    %p201 = pneg %p195
    %p202 = scmp.eq.s32.totalorder %s19, 1
    %p203 = por %p201, %p202
    %p204 = scmp.ne.s32.totalorder %s196, %s199
    %p205 = scmp.eq.s32.totalorder %s19, 0
    %p206 = por %p204, %p205
    %p207 = scmp.ne.s32.totalorder %s196, %s199
    %p208 = scmp.eq.s32.totalorder %s24, 1
    %p209 = por %p207, %p208
    %p210 = scmp.ne.s32.totalorder %s199, %s200
    %p211 = scmp.eq.s32.totalorder %s24, 0
    %p212 = por %p210, %p211
    %p213 = scmp.ne.s32.totalorder %s199, %s200
    %p214 = scmp.eq.s32.totalorder %s25, 1
    %p215 = por %p213, %p214
    %p217 = scmp.ne.s32.totalorder %s200, %s216
    %p218 = scmp.eq.s32.totalorder %s25, 0
    %p219 = por %p217, %p218
    %s220 = ssub.s32 %s19, %s26
    %p221 = scmp.eq.s32.totalorder %s220, 0
    %s223 = sadd.s32 %s222, 1
    %s224 = scalar_select %p221, %s222, %s223
    %p227 = pneg %p221
    %p228 = scmp.eq.s32.totalorder %s19, 1
    %p229 = por %p227, %p228
    %p230 = scmp.ne.s32.totalorder %s222, %s225
    %p231 = scmp.eq.s32.totalorder %s19, 0
    %p232 = por %p230, %p231
    %p233 = scmp.ne.s32.totalorder %s222, %s225
    %p234 = scmp.eq.s32.totalorder %s24, 1
    %p235 = por %p233, %p234
    %p236 = scmp.ne.s32.totalorder %s225, %s226
    %p237 = scmp.eq.s32.totalorder %s24, 0
    %p238 = por %p236, %p237
    %p239 = scmp.ne.s32.totalorder %s225, %s226
    %p240 = scmp.eq.s32.totalorder %s25, 1
    %p241 = por %p239, %p240
    %p243 = scmp.ne.s32.totalorder %s226, %s242
    %p244 = scmp.eq.s32.totalorder %s25, 0
    %p245 = por %p243, %p244
    %s247 = sadd.s32 %s246, 1
    %p250 = scmp.eq.s32.totalorder %s19, 1
    %p251 = scmp.ne.s32.totalorder %s246, %s248
    %p252 = scmp.eq.s32.totalorder %s19, 0
    %p253 = por %p251, %p252
    %p254 = scmp.ne.s32.totalorder %s246, %s248
    %p255 = scmp.eq.s32.totalorder %s24, 1
    %p256 = por %p254, %p255
    %p257 = scmp.ne.s32.totalorder %s248, %s249
    %p258 = scmp.eq.s32.totalorder %s24, 0
    %p259 = por %p257, %p258
    %p260 = scmp.ne.s32.totalorder %s248, %s249
    %p261 = scmp.eq.s32.totalorder %s25, 1
    %p262 = por %p260, %p261
    %p264 = scmp.ne.s32.totalorder %s249, %s263
    %p265 = scmp.eq.s32.totalorder %s25, 0
    %p266 = por %p264, %p265
    %s268 = sadd.s32 %s267, 1
    %p271 = scmp.eq.s32.totalorder %s19, 1
    %p272 = scmp.ne.s32.totalorder %s267, %s269
    %p273 = scmp.eq.s32.totalorder %s19, 0
    %p274 = por %p272, %p273
    %p275 = scmp.ne.s32.totalorder %s267, %s269
    %p276 = scmp.eq.s32.totalorder %s24, 1
    %p277 = por %p275, %p276
    %p278 = scmp.ne.s32.totalorder %s269, %s270
    %p279 = scmp.eq.s32.totalorder %s24, 0
    %p280 = por %p278, %p279
    %p281 = scmp.ne.s32.totalorder %s269, %s270
    %p282 = scmp.eq.s32.totalorder %s25, 1
    %p283 = por %p281, %p282
    %p285 = scmp.ne.s32.totalorder %s270, %s284
    %p286 = scmp.eq.s32.totalorder %s25, 0
    %p287 = por %p285, %p286
    %s289 = sadd.s32 %s288, 1
    %p292 = scmp.eq.s32.totalorder %s19, 1
    %p293 = scmp.ne.s32.totalorder %s288, %s290
    %p294 = scmp.eq.s32.totalorder %s19, 0
    %p295 = por %p293, %p294
    %p296 = scmp.ne.s32.totalorder %s288, %s290
    %p297 = scmp.eq.s32.totalorder %s24, 1
    %p298 = por %p296, %p297
    %p299 = scmp.ne.s32.totalorder %s290, %s291
    %p300 = scmp.eq.s32.totalorder %s24, 0
    %p301 = por %p299, %p300
    %p302 = scmp.ne.s32.totalorder %s290, %s291
    %p303 = scmp.eq.s32.totalorder %s25, 1
    %p304 = por %p302, %p303
    %p306 = scmp.ne.s32.totalorder %s291, %s305
    %p307 = scmp.eq.s32.totalorder %s25, 0
    %p308 = por %p306, %p307
    %p309 = scmp.le.s32.totalorder 1, %s19
    %p310 = scmp.lt.s32.totalorder %s19, 3
    %p311 = pnand %p309, %p310
    %p312 = pneg %p311
    // Predicated region
    $region9: #{tpu_custom_call.1} parent=5 // pred_check
      _
    $region10: #{tpu_custom_call.1} parent=5 // pred_check_branch
      %314 = sbr.rel (%p311) target = $region12
    $region11: #{tpu_custom_call.1} parent=5 // pred_region
      %s315 = ssub.s32 %s19, 1
      // Predicated region
      $region13: #{tpu_custom_call.1} parent=11 // pred_check
        %p316 = pneg %p40
      $region14: #{tpu_custom_call.1} parent=11 // pred_check_branch
        %318 = sbr.rel (%p316) target = $region16
      $region15: #{tpu_custom_call.1} parent=11 // pred_region
        _
      $region16: #{tpu_custom_call.1} parent=11 // pred_fallthru
        _
      // Predicated region
      $region17: #{tpu_custom_call.1} parent=11 // pred_check
        %p319 = pneg %p61
      $region18: #{tpu_custom_call.1} parent=11 // pred_check_branch
        %321 = sbr.rel (%p319) target = $region20
      $region19: #{tpu_custom_call.1} parent=11 // pred_region
        _
      $region20: #{tpu_custom_call.1} parent=11 // pred_fallthru
        _
      // Predicated region
      $region21: #{tpu_custom_call.1} parent=11 // pred_check
        %p322 = pneg %p82
      $region22: #{tpu_custom_call.1} parent=11 // pred_check_branch
        %324 = sbr.rel (%p322) target = $region24
      $region23: #{tpu_custom_call.1} parent=11 // pred_region
        _
      $region24: #{tpu_custom_call.1} parent=11 // pred_fallthru
        _
      // Predicated region
      $region25: #{tpu_custom_call.1} parent=11 // pred_check
        %p325 = pneg %p259
      $region26: #{tpu_custom_call.1} parent=11 // pred_check_branch
        %327 = sbr.rel (%p325) target = $region28
      $region27: #{tpu_custom_call.1} parent=11 // pred_region
        _
      $region28: #{tpu_custom_call.1} parent=11 // pred_fallthru
        _
      // Predicated region
      $region29: #{tpu_custom_call.1} parent=11 // pred_check
        %p328 = pneg %p280
      $region30: #{tpu_custom_call.1} parent=11 // pred_check_branch
        %330 = sbr.rel (%p328) target = $region32
      $region31: #{tpu_custom_call.1} parent=11 // pred_region
        _
      $region32: #{tpu_custom_call.1} parent=11 // pred_fallthru
        _
    $region12: #{tpu_custom_call.1} parent=5 // pred_fallthru
      _
    %p331 = scmp.lt.s32.totalorder %s19, 2
    // Predicated region
    $region33: #{tpu_custom_call.1} parent=5 // pred_check
      %p332 = pneg %p331
    $region34: #{tpu_custom_call.1} parent=5 // pred_check_branch
      %334 = sbr.rel (%p332) target = $region36
    $region35: #{tpu_custom_call.1} parent=5 // pred_region
      // Predicated region
      $region37: #{tpu_custom_call.1} parent=35 // pred_check
        %p335 = pneg %p102
      $region38: #{tpu_custom_call.1} parent=35 // pred_check_branch
        %337 = sbr.rel (%p335) target = $region40
      $region39: #{tpu_custom_call.1} parent=35 // pred_region
        %p338 = scmp.lt.s32.totalorder %s19, 1
        %s339 = scalar_select %p338, %s19, 1
        %s340 = scalar_lea.vmem %s3, %s339
      $region40: #{tpu_custom_call.1} parent=35 // pred_fallthru
        _
      // Predicated region
      $region41: #{tpu_custom_call.1} parent=35 // pred_check
        %p341 = pneg %p128
      $region42: #{tpu_custom_call.1} parent=35 // pred_check_branch
        %343 = sbr.rel (%p341) target = $region44
      $region43: #{tpu_custom_call.1} parent=35 // pred_region
        %p344 = scmp.lt.s32.totalorder %s19, 1
        %s345 = scalar_select %p344, %s19, 1
        %s346 = scalar_lea.vmem %s4, %s345
      $region44: #{tpu_custom_call.1} parent=35 // pred_fallthru
        _
      // Predicated region
      $region45: #{tpu_custom_call.1} parent=35 // pred_check
        %p347 = pneg %p154
      $region46: #{tpu_custom_call.1} parent=35 // pred_check_branch
        %349 = sbr.rel (%p347) target = $region48
      $region47: #{tpu_custom_call.1} parent=35 // pred_region
        %p350 = scmp.lt.s32.totalorder %s19, 1
        %s351 = scalar_select %p350, %s19, 1
        %s352 = smul.addr %s351, 12
        %s353 = smul.addr %s352, 4
        %s354 = scalar_lea.vmem %s5, %s353
      $region48: #{tpu_custom_call.1} parent=35 // pred_fallthru
        _
      // Predicated region
      $region49: #{tpu_custom_call.1} parent=35 // pred_check
        %p355 = pneg %p180
      $region50: #{tpu_custom_call.1} parent=35 // pred_check_branch
        %357 = sbr.rel (%p355) target = $region52
      $region51: #{tpu_custom_call.1} parent=35 // pred_region
        %p358 = scmp.lt.s32.totalorder %s19, 1
        %s359 = scalar_select %p358, %s19, 1
        %s360 = scalar_lea.vmem %s6, %s359
      $region52: #{tpu_custom_call.1} parent=35 // pred_fallthru
        _
      // Predicated region
      $region53: #{tpu_custom_call.1} parent=35 // pred_check
        %p361 = pneg %p206
      $region54: #{tpu_custom_call.1} parent=35 // pred_check_branch
        %363 = sbr.rel (%p361) target = $region56
      $region55: #{tpu_custom_call.1} parent=35 // pred_region
        %p364 = scmp.lt.s32.totalorder %s19, 1
        %s365 = scalar_select %p364, %s19, 1
        %s366 = smul.addr %s365, 12
        %s367 = smul.addr %s366, 4
        %s368 = scalar_lea.vmem %s7, %s367
      $region56: #{tpu_custom_call.1} parent=35 // pred_fallthru
        _
      // Predicated region
      $region57: #{tpu_custom_call.1} parent=35 // pred_check
        %p369 = pneg %p232
      $region58: #{tpu_custom_call.1} parent=35 // pred_check_branch
        %371 = sbr.rel (%p369) target = $region60
      $region59: #{tpu_custom_call.1} parent=35 // pred_region
        %p372 = scmp.lt.s32.totalorder %s19, 1
        %s373 = scalar_select %p372, %s19, 1
        %s374 = scalar_lea.vmem %s8, %s373
      $region60: #{tpu_custom_call.1} parent=35 // pred_fallthru
        _
    $region36: #{tpu_custom_call.1} parent=5 // pred_fallthru
      _
    %p375 = scmp.le.s32.totalorder 1, %s19
    %p376 = scmp.lt.s32.totalorder %s19, 3
    %p377 = pnand %p375, %p376
    %p378 = pneg %p377
    // Predicated region
    $region61: #{tpu_custom_call.1} parent=5 // pred_check
      _
    $region62: #{tpu_custom_call.1} parent=5 // pred_check_branch
      %380 = sbr.rel (%p377) target = $region64
    $region63: #{tpu_custom_call.1} parent=5 // pred_region
      %s381 = ssub.s32 %s19, 1
      %p382 = pneg %p40
      %p383 = pneg %p37
      %p384 = pneg %p61
      %p385 = pneg %p58
      %p386 = pneg %p82
      %p387 = pneg %p79
      %p388 = scmp.lt.s32.totalorder %s24, 1
      %s389 = scalar_select %p388, %s24, 1
      %s390 = scalar_lea.vmem %s3, %s389
      %p391 = pneg %p108
      %p392 = pneg %p105
      %p393 = scmp.lt.s32.totalorder %s24, 1
      %s394 = scalar_select %p393, %s24, 1
      %s395 = scalar_lea.vmem %s4, %s394
      %p396 = pneg %p134
      %p397 = pneg %p131
      %p398 = scmp.lt.s32.totalorder %s24, 1
      %s399 = scalar_select %p398, %s24, 1
      %s400 = smul.addr %s399, 12
      %s401 = smul.addr %s400, 4
      %s402 = scalar_lea.vmem %s5, %s401
      %p403 = pneg %p160
      %p404 = pneg %p157
      %p405 = scmp.lt.s32.totalorder %s24, 1
      %s406 = scalar_select %p405, %s24, 1
      %s407 = scalar_lea.vmem %s6, %s406
      %p408 = pneg %p186
      %p409 = pneg %p183
      %p410 = scmp.lt.s32.totalorder %s24, 1
      %s411 = scalar_select %p410, %s24, 1
      %s412 = smul.addr %s411, 12
      %s413 = smul.addr %s412, 4
      %s414 = scalar_lea.vmem %s7, %s413
      %p415 = pneg %p212
      %p416 = pneg %p209
      %p417 = scmp.lt.s32.totalorder %s24, 1
      %s418 = scalar_select %p417, %s24, 1
      %s419 = scalar_lea.vmem %s8, %s418
      %p420 = pneg %p238
      %p421 = pneg %p235
      %p422 = pneg %p259
      %p423 = pneg %p256
      %p424 = pneg %p280
      %p425 = pneg %p277
      %p426 = pneg %p301
      %p427 = pneg %p298
      %p428 = scmp.lt.s32.totalorder %s24, 1
      %s429 = scalar_select %p428, %s24, 1
      %s430 = scalar_lea.vmem %s3, %s429
      %p431 = scmp.lt.s32.totalorder %s24, 1
      %s432 = scalar_select %p431, %s24, 1
      %s433 = scalar_lea.vmem %s4, %s432
      %p434 = scmp.lt.s32.totalorder %s24, 1
      %s435 = scalar_select %p434, %s24, 1
      %s436 = smul.addr %s435, 12
      %s437 = smul.addr %s436, 4
      %s438 = scalar_lea.vmem %s5, %s437
      %p439 = scmp.lt.s32.totalorder %s24, 1
      %s440 = scalar_select %p439, %s24, 1
      %s441 = scalar_lea.vmem %s6, %s440
      %p442 = scmp.lt.s32.totalorder %s24, 1
      %s443 = scalar_select %p442, %s24, 1
      %s444 = smul.addr %s443, 12
      %s445 = smul.addr %s444, 4
      %s446 = scalar_lea.vmem %s7, %s445
      %p447 = scmp.lt.s32.totalorder %s24, 1
      %s448 = scalar_select %p447, %s24, 1
      %s449 = scalar_lea.vmem %s8, %s448
      %p451 = scmp.eq.s32.totalorder %s24, 0
      // Predicated region
      $region65: #{tpu_custom_call.1} parent=63 // pred_check
        %p452 = pneg %p451
      $region66: #{tpu_custom_call.1} parent=63 // pred_check_branch
        %454 = sbr.rel (%p452) target = $region68
      $region67: #{tpu_custom_call.1} parent=63 // pred_region
        %v455 = vld [vmem:[%s0] sm:$0xff]
        %v456 = vld [vmem:[%s0 + $0x8] sm:$0xff]
        %v457 = vld [vmem:[%s0 + $0x10] sm:$0xff]
        %v458 = vld [vmem:[%s0 + $0x18] sm:$0xff]
        %v459 = vld [vmem:[%s0 + $0x20] sm:$0xff]
        %v460 = vld [vmem:[%s0 + $0x28] sm:$0xff]
        %v461 = vld [vmem:[%s0 + $0x30] sm:$0xff]
        %v462 = vld [vmem:[%s0 + $0x38] sm:$0xff]
        %v463 = vld [vmem:[%s0 + $0x40] sm:$0xff]
        %v464 = vld [vmem:[%s0 + $0x48] sm:$0xff]
        %v465 = vld [vmem:[%s0 + $0x50] sm:$0xff]
        %v466 = vld [vmem:[%s0 + $0x58] sm:$0xff]
        %v467 = vld [vmem:[%s0 + $0x60] sm:$0xff]
        %v468 = vld [vmem:[%s0 + $0x68] sm:$0xff]
        %v469 = vld [vmem:[%s0 + $0x70] sm:$0xff]
        %v470 = vld [vmem:[%s0 + $0x78] sm:$0xff]
        %v471 = vld [vmem:[%s1] sm:$0x7]
        %v472 = vld [vmem:[%s2] sm:$0x1]
        %v474 = vlaneseq
        %v475 = vshrl.u32 %v474, 7
        %v476 = vsub.s32 0, %v475
        %v477 = vrot.slane %v472, %v476
        %vm479 = vcmask 23552
        %v481 = vsel %vm479, %v455, 0
        %v484 = vsel %vm479, %v456, 0
        %v487 = vsel %vm479, %v457, 0
        %v490 = vsel %vm479, %v458, 0
        %v493 = vsel %vm479, %v459, 0
        %v496 = vsel %vm479, %v460, 0
        %v499 = vsel %vm479, %v461, 0
        %v502 = vsel %vm479, %v462, 0
        %v505 = vsel %vm479, %v463, 0
        %v508 = vsel %vm479, %v464, 0
        %v511 = vsel %vm479, %v465, 0
        %v514 = vsel %vm479, %v466, 0
        %v517 = vsel %vm479, %v467, 0
        %v520 = vsel %vm479, %v468, 0
        %v523 = vsel %vm479, %v469, 0
        %v526 = vsel %vm479, %v470, 0
        %vm528 = vcmask 1042432
        %v530 = vsel %vm528, %v471, 0
        %532 = vmatprep.subr.mxu0 0.0
        %533 = vmatpush1.msra.mxu0 %v530
        %534 = vmatprep.subr.mxu0 0.0
        %535 = vmatpush1.msra.mxu0 0.0
        %536 = vmatprep.subr.mxu0 0.0
        %537 = vmatpush1.msra.mxu0 0.0
        %538 = vmatprep.subr.mxu0 0.0
        %539 = vmatpush1.msra.mxu0 0.0
        %540 = vmatprep.subr.mxu0 0.0
        %541 = vmatpush1.msra.mxu0 0.0
        %542 = vmatprep.subr.mxu0 0.0
        %543 = vmatpush1.msra.mxu0 0.0
        %544 = vmatprep.subr.mxu0 0.0
        %545 = vmatpush1.msra.mxu0 0.0
        %546 = vmatprep.subr.mxu0 0.0
        %547 = vmatpush1.msra.mxu0 0.0
        %548 = vmatprep.subr.mxu0 0.0
        %549 = vmatpush1.msra.mxu0 0.0
        %550 = vmatprep.subr.mxu0 0.0
        %551 = vmatpush1.msra.mxu0 0.0
        %552 = vmatprep.subr.mxu0 0.0
        %553 = vmatpush1.msra.mxu0 0.0
        %554 = vmatprep.subr.mxu0 0.0
        %555 = vmatpush1.msra.mxu0 0.0
        %556 = vmatprep.subr.mxu0 0.0
        %557 = vmatpush1.msra.mxu0 0.0
        %558 = vmatprep.subr.mxu0 0.0
        %559 = vmatpush1.msra.mxu0 0.0
        %560 = vmatprep.subr.mxu0 0.0
        %561 = vmatpush1.msra.mxu0 0.0
        %562 = vmatprep.subr.mxu0 0.0
        %563 = vmatpush1.msra.mxu0 0.0
        %564 = vmatprep.subr.mxu0 0.0
        %565 = vmatpush1.msra.mxu0 0.0
        %566 = vmatprep.subr.mxu0 0.0
        %567 = vmatpush1.msra.mxu0 0.0
        %568 = vmatprep.subr.mxu0 0.0
        %569 = vmatpush1.msra.mxu0 0.0
        %570 = vmatprep.subr.mxu0 0.0
        %571 = vmatpush1.msra.mxu0 0.0
        %572 = vmatprep.subr.mxu0 0.0
        %573 = vmatpush1.msra.mxu0 0.0
        %574 = vmatprep.subr.mxu0 0.0
        %575 = vmatpush1.msra.mxu0 0.0
        %576 = vmatprep.subr.mxu0 0.0
        %577 = vmatpush1.msra.mxu0 0.0
        %578 = vmatprep.subr.mxu0 0.0
        %579 = vmatpush1.msra.mxu0 0.0
        %580 = vmatprep.subr.mxu0 0.0
        %581 = vmatpush1.msra.mxu0 0.0
        %582 = vmatprep.subr.mxu0 0.0
        %583 = vmatpush1.msra.mxu0 0.0
        %584 = vmatprep.subr.mxu0 0.0
        %585 = vmatpush1.msra.mxu0 0.0
        %586 = vmatprep.subr.mxu0 0.0
        %587 = vmatpush1.msra.mxu0 0.0
        %588 = vmatprep.subr.mxu0 0.0
        %589 = vmatpush1.msra.mxu0 0.0
        %590 = vmatprep.subr.mxu0 0.0
        %591 = vmatpush1.msra.mxu0 0.0
        %592 = vmatprep.subr.mxu0 0.0
        %593 = vmatpush1.msra.mxu0 0.0
        %594 = vmatprep.subr.mxu0 0.0
        %595 = vmatpush1.msra.mxu0 0.0
        %596 = vmatprep.mubr.f32.mxu0 0.0
        %597 = vmatmul.mubr.f32.gmra.mrb[0].mxu0 %v481
        %v598 = vpop.f32.mrb[0].mxu0
        %v599 = vadd.f32 %v477, %v598
        %v600 = vpop.f32.mrb[0].mxu0
        %601 = vmatprep.mubr.f32.mxu0 0.0
        %602 = vmatmul.mubr.f32.gmra.mrb[0].mxu0 %v484
        %v603 = vpop.f32.mrb[0].mxu0
        %v604 = vadd.f32 %v477, %v603
        %v605 = vpop.f32.mrb[0].mxu0
        %606 = vmatprep.mubr.f32.mxu0 0.0
        %607 = vmatmul.mubr.f32.gmra.mrb[0].mxu0 %v487
        %v608 = vpop.f32.mrb[0].mxu0
        %v609 = vadd.f32 %v477, %v608
        %v610 = vpop.f32.mrb[0].mxu0
        %611 = vmatprep.mubr.f32.mxu0 0.0
        %612 = vmatmul.mubr.f32.gmra.mrb[0].mxu0 %v490
        %v613 = vpop.f32.mrb[0].mxu0
        %v614 = vadd.f32 %v477, %v613
        %v615 = vpop.f32.mrb[0].mxu0
        %616 = vmatprep.mubr.f32.mxu0 0.0
        %617 = vmatmul.mubr.f32.gmra.mrb[0].mxu0 %v493
        %v618 = vpop.f32.mrb[0].mxu0
        %v619 = vadd.f32 %v477, %v618
        %v620 = vpop.f32.mrb[0].mxu0
        %621 = vmatprep.mubr.f32.mxu0 0.0
        %622 = vmatmul.mubr.f32.gmra.mrb[0].mxu0 %v496
        %v623 = vpop.f32.mrb[0].mxu0
        %v624 = vadd.f32 %v477, %v623
        %v625 = vpop.f32.mrb[0].mxu0
        %626 = vmatprep.mubr.f32.mxu0 0.0
        %627 = vmatmul.mubr.f32.gmra.mrb[0].mxu0 %v499
        %v628 = vpop.f32.mrb[0].mxu0
        %v629 = vadd.f32 %v477, %v628
        %v630 = vpop.f32.mrb[0].mxu0
        %631 = vmatprep.mubr.f32.mxu0 0.0
        %632 = vmatmul.mubr.f32.gmra.mrb[0].mxu0 %v502
        %v633 = vpop.f32.mrb[0].mxu0
        %v634 = vadd.f32 %v477, %v633
        %v635 = vpop.f32.mrb[0].mxu0
        %636 = vmatprep.mubr.f32.mxu0 0.0
        %637 = vmatmul.mubr.f32.gmra.mrb[0].mxu0 %v505
        %v638 = vpop.f32.mrb[0].mxu0
        %v639 = vadd.f32 %v477, %v638
        %v640 = vpop.f32.mrb[0].mxu0
        %641 = vmatprep.mubr.f32.mxu0 0.0
        %642 = vmatmul.mubr.f32.gmra.mrb[0].mxu0 %v508
        %v643 = vpop.f32.mrb[0].mxu0
        %v644 = vadd.f32 %v477, %v643
        %v645 = vpop.f32.mrb[0].mxu0
        %646 = vmatprep.mubr.f32.mxu0 0.0
        %647 = vmatmul.mubr.f32.gmra.mrb[0].mxu0 %v511
        %v648 = vpop.f32.mrb[0].mxu0
        %v649 = vadd.f32 %v477, %v648
        %v650 = vpop.f32.mrb[0].mxu0
        %651 = vmatprep.mubr.f32.mxu0 0.0
        %652 = vmatmul.mubr.f32.gmra.mrb[0].mxu0 %v514
        %v653 = vpop.f32.mrb[0].mxu0
        %v654 = vadd.f32 %v477, %v653
        %v655 = vpop.f32.mrb[0].mxu0
        %656 = vmatprep.mubr.f32.mxu0 0.0
        %657 = vmatmul.mubr.f32.gmra.mrb[0].mxu0 %v517
        %v658 = vpop.f32.mrb[0].mxu0
        %v659 = vadd.f32 %v477, %v658
        %v660 = vpop.f32.mrb[0].mxu0
        %661 = vmatprep.mubr.f32.mxu0 0.0
        %662 = vmatmul.mubr.f32.gmra.mrb[0].mxu0 %v520
        %v663 = vpop.f32.mrb[0].mxu0
        %v664 = vadd.f32 %v477, %v663
        %v665 = vpop.f32.mrb[0].mxu0
        %666 = vmatprep.mubr.f32.mxu0 0.0
        %667 = vmatmul.mubr.f32.gmra.mrb[0].mxu0 %v523
        %v668 = vpop.f32.mrb[0].mxu0
        %v669 = vadd.f32 %v477, %v668
        %v670 = vpop.f32.mrb[0].mxu0
        %671 = vmatprep.mubr.f32.mxu0 0.0
        %672 = vmatmul.mubr.f32.gmra.mrb[0].mxu0 %v526
        %v673 = vpop.f32.mrb[0].mxu0
        %v674 = vadd.f32 %v477, %v673
        %v675 = vpop.f32.mrb[0].mxu0
        %676 = vdwg.mxu0
        %vm677 = vcmask 261120
        %678 = vst.msk [vmem:[#allocation2] sm:$0xff] %vm677, %v599
        %679 = vst.msk [vmem:[#allocation2 + $0x8] sm:$0xff] %vm677, %v604
        %680 = vst.msk [vmem:[#allocation2 + $0x10] sm:$0xff] %vm677, %v609
        %681 = vst.msk [vmem:[#allocation2 + $0x18] sm:$0xff] %vm677, %v614
        %682 = vst.msk [vmem:[#allocation2 + $0x20] sm:$0xff] %vm677, %v619
        %683 = vst.msk [vmem:[#allocation2 + $0x28] sm:$0xff] %vm677, %v624
        %684 = vst.msk [vmem:[#allocation2 + $0x30] sm:$0xff] %vm677, %v629
        %685 = vst.msk [vmem:[#allocation2 + $0x38] sm:$0xff] %vm677, %v634
        %686 = vst.msk [vmem:[#allocation2 + $0x40] sm:$0xff] %vm677, %v639
        %687 = vst.msk [vmem:[#allocation2 + $0x48] sm:$0xff] %vm677, %v644
        %688 = vst.msk [vmem:[#allocation2 + $0x50] sm:$0xff] %vm677, %v649
        %689 = vst.msk [vmem:[#allocation2 + $0x58] sm:$0xff] %vm677, %v654
        %690 = vst.msk [vmem:[#allocation2 + $0x60] sm:$0xff] %vm677, %v659
        %691 = vst.msk [vmem:[#allocation2 + $0x68] sm:$0xff] %vm677, %v664
        %692 = vst.msk [vmem:[#allocation2 + $0x70] sm:$0xff] %vm677, %v669
        %693 = vst.msk [vmem:[#allocation2 + $0x78] sm:$0xff] %vm677, %v674
      $region68: #{tpu_custom_call.1} parent=63 // pred_fallthru
        _
      %v694 = vlaneseq
      %v695 = vshrl.u32 %v694, 7
      %v696 = vadd.s32 %v695, 8
      %v697 = vadd.s32 %v695, 16
      %v698 = vadd.s32 %v695, 24
      %v699 = vadd.s32 %v695, 32
      %v700 = vadd.s32 %v695, 40
      %v701 = vadd.s32 %v695, 48
      %v702 = vadd.s32 %v695, 56
      %v703 = vadd.s32 %v695, 64
      %v704 = vadd.s32 %v695, 72
      %v705 = vadd.s32 %v695, 80
      %v706 = vadd.s32 %v695, 88
      %v707 = vadd.s32 %v695, 96
      %v708 = vadd.s32 %v695, 104
      %v709 = vadd.s32 %v695, 112
      %v710 = vadd.s32 %v695, 120
      %vm711 = vcmp.lt.s32.totalorder %v695, 0
      %v712 = vsub.s32 0, %v695
      %v713 = vsel %vm711, %v712, %v695
      %v714 = vshrl.u32 %v713, 4
      %v715 = vand.u32 %v713, 15
      %v716 = vsub.s32 0, %v715
      %v717 = vsel %vm711, %v716, %v715
      %vm718 = vcmp.lt.s32.totalorder %v696, 0
      %v719 = vsub.s32 0, %v696
      %v720 = vsel %vm718, %v719, %v696
      %v721 = vshrl.u32 %v720, 4
      %v722 = vand.u32 %v720, 15
      %v723 = vsub.s32 0, %v722
      %v724 = vsel %vm718, %v723, %v722
      %vm725 = vcmp.lt.s32.totalorder %v697, 0
      %v726 = vsub.s32 0, %v697
      %v727 = vsel %vm725, %v726, %v697
      %v728 = vshrl.u32 %v727, 4
      %v729 = vand.u32 %v727, 15
      %v730 = vsub.s32 0, %v729
      %v731 = vsel %vm725, %v730, %v729
      %vm732 = vcmp.lt.s32.totalorder %v698, 0
      %v733 = vsub.s32 0, %v698
      %v734 = vsel %vm732, %v733, %v698
      %v735 = vshrl.u32 %v734, 4
      %v736 = vand.u32 %v734, 15
      %v737 = vsub.s32 0, %v736
      %v738 = vsel %vm732, %v737, %v736
      %vm739 = vcmp.lt.s32.totalorder %v699, 0
      %v740 = vsub.s32 0, %v699
      %v741 = vsel %vm739, %v740, %v699
      %v742 = vshrl.u32 %v741, 4
      %v743 = vand.u32 %v741, 15
      %v744 = vsub.s32 0, %v743
      %v745 = vsel %vm739, %v744, %v743
      %vm746 = vcmp.lt.s32.totalorder %v700, 0
      %v747 = vsub.s32 0, %v700
      %v748 = vsel %vm746, %v747, %v700
      %v749 = vshrl.u32 %v748, 4
      %v750 = vand.u32 %v748, 15
      %v751 = vsub.s32 0, %v750
      %v752 = vsel %vm746, %v751, %v750
      %vm753 = vcmp.lt.s32.totalorder %v701, 0
      %v754 = vsub.s32 0, %v701
      %v755 = vsel %vm753, %v754, %v701
      %v756 = vshrl.u32 %v755, 4
      %v757 = vand.u32 %v755, 15
      %v758 = vsub.s32 0, %v757
      %v759 = vsel %vm753, %v758, %v757
      %vm760 = vcmp.lt.s32.totalorder %v702, 0
      %v761 = vsub.s32 0, %v702
      %v762 = vsel %vm760, %v761, %v702
      %v763 = vshrl.u32 %v762, 4
      %v764 = vand.u32 %v762, 15
      %v765 = vsub.s32 0, %v764
      %v766 = vsel %vm760, %v765, %v764
      %vm767 = vcmp.lt.s32.totalorder %v703, 0
      %v768 = vsub.s32 0, %v703
      %v769 = vsel %vm767, %v768, %v703
      %v770 = vshrl.u32 %v769, 4
      %v771 = vand.u32 %v769, 15
      %v772 = vsub.s32 0, %v771
      %v773 = vsel %vm767, %v772, %v771
      %vm774 = vcmp.lt.s32.totalorder %v704, 0
      %v775 = vsub.s32 0, %v704
      %v776 = vsel %vm774, %v775, %v704
      %v777 = vshrl.u32 %v776, 4
      %v778 = vand.u32 %v776, 15
      %v779 = vsub.s32 0, %v778
      %v780 = vsel %vm774, %v779, %v778
      %vm781 = vcmp.lt.s32.totalorder %v705, 0
      %v782 = vsub.s32 0, %v705
      %v783 = vsel %vm781, %v782, %v705
      %v784 = vshrl.u32 %v783, 4
      %v785 = vand.u32 %v783, 15
      %v786 = vsub.s32 0, %v785
      %v787 = vsel %vm781, %v786, %v785
      %vm788 = vcmp.lt.s32.totalorder %v706, 0
      %v789 = vsub.s32 0, %v706
      %v790 = vsel %vm788, %v789, %v706
      %v791 = vshrl.u32 %v790, 4
      %v792 = vand.u32 %v790, 15
      %v793 = vsub.s32 0, %v792
      %v794 = vsel %vm788, %v793, %v792
      %vm795 = vcmp.lt.s32.totalorder %v707, 0
      %v796 = vsub.s32 0, %v707
      %v797 = vsel %vm795, %v796, %v707
      %v798 = vshrl.u32 %v797, 4
      %v799 = vand.u32 %v797, 15
      %v800 = vsub.s32 0, %v799
      %v801 = vsel %vm795, %v800, %v799
      %vm802 = vcmp.lt.s32.totalorder %v708, 0
      %v803 = vsub.s32 0, %v708
      %v804 = vsel %vm802, %v803, %v708
      %v805 = vshrl.u32 %v804, 4
      %v806 = vand.u32 %v804, 15
      %v807 = vsub.s32 0, %v806
      %v808 = vsel %vm802, %v807, %v806
      %vm809 = vcmp.lt.s32.totalorder %v709, 0
      %v810 = vsub.s32 0, %v709
      %v811 = vsel %vm809, %v810, %v709
      %v812 = vshrl.u32 %v811, 4
      %v813 = vand.u32 %v811, 15
      %v814 = vsub.s32 0, %v813
      %v815 = vsel %vm809, %v814, %v813
      %vm816 = vcmp.lt.s32.totalorder %v710, 0
      %v817 = vsub.s32 0, %v710
      %v818 = vsel %vm816, %v817, %v710
      %v819 = vshrl.u32 %v818, 4
      %v820 = vand.u32 %v818, 15
      %v821 = vsub.s32 0, %v820
      %v822 = vsel %vm816, %v821, %v820
      %vm823 = vcmp.ne.s32.totalorder %v717, 0
      %vm824 = vcmp.ne.s32.totalorder %v724, 0
      %vm825 = vcmp.ne.s32.totalorder %v731, 0
      %vm826 = vcmp.ne.s32.totalorder %v738, 0
      %vm827 = vcmp.ne.s32.totalorder %v745, 0
      %vm828 = vcmp.ne.s32.totalorder %v752, 0
      %vm829 = vcmp.ne.s32.totalorder %v759, 0
      %vm830 = vcmp.ne.s32.totalorder %v766, 0
      %vm831 = vcmp.ne.s32.totalorder %v773, 0
      %vm832 = vcmp.ne.s32.totalorder %v780, 0
      %vm833 = vcmp.ne.s32.totalorder %v787, 0
      %vm834 = vcmp.ne.s32.totalorder %v794, 0
      %vm835 = vcmp.ne.s32.totalorder %v801, 0
      %vm836 = vcmp.ne.s32.totalorder %v808, 0
      %vm837 = vcmp.ne.s32.totalorder %v815, 0
      %vm838 = vcmp.ne.s32.totalorder %v822, 0
      %vm839 = vcmp.lt.s32.totalorder %v717, 0
      %vm840 = vcmp.lt.s32.totalorder %v724, 0
      %vm841 = vcmp.lt.s32.totalorder %v731, 0
      %vm842 = vcmp.lt.s32.totalorder %v738, 0
      %vm843 = vcmp.lt.s32.totalorder %v745, 0
      %vm844 = vcmp.lt.s32.totalorder %v752, 0
      %vm845 = vcmp.lt.s32.totalorder %v759, 0
      %vm846 = vcmp.lt.s32.totalorder %v766, 0
      %vm847 = vcmp.lt.s32.totalorder %v773, 0
      %vm848 = vcmp.lt.s32.totalorder %v780, 0
      %vm849 = vcmp.lt.s32.totalorder %v787, 0
      %vm850 = vcmp.lt.s32.totalorder %v794, 0
      %vm851 = vcmp.lt.s32.totalorder %v801, 0
      %vm852 = vcmp.lt.s32.totalorder %v808, 0
      %vm853 = vcmp.lt.s32.totalorder %v815, 0
      %vm854 = vcmp.lt.s32.totalorder %v822, 0
      %vm855 = vmand %vm839, %vm823
      %vm856 = vmand %vm840, %vm824
      %vm857 = vmand %vm841, %vm825
      %vm858 = vmand %vm842, %vm826
      %vm859 = vmand %vm843, %vm827
      %vm860 = vmand %vm844, %vm828
      %vm861 = vmand %vm845, %vm829
      %vm862 = vmand %vm846, %vm830
      %vm863 = vmand %vm847, %vm831
      %vm864 = vmand %vm848, %vm832
      %vm865 = vmand %vm849, %vm833
      %vm866 = vmand %vm850, %vm834
      %vm867 = vmand %vm851, %vm835
      %vm868 = vmand %vm852, %vm836
      %vm869 = vmand %vm853, %vm837
      %vm870 = vmand %vm854, %vm838
      %v871 = vadd.s32 %v717, 16
      %v872 = vadd.s32 %v724, 16
      %v873 = vadd.s32 %v731, 16
      %v874 = vadd.s32 %v738, 16
      %v875 = vadd.s32 %v745, 16
      %v876 = vadd.s32 %v752, 16
      %v877 = vadd.s32 %v759, 16
      %v878 = vadd.s32 %v766, 16
      %v879 = vadd.s32 %v773, 16
      %v880 = vadd.s32 %v780, 16
      %v881 = vadd.s32 %v787, 16
      %v882 = vadd.s32 %v794, 16
      %v883 = vadd.s32 %v801, 16
      %v884 = vadd.s32 %v808, 16
      %v885 = vadd.s32 %v815, 16
      %v886 = vadd.s32 %v822, 16
      %v887 = vsel %vm855, %v871, %v717
      %v888 = vsel %vm856, %v872, %v724
      %v889 = vsel %vm857, %v873, %v731
      %v890 = vsel %vm858, %v874, %v738
      %v891 = vsel %vm859, %v875, %v745
      %v892 = vsel %vm860, %v876, %v752
      %v893 = vsel %vm861, %v877, %v759
      %v894 = vsel %vm862, %v878, %v766
      %v895 = vsel %vm863, %v879, %v773
      %v896 = vsel %vm864, %v880, %v780
      %v897 = vsel %vm865, %v881, %v787
      %v898 = vsel %vm866, %v882, %v794
      %v899 = vsel %vm867, %v883, %v801
      %v900 = vsel %vm868, %v884, %v808
      %v901 = vsel %vm869, %v885, %v815
      %v902 = vsel %vm870, %v886, %v822
      %vm903 = vcmp.ge.s32.totalorder %v887, 3
      %vm904 = vcmp.ge.s32.totalorder %v888, 3
      %vm905 = vcmp.ge.s32.totalorder %v889, 3
      %vm906 = vcmp.ge.s32.totalorder %v890, 3
      %vm907 = vcmp.ge.s32.totalorder %v891, 3
      %vm908 = vcmp.ge.s32.totalorder %v892, 3
      %vm909 = vcmp.ge.s32.totalorder %v893, 3
      %vm910 = vcmp.ge.s32.totalorder %v894, 3
      %vm911 = vcmp.ge.s32.totalorder %v895, 3
      %vm912 = vcmp.ge.s32.totalorder %v896, 3
      %vm913 = vcmp.ge.s32.totalorder %v897, 3
      %vm914 = vcmp.ge.s32.totalorder %v898, 3
      %vm915 = vcmp.ge.s32.totalorder %v899, 3
      %vm916 = vcmp.ge.s32.totalorder %v900, 3
      %vm917 = vcmp.ge.s32.totalorder %v901, 3
      %vm918 = vcmp.ge.s32.totalorder %v902, 3
      %vm919 = vcmp.lt.s32.totalorder %v887, 13
      %vm920 = vcmp.lt.s32.totalorder %v888, 13
      %vm921 = vcmp.lt.s32.totalorder %v889, 13
      %vm922 = vcmp.lt.s32.totalorder %v890, 13
      %vm923 = vcmp.lt.s32.totalorder %v891, 13
      %vm924 = vcmp.lt.s32.totalorder %v892, 13
      %vm925 = vcmp.lt.s32.totalorder %v893, 13
      %vm926 = vcmp.lt.s32.totalorder %v894, 13
      %vm927 = vcmp.lt.s32.totalorder %v895, 13
      %vm928 = vcmp.lt.s32.totalorder %v896, 13
      %vm929 = vcmp.lt.s32.totalorder %v897, 13
      %vm930 = vcmp.lt.s32.totalorder %v898, 13
      %vm931 = vcmp.lt.s32.totalorder %v899, 13
      %vm932 = vcmp.lt.s32.totalorder %v900, 13
      %vm933 = vcmp.lt.s32.totalorder %v901, 13
      %vm934 = vcmp.lt.s32.totalorder %v902, 13
      %v935 = vld [vmem:[#allocation2] sm:$0xff]
      %v936 = vld [vmem:[#allocation2 + $0x8] sm:$0xff]
      %v937 = vld [vmem:[#allocation2 + $0x10] sm:$0xff]
      %v938 = vld [vmem:[#allocation2 + $0x18] sm:$0xff]
      %v939 = vld [vmem:[#allocation2 + $0x20] sm:$0xff]
      %v940 = vld [vmem:[#allocation2 + $0x28] sm:$0xff]
      %v941 = vld [vmem:[#allocation2 + $0x30] sm:$0xff]
      %v942 = vld [vmem:[#allocation2 + $0x38] sm:$0xff]
      %v943 = vld [vmem:[#allocation2 + $0x40] sm:$0xff]
      %v944 = vld [vmem:[#allocation2 + $0x48] sm:$0xff]
      %v945 = vld [vmem:[#allocation2 + $0x50] sm:$0xff]
      %v946 = vld [vmem:[#allocation2 + $0x58] sm:$0xff]
      %v947 = vld [vmem:[#allocation2 + $0x60] sm:$0xff]
      %v948 = vld [vmem:[#allocation2 + $0x68] sm:$0xff]
      %v949 = vld [vmem:[#allocation2 + $0x70] sm:$0xff]
      %v950 = vld [vmem:[#allocation2 + $0x78] sm:$0xff]
      %vm951 = vcmask 261120
      %v952 = vsel %vm951, %v935, 0.0
      %v953 = vsel %vm951, %v936, 0.0
      %v954 = vadd.f32 %v952, %v953
      %v955 = vsel %vm951, %v937, 0.0
      %v956 = vadd.f32 %v954, %v955
      %v957 = vsel %vm951, %v938, 0.0
      %v958 = vadd.f32 %v956, %v957
      %v959 = vsel %vm951, %v939, 0.0
      %v960 = vadd.f32 %v958, %v959
      %v961 = vsel %vm951, %v940, 0.0
      %v962 = vadd.f32 %v960, %v961
      %v963 = vsel %vm951, %v941, 0.0
      %v964 = vadd.f32 %v962, %v963
      %v965 = vsel %vm951, %v942, 0.0
      %v966 = vadd.f32 %v964, %v965
      %v967 = vsel %vm951, %v943, 0.0
      %v968 = vadd.f32 %v966, %v967
      %v969 = vsel %vm951, %v944, 0.0
      %v970 = vadd.f32 %v968, %v969
      %v971 = vsel %vm951, %v945, 0.0
      %v972 = vadd.f32 %v970, %v971
      %v973 = vsel %vm951, %v946, 0.0
      %v974 = vadd.f32 %v972, %v973
      %v975 = vsel %vm951, %v947, 0.0
      %v976 = vadd.f32 %v974, %v975
      %v977 = vsel %vm951, %v948, 0.0
      %v978 = vadd.f32 %v976, %v977
      %v979 = vsel %vm951, %v949, 0.0
      %v980 = vadd.f32 %v978, %v979
      %v981 = vsel %vm951, %v950, 0.0
      %v982 = vadd.f32 %v980, %v981
      %v983 = vrot.slane %v982, 4
      %v984 = vadd.f32 %v982, %v983
      %v985 = vrot.slane %v984, 2
      %v986 = vadd.f32 %v984, %v985
      %v987 = vrot.slane %v986, 1
      %v988 = vadd.f32 %v986, %v987
      %v989 = vmul.f32 %v988, 0.0078125
      %v990 = vmul.f32 %v935, %v935
      %v991 = vmul.f32 %v936, %v936
      %v992 = vmul.f32 %v937, %v937
      %v993 = vmul.f32 %v938, %v938
      %v994 = vmul.f32 %v939, %v939
      %v995 = vmul.f32 %v940, %v940
      %v996 = vmul.f32 %v941, %v941
      %v997 = vmul.f32 %v942, %v942
      %v998 = vmul.f32 %v943, %v943
      %v999 = vmul.f32 %v944, %v944
      %v1000 = vmul.f32 %v945, %v945
      %v1001 = vmul.f32 %v946, %v946
      %v1002 = vmul.f32 %v947, %v947
      %v1003 = vmul.f32 %v948, %v948
      %v1004 = vmul.f32 %v949, %v949
      %v1005 = vmul.f32 %v950, %v950
      %v1006 = vsel %vm951, %v990, 0.0
      %v1007 = vsel %vm951, %v991, 0.0
      %v1008 = vadd.f32 %v1006, %v1007
      %v1009 = vsel %vm951, %v992, 0.0
      %v1010 = vadd.f32 %v1008, %v1009
      %v1011 = vsel %vm951, %v993, 0.0
      %v1012 = vadd.f32 %v1010, %v1011
      %v1013 = vsel %vm951, %v994, 0.0
      %v1014 = vadd.f32 %v1012, %v1013
      %v1015 = vsel %vm951, %v995, 0.0
      %v1016 = vadd.f32 %v1014, %v1015
      %v1017 = vsel %vm951, %v996, 0.0
      %v1018 = vadd.f32 %v1016, %v1017
      %v1019 = vsel %vm951, %v997, 0.0
      %v1020 = vadd.f32 %v1018, %v1019
      %v1021 = vsel %vm951, %v998, 0.0
      %v1022 = vadd.f32 %v1020, %v1021
      %v1023 = vsel %vm951, %v999, 0.0
      %v1024 = vadd.f32 %v1022, %v1023
      %v1025 = vsel %vm951, %v1000, 0.0
      %v1026 = vadd.f32 %v1024, %v1025
      %v1027 = vsel %vm951, %v1001, 0.0
      %v1028 = vadd.f32 %v1026, %v1027
      %v1029 = vsel %vm951, %v1002, 0.0
      %v1030 = vadd.f32 %v1028, %v1029
      %v1031 = vsel %vm951, %v1003, 0.0
      %v1032 = vadd.f32 %v1030, %v1031
      %v1033 = vsel %vm951, %v1004, 0.0
      %v1034 = vadd.f32 %v1032, %v1033
      %v1035 = vsel %vm951, %v1005, 0.0
      %v1036 = vadd.f32 %v1034, %v1035
      %v1037 = vrot.slane %v1036, 4
      %v1038 = vadd.f32 %v1036, %v1037
      %v1039 = vrot.slane %v1038, 2
      %v1040 = vadd.f32 %v1038, %v1039
      %v1041 = vrot.slane %v1040, 1
      %v1042 = vadd.f32 %v1040, %v1041
      %v1043 = vmul.f32 %v1042, 0.0078125
      %v1044 = vmul.f32 %v989, %v989
      %v1045 = vsub.f32 %v1043, %v1044
      %v1046 = vmax.f32 %v1045, 0.0
      %v1047 = vld [vmem:[%s430] sm:$0x1]
      %v1048 = vadd.f32 %v1046, 1e-05
      %v1049 = vrsqrt.pop %v1048
      %v1050 = vmul.f32 %v1047, %v1049
      %v1051 = vld [vmem:[%s433] sm:$0x1]
      %v1052 = vmul.f32 %v989, %v1050
      %v1053 = vsub.f32 %v1051, %v1052
      %v1055 = vlaneseq
      %v1056 = vshrl.u32 %v1055, 7
      %v1057 = vsub.s32 0, %v1056
      %v1058 = vrot.slane %v1050, %v1057
      %v1060 = vmul.f32 %v935, %v1058
      %v1061 = vmul.f32 %v936, %v1058
      %v1062 = vmul.f32 %v937, %v1058
      %v1063 = vmul.f32 %v938, %v1058
      %v1064 = vmul.f32 %v939, %v1058
      %v1065 = vmul.f32 %v940, %v1058
      %v1066 = vmul.f32 %v941, %v1058
      %v1067 = vmul.f32 %v942, %v1058
      %v1068 = vmul.f32 %v943, %v1058
      %v1069 = vmul.f32 %v944, %v1058
      %v1070 = vmul.f32 %v945, %v1058
      %v1071 = vmul.f32 %v946, %v1058
      %v1072 = vmul.f32 %v947, %v1058
      %v1073 = vmul.f32 %v948, %v1058
      %v1074 = vmul.f32 %v949, %v1058
      %v1075 = vmul.f32 %v950, %v1058
      %v1077 = vlaneseq
      %v1078 = vshrl.u32 %v1077, 7
      %v1079 = vsub.s32 0, %v1078
      %v1080 = vrot.slane %v1053, %v1079
      %v1082 = vadd.f32 %v1060, %v1080
      %v1083 = vadd.f32 %v1061, %v1080
      %v1084 = vadd.f32 %v1062, %v1080
      %v1085 = vadd.f32 %v1063, %v1080
      %v1086 = vadd.f32 %v1064, %v1080
      %v1087 = vadd.f32 %v1065, %v1080
      %v1088 = vadd.f32 %v1066, %v1080
      %v1089 = vadd.f32 %v1067, %v1080
      %v1090 = vadd.f32 %v1068, %v1080
      %v1091 = vadd.f32 %v1069, %v1080
      %v1092 = vadd.f32 %v1070, %v1080
      %v1093 = vadd.f32 %v1071, %v1080
      %v1094 = vadd.f32 %v1072, %v1080
      %v1095 = vadd.f32 %v1073, %v1080
      %v1096 = vadd.f32 %v1074, %v1080
      %v1097 = vadd.f32 %v1075, %v1080
      %v1098 = vrot.slane %v1082, 5
      %v1099 = vrot.slane %v1083, 5
      %v1100 = vrot.slane %v1084, 5
      %v1101 = vrot.slane %v1085, 5
      %v1102 = vrot.slane %v1086, 5
      %v1103 = vrot.slane %v1087, 5
      %v1104 = vrot.slane %v1088, 5
      %v1105 = vrot.slane %v1089, 5
      %v1106 = vrot.slane %v1090, 5
      %v1107 = vrot.slane %v1091, 5
      %v1108 = vrot.slane %v1092, 5
      %v1109 = vrot.slane %v1093, 5
      %v1110 = vrot.slane %v1094, 5
      %v1111 = vrot.slane %v1095, 5
      %v1112 = vrot.slane %v1096, 5
      %v1113 = vrot.slane %v1097, 5
      %vm1114 = vcmp.lt.s32.totalorder %v695, 3
      %v1115 = vsel %vm1114, %v1112, %v1113
      %v1116 = vsel %vm1114, %v1111, %v1112
      %v1117 = vsel %vm1114, %v1110, %v1111
      %v1118 = vsel %vm1114, %v1109, %v1110
      %v1119 = vsel %vm1114, %v1108, %v1109
      %v1120 = vsel %vm1114, %v1107, %v1108
      %v1121 = vsel %vm1114, %v1106, %v1107
      %v1122 = vsel %vm1114, %v1105, %v1106
      %v1123 = vsel %vm1114, %v1104, %v1105
      %v1124 = vsel %vm1114, %v1103, %v1104
      %v1125 = vsel %vm1114, %v1102, %v1103
      %v1126 = vsel %vm1114, %v1101, %v1102
      %v1127 = vsel %vm1114, %v1100, %v1101
      %v1128 = vsel %vm1114, %v1099, %v1100
      %v1129 = vsel %vm1114, %v1098, %v1099
      %v1130 = vsel %vm1114, %v1113, %v1098
      %v1131 = vsel %vm903, 1, 0
      %v1132 = vsel %vm904, 1, 0
      %v1133 = vsel %vm905, 1, 0
      %v1134 = vsel %vm906, 1, 0
      %v1135 = vsel %vm907, 1, 0
      %v1136 = vsel %vm908, 1, 0
      %v1137 = vsel %vm909, 1, 0
      %v1138 = vsel %vm910, 1, 0
      %v1139 = vsel %vm911, 1, 0
      %v1140 = vsel %vm912, 1, 0
      %v1141 = vsel %vm913, 1, 0
      %v1142 = vsel %vm914, 1, 0
      %v1143 = vsel %vm915, 1, 0
      %v1144 = vsel %vm916, 1, 0
      %v1145 = vsel %vm917, 1, 0
      %v1146 = vsel %vm918, 1, 0
      %vm1147 = vcmp.eq.s32.totalorder %v1131, 1
      %vm1148 = vcmp.eq.s32.totalorder %v1132, 1
      %vm1149 = vcmp.eq.s32.totalorder %v1133, 1
      %vm1150 = vcmp.eq.s32.totalorder %v1134, 1
      %vm1151 = vcmp.eq.s32.totalorder %v1135, 1
      %vm1152 = vcmp.eq.s32.totalorder %v1136, 1
      %vm1153 = vcmp.eq.s32.totalorder %v1137, 1
      %vm1154 = vcmp.eq.s32.totalorder %v1138, 1
      %vm1155 = vcmp.eq.s32.totalorder %v1139, 1
      %vm1156 = vcmp.eq.s32.totalorder %v1140, 1
      %vm1157 = vcmp.eq.s32.totalorder %v1141, 1
      %vm1158 = vcmp.eq.s32.totalorder %v1142, 1
      %vm1159 = vcmp.eq.s32.totalorder %v1143, 1
      %vm1160 = vcmp.eq.s32.totalorder %v1144, 1
      %vm1161 = vcmp.eq.s32.totalorder %v1145, 1
      %vm1162 = vcmp.eq.s32.totalorder %v1146, 1
      %v1163 = vsel %vm1147, %v1130, 0.0
      %v1164 = vsel %vm1148, %v1129, 0.0
      %v1165 = vsel %vm1149, %v1128, 0.0
      %v1166 = vsel %vm1150, %v1127, 0.0
      %v1167 = vsel %vm1151, %v1126, 0.0
      %v1168 = vsel %vm1152, %v1125, 0.0
      %v1169 = vsel %vm1153, %v1124, 0.0
      %v1170 = vsel %vm1154, %v1123, 0.0
      %v1171 = vsel %vm1155, %v1122, 0.0
      %v1172 = vsel %vm1156, %v1121, 0.0
      %v1173 = vsel %vm1157, %v1120, 0.0
      %v1174 = vsel %vm1158, %v1119, 0.0
      %v1175 = vsel %vm1159, %v1118, 0.0
      %v1176 = vsel %vm1160, %v1117, 0.0
      %v1177 = vsel %vm1161, %v1116, 0.0
      %v1178 = vsel %vm1162, %v1115, 0.0
      %v1179 = vrot.slane %v1082, 3
      %v1180 = vrot.slane %v1083, 3
      %v1181 = vrot.slane %v1084, 3
      %v1182 = vrot.slane %v1085, 3
      %v1183 = vrot.slane %v1086, 3
      %v1184 = vrot.slane %v1087, 3
      %v1185 = vrot.slane %v1088, 3
      %v1186 = vrot.slane %v1089, 3
      %v1187 = vrot.slane %v1090, 3
      %v1188 = vrot.slane %v1091, 3
      %v1189 = vrot.slane %v1092, 3
      %v1190 = vrot.slane %v1093, 3
      %v1191 = vrot.slane %v1094, 3
      %v1192 = vrot.slane %v1095, 3
      %v1193 = vrot.slane %v1096, 3
      %v1194 = vrot.slane %v1097, 3
      %vm1195 = vcmp.lt.s32.totalorder %v695, 5
      %v1196 = vsel %vm1195, %v1193, %v1194
      %v1197 = vsel %vm1195, %v1192, %v1193
      %v1198 = vsel %vm1195, %v1191, %v1192
      %v1199 = vsel %vm1195, %v1190, %v1191
      %v1200 = vsel %vm1195, %v1189, %v1190
      %v1201 = vsel %vm1195, %v1188, %v1189
      %v1202 = vsel %vm1195, %v1187, %v1188
      %v1203 = vsel %vm1195, %v1186, %v1187
      %v1204 = vsel %vm1195, %v1185, %v1186
      %v1205 = vsel %vm1195, %v1184, %v1185
      %v1206 = vsel %vm1195, %v1183, %v1184
      %v1207 = vsel %vm1195, %v1182, %v1183
      %v1208 = vsel %vm1195, %v1181, %v1182
      %v1209 = vsel %vm1195, %v1180, %v1181
      %v1210 = vsel %vm1195, %v1179, %v1180
      %v1211 = vsel %vm1195, %v1194, %v1179
      %v1212 = vsel %vm919, 1, 0
      %v1213 = vsel %vm920, 1, 0
      %v1214 = vsel %vm921, 1, 0
      %v1215 = vsel %vm922, 1, 0
      %v1216 = vsel %vm923, 1, 0
      %v1217 = vsel %vm924, 1, 0
      %v1218 = vsel %vm925, 1, 0
      %v1219 = vsel %vm926, 1, 0
      %v1220 = vsel %vm927, 1, 0
      %v1221 = vsel %vm928, 1, 0
      %v1222 = vsel %vm929, 1, 0
      %v1223 = vsel %vm930, 1, 0
      %v1224 = vsel %vm931, 1, 0
      %v1225 = vsel %vm932, 1, 0
      %v1226 = vsel %vm933, 1, 0
      %v1227 = vsel %vm934, 1, 0
      %vm1228 = vcmp.eq.s32.totalorder %v1212, 1
      %vm1229 = vcmp.eq.s32.totalorder %v1213, 1
      %vm1230 = vcmp.eq.s32.totalorder %v1214, 1
      %vm1231 = vcmp.eq.s32.totalorder %v1215, 1
      %vm1232 = vcmp.eq.s32.totalorder %v1216, 1
      %vm1233 = vcmp.eq.s32.totalorder %v1217, 1
      %vm1234 = vcmp.eq.s32.totalorder %v1218, 1
      %vm1235 = vcmp.eq.s32.totalorder %v1219, 1
      %vm1236 = vcmp.eq.s32.totalorder %v1220, 1
      %vm1237 = vcmp.eq.s32.totalorder %v1221, 1
      %vm1238 = vcmp.eq.s32.totalorder %v1222, 1
      %vm1239 = vcmp.eq.s32.totalorder %v1223, 1
      %vm1240 = vcmp.eq.s32.totalorder %v1224, 1
      %vm1241 = vcmp.eq.s32.totalorder %v1225, 1
      %vm1242 = vcmp.eq.s32.totalorder %v1226, 1
      %vm1243 = vcmp.eq.s32.totalorder %v1227, 1
      %v1244 = vsel %vm1228, %v1210, 0.0
      %v1245 = vsel %vm1229, %v1209, 0.0
      %v1246 = vsel %vm1230, %v1208, 0.0
      %v1247 = vsel %vm1231, %v1207, 0.0
      %v1248 = vsel %vm1232, %v1206, 0.0
      %v1249 = vsel %vm1233, %v1205, 0.0
      %v1250 = vsel %vm1234, %v1204, 0.0
      %v1251 = vsel %vm1235, %v1203, 0.0
      %v1252 = vsel %vm1236, %v1202, 0.0
      %v1253 = vsel %vm1237, %v1201, 0.0
      %v1254 = vsel %vm1238, %v1200, 0.0
      %v1255 = vsel %vm1239, %v1199, 0.0
      %v1256 = vsel %vm1240, %v1198, 0.0
      %v1257 = vsel %vm1241, %v1197, 0.0
      %v1258 = vsel %vm1242, %v1196, 0.0
      %v1259 = vsel %vm1243, %v1211, 0.0
      %1276 = vrot.lane.b32.xlu0 %v1082, 32
      %v1277 = vpop.permute.xlu0 %1276
      %1278 = vrot.lane.b32.xlu0 %v1083, 32
      %v1279 = vpop.permute.xlu0 %1278
      %1280 = vrot.lane.b32.xlu0 %v1084, 32
      %v1281 = vpop.permute.xlu0 %1280
      %1282 = vrot.lane.b32.xlu0 %v1085, 32
      %v1283 = vpop.permute.xlu0 %1282
      %1284 = vrot.lane.b32.xlu0 %v1086, 32
      %v1285 = vpop.permute.xlu0 %1284
      %1286 = vrot.lane.b32.xlu0 %v1087, 32
      %v1287 = vpop.permute.xlu0 %1286
      %1288 = vrot.lane.b32.xlu0 %v1088, 32
      %v1289 = vpop.permute.xlu0 %1288
      %1290 = vrot.lane.b32.xlu0 %v1089, 32
      %v1291 = vpop.permute.xlu0 %1290
      %1292 = vrot.lane.b32.xlu0 %v1090, 32
      %v1293 = vpop.permute.xlu0 %1292
      %1294 = vrot.lane.b32.xlu0 %v1091, 32
      %v1295 = vpop.permute.xlu0 %1294
      %1296 = vrot.lane.b32.xlu0 %v1092, 32
      %v1297 = vpop.permute.xlu0 %1296
      %1298 = vrot.lane.b32.xlu0 %v1093, 32
      %v1299 = vpop.permute.xlu0 %1298
      %1300 = vrot.lane.b32.xlu0 %v1094, 32
      %v1301 = vpop.permute.xlu0 %1300
      %1302 = vrot.lane.b32.xlu0 %v1095, 32
      %v1303 = vpop.permute.xlu0 %1302
      %1304 = vrot.lane.b32.xlu0 %v1096, 32
      %v1305 = vpop.permute.xlu0 %1304
      %1306 = vrot.lane.b32.xlu0 %v1097, 32
      %v1307 = vpop.permute.xlu0 %1306
      %1340 = vrot.lane.b32.xlu0 %v1244, 64
      %v1341 = vpop.permute.xlu0 %1340
      %1342 = vrot.lane.b32.xlu0 %v1245, 64
      %v1343 = vpop.permute.xlu0 %1342
      %1344 = vrot.lane.b32.xlu0 %v1246, 64
      %v1345 = vpop.permute.xlu0 %1344
      %1346 = vrot.lane.b32.xlu0 %v1247, 64
      %v1347 = vpop.permute.xlu0 %1346
      %1348 = vrot.lane.b32.xlu0 %v1248, 64
      %v1349 = vpop.permute.xlu0 %1348
      %1350 = vrot.lane.b32.xlu0 %v1249, 64
      %v1351 = vpop.permute.xlu0 %1350
      %1352 = vrot.lane.b32.xlu0 %v1250, 64
      %v1353 = vpop.permute.xlu0 %1352
      %1354 = vrot.lane.b32.xlu0 %v1251, 64
      %v1355 = vpop.permute.xlu0 %1354
      %1356 = vrot.lane.b32.xlu0 %v1252, 64
      %v1357 = vpop.permute.xlu0 %1356
      %1358 = vrot.lane.b32.xlu0 %v1253, 64
      %v1359 = vpop.permute.xlu0 %1358
      %1360 = vrot.lane.b32.xlu0 %v1254, 64
      %v1361 = vpop.permute.xlu0 %1360
      %1362 = vrot.lane.b32.xlu0 %v1255, 64
      %v1363 = vpop.permute.xlu0 %1362
      %1364 = vrot.lane.b32.xlu0 %v1256, 64
      %v1365 = vpop.permute.xlu0 %1364
      %1366 = vrot.lane.b32.xlu0 %v1257, 64
      %v1367 = vpop.permute.xlu0 %1366
      %1368 = vrot.lane.b32.xlu0 %v1258, 64
      %v1369 = vpop.permute.xlu0 %1368
      %1370 = vrot.lane.b32.xlu0 %v1259, 64
      %v1371 = vpop.permute.xlu0 %1370
      %v1388 = vsel %vm951, %v1163, %v1277
      %v1389 = vsel %vm951, %v1164, %v1279
      %v1390 = vsel %vm951, %v1165, %v1281
      %v1391 = vsel %vm951, %v1166, %v1283
      %v1392 = vsel %vm951, %v1167, %v1285
      %v1393 = vsel %vm951, %v1168, %v1287
      %v1394 = vsel %vm951, %v1169, %v1289
      %v1395 = vsel %vm951, %v1170, %v1291
      %v1396 = vsel %vm951, %v1171, %v1293
      %v1397 = vsel %vm951, %v1172, %v1295
      %v1398 = vsel %vm951, %v1173, %v1297
      %v1399 = vsel %vm951, %v1174, %v1299
      %v1400 = vsel %vm951, %v1175, %v1301
      %v1401 = vsel %vm951, %v1176, %v1303
      %v1402 = vsel %vm951, %v1177, %v1305
      %v1403 = vsel %vm951, %v1178, %v1307
      %vm1404 = vcmask 523264
      %v1405 = vsel %vm1404, %v1388, %v1341
      %v1406 = vsel %vm1404, %v1389, %v1343
      %v1407 = vsel %vm1404, %v1390, %v1345
      %v1408 = vsel %vm1404, %v1391, %v1347
      %v1409 = vsel %vm1404, %v1392, %v1349
      %v1410 = vsel %vm1404, %v1393, %v1351
      %v1411 = vsel %vm1404, %v1394, %v1353
      %v1412 = vsel %vm1404, %v1395, %v1355
      %v1413 = vsel %vm1404, %v1396, %v1357
      %v1414 = vsel %vm1404, %v1397, %v1359
      %v1415 = vsel %vm1404, %v1398, %v1361
      %v1416 = vsel %vm1404, %v1399, %v1363
      %v1417 = vsel %vm1404, %v1400, %v1365
      %v1418 = vsel %vm1404, %v1401, %v1367
      %v1419 = vsel %vm1404, %v1402, %v1369
      %v1420 = vsel %vm1404, %v1403, %v1371
      %v1421 = vpack.c.bf16 %v1406, %v1405
      %v1422 = vpack.c.bf16 %v1408, %v1407
      %v1423 = vpack.c.bf16 %v1410, %v1409
      %v1424 = vpack.c.bf16 %v1412, %v1411
      %v1425 = vpack.c.bf16 %v1414, %v1413
      %v1426 = vpack.c.bf16 %v1416, %v1415
      %v1427 = vpack.c.bf16 %v1418, %v1417
      %v1428 = vpack.c.bf16 %v1420, %v1419
      %v1429 = vld [vmem:[%s438] sm:$0xf]
      %v1430 = vld [vmem:[%s438 + $0x4] sm:$0xf]
      %v1431 = vld [vmem:[%s438 + $0x8] sm:$0xf]
      %v1432 = vld [vmem:[%s438 + $0xc] sm:$0xf]
      %v1433 = vld [vmem:[%s438 + $0x10] sm:$0xf]
      %v1434 = vld [vmem:[%s438 + $0x14] sm:$0xf]
      %v1435 = vld [vmem:[%s438 + $0x18] sm:$0xf]
      %v1436 = vld [vmem:[%s438 + $0x1c] sm:$0xf]
      %v1437 = vld [vmem:[%s438 + $0x20] sm:$0xf]
      %v1438 = vld [vmem:[%s438 + $0x24] sm:$0xf]
      %v1439 = vld [vmem:[%s438 + $0x28] sm:$0xf]
      %v1440 = vld [vmem:[%s438 + $0x2c] sm:$0xf]
      %v1441 = vld [vmem:[%s441] sm:$0x1]
      %v1443 = vlaneseq
      %v1444 = vshrl.u32 %v1443, 7
      %v1445 = vsub.s32 0, %v1444
      %v1446 = vrot.slane %v1441, %v1445
      %v1460 = vunpack.c.l.b16 %v1429
      %v1461 = vunpack.c.l.b16 %v1430
      %v1462 = vunpack.c.l.b16 %v1431
      %v1463 = vunpack.c.l.b16 %v1432
      %v1464 = vunpack.c.l.b16 %v1433
      %v1465 = vunpack.c.l.b16 %v1434
      %v1466 = vunpack.c.l.b16 %v1435
      %v1467 = vunpack.c.l.b16 %v1436
      %v1468 = vunpack.c.l.b16 %v1437
      %v1469 = vunpack.c.l.b16 %v1438
      %v1470 = vunpack.c.l.b16 %v1439
      %v1471 = vunpack.c.l.b16 %v1440
      %v1472 = vpack.c.b16 %v1461, %v1460
      %v1473 = vpack.c.b16 %v1463, %v1462
      %v1474 = vpack.c.b16 %v1465, %v1464
      %v1475 = vpack.c.b16 %v1467, %v1466
      %v1476 = vpack.c.b16 %v1469, %v1468
      %v1477 = vpack.c.b16 %v1471, %v1470
      %vm1484 = vcmask 785408
      %v1486 = vsel %vm1484, %v1421, 0
      %v1489 = vsel %vm1484, %v1422, 0
      %v1492 = vsel %vm1484, %v1423, 0
      %v1495 = vsel %vm1484, %v1424, 0
      %v1498 = vsel %vm1484, %v1425, 0
      %v1501 = vsel %vm1484, %v1426, 0
      %v1504 = vsel %vm1484, %v1427, 0
      %v1507 = vsel %vm1484, %v1428, 0
      %1509 = vmatprep.subr.bf16.mxu0 0
      %1510 = vmatpush1.bf16.msra.mxu0 %v1472
      %1511 = vmatprep.subr.bf16.mxu0 0
      %1512 = vmatpush1.bf16.msra.mxu0 %v1473
      %1513 = vmatprep.subr.bf16.mxu0 0
      %1514 = vmatpush1.bf16.msra.mxu0 %v1474
      %1515 = vmatprep.subr.bf16.mxu0 0
      %1516 = vmatpush1.bf16.msra.mxu0 %v1475
      %1517 = vmatprep.subr.bf16.mxu0 0
      %1518 = vmatpush1.bf16.msra.mxu0 %v1476
      %1519 = vmatprep.subr.bf16.mxu0 0
      %1520 = vmatpush1.bf16.msra.mxu0 %v1477
      %1521 = vmatprep.subr.bf16.mxu0 0
      %1522 = vmatpush1.bf16.msra.mxu0 0
      %1523 = vmatprep.subr.bf16.mxu0 0
      %1524 = vmatpush1.bf16.msra.mxu0 0
      %1525 = vmatprep.subr.bf16.mxu0 0
      %1526 = vmatpush1.bf16.msra.mxu0 0
      %1527 = vmatprep.subr.bf16.mxu0 0
      %1528 = vmatpush1.bf16.msra.mxu0 0
      %1529 = vmatprep.subr.bf16.mxu0 0
      %1530 = vmatpush1.bf16.msra.mxu0 0
      %1531 = vmatprep.subr.bf16.mxu0 0
      %1532 = vmatpush1.bf16.msra.mxu0 0
      %1533 = vmatprep.subr.bf16.mxu0 0
      %1534 = vmatpush1.bf16.msra.mxu0 0
      %1535 = vmatprep.subr.bf16.mxu0 0
      %1536 = vmatpush1.bf16.msra.mxu0 0
      %1537 = vmatprep.subr.bf16.mxu0 0
      %1538 = vmatpush1.bf16.msra.mxu0 0
      %1539 = vmatprep.subr.bf16.mxu0 0
      %1540 = vmatpush1.bf16.msra.mxu0 0
      %1541 = vmatprep.mubr.bf16.mxu0 0
      %1542 = vmatmul.mubr.bf16.gmra.mrb[0].mxu0 %v1486
      %v1543 = vpop.f32.mrb[0].mxu0
      %v1544 = vadd.f32 %v1446, %v1543
      %v1545 = vpop.f32.mrb[0].mxu0
      %v1546 = vpop.f32.mrb[0].mxu0
      %v1547 = vadd.f32 %v1446, %v1546
      %v1548 = vpop.f32.mrb[0].mxu0
      %1549 = vmatprep.mubr.bf16.mxu0 0
      %1550 = vmatmul.mubr.bf16.gmra.mrb[0].mxu0 %v1489
      %v1551 = vpop.f32.mrb[0].mxu0
      %v1552 = vadd.f32 %v1446, %v1551
      %v1553 = vpop.f32.mrb[0].mxu0
      %v1554 = vpop.f32.mrb[0].mxu0
      %v1555 = vadd.f32 %v1446, %v1554
      %v1556 = vpop.f32.mrb[0].mxu0
      %1557 = vmatprep.mubr.bf16.mxu0 0
      %1558 = vmatmul.mubr.bf16.gmra.mrb[0].mxu0 %v1492
      %v1559 = vpop.f32.mrb[0].mxu0
      %v1560 = vadd.f32 %v1446, %v1559
      %v1561 = vpop.f32.mrb[0].mxu0
      %v1562 = vpop.f32.mrb[0].mxu0
      %v1563 = vadd.f32 %v1446, %v1562
      %v1564 = vpop.f32.mrb[0].mxu0
      %1565 = vmatprep.mubr.bf16.mxu0 0
      %1566 = vmatmul.mubr.bf16.gmra.mrb[0].mxu0 %v1495
      %v1567 = vpop.f32.mrb[0].mxu0
      %v1568 = vadd.f32 %v1446, %v1567
      %v1569 = vpop.f32.mrb[0].mxu0
      %v1570 = vpop.f32.mrb[0].mxu0
      %v1571 = vadd.f32 %v1446, %v1570
      %v1572 = vpop.f32.mrb[0].mxu0
      %1573 = vmatprep.mubr.bf16.mxu0 0
      %1574 = vmatmul.mubr.bf16.gmra.mrb[0].mxu0 %v1498
      %v1575 = vpop.f32.mrb[0].mxu0
      %v1576 = vadd.f32 %v1446, %v1575
      %v1577 = vpop.f32.mrb[0].mxu0
      %v1578 = vpop.f32.mrb[0].mxu0
      %v1579 = vadd.f32 %v1446, %v1578
      %v1580 = vpop.f32.mrb[0].mxu0
      %1581 = vmatprep.mubr.bf16.mxu0 0
      %1582 = vmatmul.mubr.bf16.gmra.mrb[0].mxu0 %v1501
      %v1583 = vpop.f32.mrb[0].mxu0
      %v1584 = vadd.f32 %v1446, %v1583
      %v1585 = vpop.f32.mrb[0].mxu0
      %v1586 = vpop.f32.mrb[0].mxu0
      %v1587 = vadd.f32 %v1446, %v1586
      %v1588 = vpop.f32.mrb[0].mxu0
      %1589 = vmatprep.mubr.bf16.mxu0 0
      %1590 = vmatmul.mubr.bf16.gmra.mrb[0].mxu0 %v1504
      %v1591 = vpop.f32.mrb[0].mxu0
      %v1592 = vadd.f32 %v1446, %v1591
      %v1593 = vpop.f32.mrb[0].mxu0
      %v1594 = vpop.f32.mrb[0].mxu0
      %v1595 = vadd.f32 %v1446, %v1594
      %v1596 = vpop.f32.mrb[0].mxu0
      %1597 = vmatprep.mubr.bf16.mxu0 0
      %1598 = vmatmul.mubr.bf16.gmra.mrb[0].mxu0 %v1507
      %v1599 = vpop.f32.mrb[0].mxu0
      %v1600 = vadd.f32 %v1446, %v1599
      %v1601 = vpop.f32.mrb[0].mxu0
      %v1602 = vpop.f32.mrb[0].mxu0
      %v1603 = vadd.f32 %v1446, %v1602
      %v1604 = vpop.f32.mrb[0].mxu0
      %1605 = vdwg.mxu0
      %v1606 = vmax.f32 %v1544, 0.0
      %v1607 = vmax.f32 %v1547, 0.0
      %v1608 = vmax.f32 %v1552, 0.0
      %v1609 = vmax.f32 %v1555, 0.0
      %v1610 = vmax.f32 %v1560, 0.0
      %v1611 = vmax.f32 %v1563, 0.0
      %v1612 = vmax.f32 %v1568, 0.0
      %v1613 = vmax.f32 %v1571, 0.0
      %v1614 = vmax.f32 %v1576, 0.0
      %v1615 = vmax.f32 %v1579, 0.0
      %v1616 = vmax.f32 %v1584, 0.0
      %v1617 = vmax.f32 %v1587, 0.0
      %v1618 = vmax.f32 %v1592, 0.0
      %v1619 = vmax.f32 %v1595, 0.0
      %v1620 = vmax.f32 %v1600, 0.0
      %v1621 = vmax.f32 %v1603, 0.0
      %v1622 = vrot.slane %v1606, 5
      %v1623 = vrot.slane %v1607, 5
      %v1624 = vrot.slane %v1608, 5
      %v1625 = vrot.slane %v1609, 5
      %v1626 = vrot.slane %v1610, 5
      %v1627 = vrot.slane %v1611, 5
      %v1628 = vrot.slane %v1612, 5
      %v1629 = vrot.slane %v1613, 5
      %v1630 = vrot.slane %v1614, 5
      %v1631 = vrot.slane %v1615, 5
      %v1632 = vrot.slane %v1616, 5
      %v1633 = vrot.slane %v1617, 5
      %v1634 = vrot.slane %v1618, 5
      %v1635 = vrot.slane %v1619, 5
      %v1636 = vrot.slane %v1620, 5
      %v1637 = vrot.slane %v1621, 5
      %v1638 = vsel %vm1114, %v1636, %v1637
      %v1639 = vsel %vm1114, %v1635, %v1636
      %v1640 = vsel %vm1114, %v1634, %v1635
      %v1641 = vsel %vm1114, %v1633, %v1634
      %v1642 = vsel %vm1114, %v1632, %v1633
      %v1643 = vsel %vm1114, %v1631, %v1632
      %v1644 = vsel %vm1114, %v1630, %v1631
      %v1645 = vsel %vm1114, %v1629, %v1630
      %v1646 = vsel %vm1114, %v1628, %v1629
      %v1647 = vsel %vm1114, %v1627, %v1628
      %v1648 = vsel %vm1114, %v1626, %v1627
      %v1649 = vsel %vm1114, %v1625, %v1626
      %v1650 = vsel %vm1114, %v1624, %v1625
      %v1651 = vsel %vm1114, %v1623, %v1624
      %v1652 = vsel %vm1114, %v1622, %v1623
      %v1653 = vsel %vm1114, %v1637, %v1622
      %v1654 = vsel %vm1147, %v1653, 0.0
      %v1655 = vsel %vm1148, %v1652, 0.0
      %v1656 = vsel %vm1149, %v1651, 0.0
      %v1657 = vsel %vm1150, %v1650, 0.0
      %v1658 = vsel %vm1151, %v1649, 0.0
      %v1659 = vsel %vm1152, %v1648, 0.0
      %v1660 = vsel %vm1153, %v1647, 0.0
      %v1661 = vsel %vm1154, %v1646, 0.0
      %v1662 = vsel %vm1155, %v1645, 0.0
      %v1663 = vsel %vm1156, %v1644, 0.0
      %v1664 = vsel %vm1157, %v1643, 0.0
      %v1665 = vsel %vm1158, %v1642, 0.0
      %v1666 = vsel %vm1159, %v1641, 0.0
      %v1667 = vsel %vm1160, %v1640, 0.0
      %v1668 = vsel %vm1161, %v1639, 0.0
      %v1669 = vsel %vm1162, %v1638, 0.0
      %v1670 = vrot.slane %v1606, 3
      %v1671 = vrot.slane %v1607, 3
      %v1672 = vrot.slane %v1608, 3
      %v1673 = vrot.slane %v1609, 3
      %v1674 = vrot.slane %v1610, 3
      %v1675 = vrot.slane %v1611, 3
      %v1676 = vrot.slane %v1612, 3
      %v1677 = vrot.slane %v1613, 3
      %v1678 = vrot.slane %v1614, 3
      %v1679 = vrot.slane %v1615, 3
      %v1680 = vrot.slane %v1616, 3
      %v1681 = vrot.slane %v1617, 3
      %v1682 = vrot.slane %v1618, 3
      %v1683 = vrot.slane %v1619, 3
      %v1684 = vrot.slane %v1620, 3
      %v1685 = vrot.slane %v1621, 3
      %v1686 = vsel %vm1195, %v1684, %v1685
      %v1687 = vsel %vm1195, %v1683, %v1684
      %v1688 = vsel %vm1195, %v1682, %v1683
      %v1689 = vsel %vm1195, %v1681, %v1682
      %v1690 = vsel %vm1195, %v1680, %v1681
      %v1691 = vsel %vm1195, %v1679, %v1680
      %v1692 = vsel %vm1195, %v1678, %v1679
      %v1693 = vsel %vm1195, %v1677, %v1678
      %v1694 = vsel %vm1195, %v1676, %v1677
      %v1695 = vsel %vm1195, %v1675, %v1676
      %v1696 = vsel %vm1195, %v1674, %v1675
      %v1697 = vsel %vm1195, %v1673, %v1674
      %v1698 = vsel %vm1195, %v1672, %v1673
      %v1699 = vsel %vm1195, %v1671, %v1672
      %v1700 = vsel %vm1195, %v1670, %v1671
      %v1701 = vsel %vm1195, %v1685, %v1670
      %v1702 = vsel %vm1228, %v1700, 0.0
      %v1703 = vsel %vm1229, %v1699, 0.0
      %v1704 = vsel %vm1230, %v1698, 0.0
      %v1705 = vsel %vm1231, %v1697, 0.0
      %v1706 = vsel %vm1232, %v1696, 0.0
      %v1707 = vsel %vm1233, %v1695, 0.0
      %v1708 = vsel %vm1234, %v1694, 0.0
      %v1709 = vsel %vm1235, %v1693, 0.0
      %v1710 = vsel %vm1236, %v1692, 0.0
      %v1711 = vsel %vm1237, %v1691, 0.0
      %v1712 = vsel %vm1238, %v1690, 0.0
      %v1713 = vsel %vm1239, %v1689, 0.0
      %v1714 = vsel %vm1240, %v1688, 0.0
      %v1715 = vsel %vm1241, %v1687, 0.0
      %v1716 = vsel %vm1242, %v1686, 0.0
      %v1717 = vsel %vm1243, %v1701, 0.0
      %1734 = vrot.lane.b32.xlu0 %v1606, 32
      %v1735 = vpop.permute.xlu0 %1734
      %1736 = vrot.lane.b32.xlu0 %v1607, 32
      %v1737 = vpop.permute.xlu0 %1736
      %1738 = vrot.lane.b32.xlu0 %v1608, 32
      %v1739 = vpop.permute.xlu0 %1738
      %1740 = vrot.lane.b32.xlu0 %v1609, 32
      %v1741 = vpop.permute.xlu0 %1740
      %1742 = vrot.lane.b32.xlu0 %v1610, 32
      %v1743 = vpop.permute.xlu0 %1742
      %1744 = vrot.lane.b32.xlu0 %v1611, 32
      %v1745 = vpop.permute.xlu0 %1744
      %1746 = vrot.lane.b32.xlu0 %v1612, 32
      %v1747 = vpop.permute.xlu0 %1746
      %1748 = vrot.lane.b32.xlu0 %v1613, 32
      %v1749 = vpop.permute.xlu0 %1748
      %1750 = vrot.lane.b32.xlu0 %v1614, 32
      %v1751 = vpop.permute.xlu0 %1750
      %1752 = vrot.lane.b32.xlu0 %v1615, 32
      %v1753 = vpop.permute.xlu0 %1752
      %1754 = vrot.lane.b32.xlu0 %v1616, 32
      %v1755 = vpop.permute.xlu0 %1754
      %1756 = vrot.lane.b32.xlu0 %v1617, 32
      %v1757 = vpop.permute.xlu0 %1756
      %1758 = vrot.lane.b32.xlu0 %v1618, 32
      %v1759 = vpop.permute.xlu0 %1758
      %1760 = vrot.lane.b32.xlu0 %v1619, 32
      %v1761 = vpop.permute.xlu0 %1760
      %1762 = vrot.lane.b32.xlu0 %v1620, 32
      %v1763 = vpop.permute.xlu0 %1762
      %1764 = vrot.lane.b32.xlu0 %v1621, 32
      %v1765 = vpop.permute.xlu0 %1764
      %1798 = vrot.lane.b32.xlu0 %v1702, 64
      %v1799 = vpop.permute.xlu0 %1798
      %1800 = vrot.lane.b32.xlu0 %v1703, 64
      %v1801 = vpop.permute.xlu0 %1800
      %1802 = vrot.lane.b32.xlu0 %v1704, 64
      %v1803 = vpop.permute.xlu0 %1802
      %1804 = vrot.lane.b32.xlu0 %v1705, 64
      %v1805 = vpop.permute.xlu0 %1804
      %1806 = vrot.lane.b32.xlu0 %v1706, 64
      %v1807 = vpop.permute.xlu0 %1806
      %1808 = vrot.lane.b32.xlu0 %v1707, 64
      %v1809 = vpop.permute.xlu0 %1808
      %1810 = vrot.lane.b32.xlu0 %v1708, 64
      %v1811 = vpop.permute.xlu0 %1810
      %1812 = vrot.lane.b32.xlu0 %v1709, 64
      %v1813 = vpop.permute.xlu0 %1812
      %1814 = vrot.lane.b32.xlu0 %v1710, 64
      %v1815 = vpop.permute.xlu0 %1814
      %1816 = vrot.lane.b32.xlu0 %v1711, 64
      %v1817 = vpop.permute.xlu0 %1816
      %1818 = vrot.lane.b32.xlu0 %v1712, 64
      %v1819 = vpop.permute.xlu0 %1818
      %1820 = vrot.lane.b32.xlu0 %v1713, 64
      %v1821 = vpop.permute.xlu0 %1820
      %1822 = vrot.lane.b32.xlu0 %v1714, 64
      %v1823 = vpop.permute.xlu0 %1822
      %1824 = vrot.lane.b32.xlu0 %v1715, 64
      %v1825 = vpop.permute.xlu0 %1824
      %1826 = vrot.lane.b32.xlu0 %v1716, 64
      %v1827 = vpop.permute.xlu0 %1826
      %1828 = vrot.lane.b32.xlu0 %v1717, 64
      %v1829 = vpop.permute.xlu0 %1828
      %v1846 = vsel %vm951, %v1654, %v1735
      %v1847 = vsel %vm951, %v1655, %v1737
      %v1848 = vsel %vm951, %v1656, %v1739
      %v1849 = vsel %vm951, %v1657, %v1741
      %v1850 = vsel %vm951, %v1658, %v1743
      %v1851 = vsel %vm951, %v1659, %v1745
      %v1852 = vsel %vm951, %v1660, %v1747
      %v1853 = vsel %vm951, %v1661, %v1749
      %v1854 = vsel %vm951, %v1662, %v1751
      %v1855 = vsel %vm951, %v1663, %v1753
      %v1856 = vsel %vm951, %v1664, %v1755
      %v1857 = vsel %vm951, %v1665, %v1757
      %v1858 = vsel %vm951, %v1666, %v1759
      %v1859 = vsel %vm951, %v1667, %v1761
      %v1860 = vsel %vm951, %v1668, %v1763
      %v1861 = vsel %vm951, %v1669, %v1765
      %v1862 = vsel %vm1404, %v1846, %v1799
      %v1863 = vsel %vm1404, %v1847, %v1801
      %v1864 = vsel %vm1404, %v1848, %v1803
      %v1865 = vsel %vm1404, %v1849, %v1805
      %v1866 = vsel %vm1404, %v1850, %v1807
      %v1867 = vsel %vm1404, %v1851, %v1809
      %v1868 = vsel %vm1404, %v1852, %v1811
      %v1869 = vsel %vm1404, %v1853, %v1813
      %v1870 = vsel %vm1404, %v1854, %v1815
      %v1871 = vsel %vm1404, %v1855, %v1817
      %v1872 = vsel %vm1404, %v1856, %v1819
      %v1873 = vsel %vm1404, %v1857, %v1821
      %v1874 = vsel %vm1404, %v1858, %v1823
      %v1875 = vsel %vm1404, %v1859, %v1825
      %v1876 = vsel %vm1404, %v1860, %v1827
      %v1877 = vsel %vm1404, %v1861, %v1829
      %v1878 = vpack.c.bf16 %v1863, %v1862
      %v1879 = vpack.c.bf16 %v1865, %v1864
      %v1880 = vpack.c.bf16 %v1867, %v1866
      %v1881 = vpack.c.bf16 %v1869, %v1868
      %v1882 = vpack.c.bf16 %v1871, %v1870
      %v1883 = vpack.c.bf16 %v1873, %v1872
      %v1884 = vpack.c.bf16 %v1875, %v1874
      %v1885 = vpack.c.bf16 %v1877, %v1876
      %v1886 = vld [vmem:[%s446] sm:$0xf]
      %v1887 = vld [vmem:[%s446 + $0x4] sm:$0xf]
      %v1888 = vld [vmem:[%s446 + $0x8] sm:$0xf]
      %v1889 = vld [vmem:[%s446 + $0xc] sm:$0xf]
      %v1890 = vld [vmem:[%s446 + $0x10] sm:$0xf]
      %v1891 = vld [vmem:[%s446 + $0x14] sm:$0xf]
      %v1892 = vld [vmem:[%s446 + $0x18] sm:$0xf]
      %v1893 = vld [vmem:[%s446 + $0x1c] sm:$0xf]
      %v1894 = vld [vmem:[%s446 + $0x20] sm:$0xf]
      %v1895 = vld [vmem:[%s446 + $0x24] sm:$0xf]
      %v1896 = vld [vmem:[%s446 + $0x28] sm:$0xf]
      %v1897 = vld [vmem:[%s446 + $0x2c] sm:$0xf]
      %v1898 = vld [vmem:[%s449] sm:$0x1]
      %v1900 = vlaneseq
      %v1901 = vshrl.u32 %v1900, 7
      %v1902 = vsub.s32 0, %v1901
      %v1903 = vrot.slane %v1898, %v1902
      %v1917 = vunpack.c.l.b16 %v1886
      %v1918 = vunpack.c.l.b16 %v1887
      %v1919 = vunpack.c.l.b16 %v1888
      %v1920 = vunpack.c.l.b16 %v1889
      %v1921 = vunpack.c.l.b16 %v1890
      %v1922 = vunpack.c.l.b16 %v1891
      %v1923 = vunpack.c.l.b16 %v1892
      %v1924 = vunpack.c.l.b16 %v1893
      %v1925 = vunpack.c.l.b16 %v1894
      %v1926 = vunpack.c.l.b16 %v1895
      %v1927 = vunpack.c.l.b16 %v1896
      %v1928 = vunpack.c.l.b16 %v1897
      %v1929 = vpack.c.b16 %v1918, %v1917
      %v1930 = vpack.c.b16 %v1920, %v1919
      %v1931 = vpack.c.b16 %v1922, %v1921
      %v1932 = vpack.c.b16 %v1924, %v1923
      %v1933 = vpack.c.b16 %v1926, %v1925
      %v1934 = vpack.c.b16 %v1928, %v1927
      %v1942 = vsel %vm1484, %v1878, 0
      %v1945 = vsel %vm1484, %v1879, 0
      %v1948 = vsel %vm1484, %v1880, 0
      %v1951 = vsel %vm1484, %v1881, 0
      %v1954 = vsel %vm1484, %v1882, 0
      %v1957 = vsel %vm1484, %v1883, 0
      %v1960 = vsel %vm1484, %v1884, 0
      %v1963 = vsel %vm1484, %v1885, 0
      %1965 = vmatprep.subr.bf16.mxu0 0
      %1966 = vmatpush1.bf16.msra.mxu0 %v1929
      %1967 = vmatprep.subr.bf16.mxu0 0
      %1968 = vmatpush1.bf16.msra.mxu0 %v1930
      %1969 = vmatprep.subr.bf16.mxu0 0
      %1970 = vmatpush1.bf16.msra.mxu0 %v1931
      %1971 = vmatprep.subr.bf16.mxu0 0
      %1972 = vmatpush1.bf16.msra.mxu0 %v1932
      %1973 = vmatprep.subr.bf16.mxu0 0
      %1974 = vmatpush1.bf16.msra.mxu0 %v1933
      %1975 = vmatprep.subr.bf16.mxu0 0
      %1976 = vmatpush1.bf16.msra.mxu0 %v1934
      %1977 = vmatprep.subr.bf16.mxu0 0
      %1978 = vmatpush1.bf16.msra.mxu0 0
      %1979 = vmatprep.subr.bf16.mxu0 0
      %1980 = vmatpush1.bf16.msra.mxu0 0
      %1981 = vmatprep.subr.bf16.mxu0 0
      %1982 = vmatpush1.bf16.msra.mxu0 0
      %1983 = vmatprep.subr.bf16.mxu0 0
      %1984 = vmatpush1.bf16.msra.mxu0 0
      %1985 = vmatprep.subr.bf16.mxu0 0
      %1986 = vmatpush1.bf16.msra.mxu0 0
      %1987 = vmatprep.subr.bf16.mxu0 0
      %1988 = vmatpush1.bf16.msra.mxu0 0
      %1989 = vmatprep.subr.bf16.mxu0 0
      %1990 = vmatpush1.bf16.msra.mxu0 0
      %1991 = vmatprep.subr.bf16.mxu0 0
      %1992 = vmatpush1.bf16.msra.mxu0 0
      %1993 = vmatprep.subr.bf16.mxu0 0
      %1994 = vmatpush1.bf16.msra.mxu0 0
      %1995 = vmatprep.subr.bf16.mxu0 0
      %1996 = vmatpush1.bf16.msra.mxu0 0
      %1997 = vmatprep.mubr.bf16.mxu0 0
      %1998 = vmatmul.mubr.bf16.gmra.mrb[0].mxu0 %v1942
      %v1999 = vpop.f32.mrb[0].mxu0
      %v2000 = vadd.f32 %v1903, %v1999
      %v2001 = vpop.f32.mrb[0].mxu0
      %v2002 = vpop.f32.mrb[0].mxu0
      %v2003 = vadd.f32 %v1903, %v2002
      %v2004 = vpop.f32.mrb[0].mxu0
      %2005 = vmatprep.mubr.bf16.mxu0 0
      %2006 = vmatmul.mubr.bf16.gmra.mrb[0].mxu0 %v1945
      %v2007 = vpop.f32.mrb[0].mxu0
      %v2008 = vadd.f32 %v1903, %v2007
      %v2009 = vpop.f32.mrb[0].mxu0
      %v2010 = vpop.f32.mrb[0].mxu0
      %v2011 = vadd.f32 %v1903, %v2010
      %v2012 = vpop.f32.mrb[0].mxu0
      %2013 = vmatprep.mubr.bf16.mxu0 0
      %2014 = vmatmul.mubr.bf16.gmra.mrb[0].mxu0 %v1948
      %v2015 = vpop.f32.mrb[0].mxu0
      %v2016 = vadd.f32 %v1903, %v2015
      %v2017 = vpop.f32.mrb[0].mxu0
      %v2018 = vpop.f32.mrb[0].mxu0
      %v2019 = vadd.f32 %v1903, %v2018
      %v2020 = vpop.f32.mrb[0].mxu0
      %2021 = vmatprep.mubr.bf16.mxu0 0
      %2022 = vmatmul.mubr.bf16.gmra.mrb[0].mxu0 %v1951
      %v2023 = vpop.f32.mrb[0].mxu0
      %v2024 = vadd.f32 %v1903, %v2023
      %v2025 = vpop.f32.mrb[0].mxu0
      %v2026 = vpop.f32.mrb[0].mxu0
      %v2027 = vadd.f32 %v1903, %v2026
      %v2028 = vpop.f32.mrb[0].mxu0
      %2029 = vmatprep.mubr.bf16.mxu0 0
      %2030 = vmatmul.mubr.bf16.gmra.mrb[0].mxu0 %v1954
      %v2031 = vpop.f32.mrb[0].mxu0
      %v2032 = vadd.f32 %v1903, %v2031
      %v2033 = vpop.f32.mrb[0].mxu0
      %v2034 = vpop.f32.mrb[0].mxu0
      %v2035 = vadd.f32 %v1903, %v2034
      %v2036 = vpop.f32.mrb[0].mxu0
      %2037 = vmatprep.mubr.bf16.mxu0 0
      %2038 = vmatmul.mubr.bf16.gmra.mrb[0].mxu0 %v1957
      %v2039 = vpop.f32.mrb[0].mxu0
      %v2040 = vadd.f32 %v1903, %v2039
      %v2041 = vpop.f32.mrb[0].mxu0
      %v2042 = vpop.f32.mrb[0].mxu0
      %v2043 = vadd.f32 %v1903, %v2042
      %v2044 = vpop.f32.mrb[0].mxu0
      %2045 = vmatprep.mubr.bf16.mxu0 0
      %2046 = vmatmul.mubr.bf16.gmra.mrb[0].mxu0 %v1960
      %v2047 = vpop.f32.mrb[0].mxu0
      %v2048 = vadd.f32 %v1903, %v2047
      %v2049 = vpop.f32.mrb[0].mxu0
      %v2050 = vpop.f32.mrb[0].mxu0
      %v2051 = vadd.f32 %v1903, %v2050
      %v2052 = vpop.f32.mrb[0].mxu0
      %2053 = vmatprep.mubr.bf16.mxu0 0
      %2054 = vmatmul.mubr.bf16.gmra.mrb[0].mxu0 %v1963
      %v2055 = vpop.f32.mrb[0].mxu0
      %v2056 = vadd.f32 %v1903, %v2055
      %v2057 = vpop.f32.mrb[0].mxu0
      %v2058 = vpop.f32.mrb[0].mxu0
      %v2059 = vadd.f32 %v1903, %v2058
      %v2060 = vpop.f32.mrb[0].mxu0
      %2061 = vdwg.mxu0
      %v2062 = vadd.f32 %v2000, %v1082
      %v2063 = vadd.f32 %v2003, %v1083
      %v2064 = vadd.f32 %v2008, %v1084
      %v2065 = vadd.f32 %v2011, %v1085
      %v2066 = vadd.f32 %v2016, %v1086
      %v2067 = vadd.f32 %v2019, %v1087
      %v2068 = vadd.f32 %v2024, %v1088
      %v2069 = vadd.f32 %v2027, %v1089
      %v2070 = vadd.f32 %v2032, %v1090
      %v2071 = vadd.f32 %v2035, %v1091
      %v2072 = vadd.f32 %v2040, %v1092
      %v2073 = vadd.f32 %v2043, %v1093
      %v2074 = vadd.f32 %v2048, %v1094
      %v2075 = vadd.f32 %v2051, %v1095
      %v2076 = vadd.f32 %v2056, %v1096
      %v2077 = vadd.f32 %v2059, %v1097
      %v2078 = vmax.f32 %v2062, 0.0
      %v2079 = vmax.f32 %v2063, 0.0
      %v2080 = vmax.f32 %v2064, 0.0
      %v2081 = vmax.f32 %v2065, 0.0
      %v2082 = vmax.f32 %v2066, 0.0
      %v2083 = vmax.f32 %v2067, 0.0
      %v2084 = vmax.f32 %v2068, 0.0
      %v2085 = vmax.f32 %v2069, 0.0
      %v2086 = vmax.f32 %v2070, 0.0
      %v2087 = vmax.f32 %v2071, 0.0
      %v2088 = vmax.f32 %v2072, 0.0
      %v2089 = vmax.f32 %v2073, 0.0
      %v2090 = vmax.f32 %v2074, 0.0
      %v2091 = vmax.f32 %v2075, 0.0
      %v2092 = vmax.f32 %v2076, 0.0
      %v2093 = vmax.f32 %v2077, 0.0
      %p2094 = scmp.lt.s32.totalorder %s24, 1
      // Predicated region
      $region69: #{tpu_custom_call.1} parent=63 // pred_check
        %p2095 = pneg %p2094
      $region70: #{tpu_custom_call.1} parent=63 // pred_check_branch
        %2097 = sbr.rel (%p2095) target = $region72
      $region71: #{tpu_custom_call.1} parent=63 // pred_region
        %2098 = vst.msk [vmem:[#allocation2] sm:$0xff] %vm951, %v2078
        %2099 = vst.msk [vmem:[#allocation2 + $0x8] sm:$0xff] %vm951, %v2079
        %2100 = vst.msk [vmem:[#allocation2 + $0x10] sm:$0xff] %vm951, %v2080
        %2101 = vst.msk [vmem:[#allocation2 + $0x18] sm:$0xff] %vm951, %v2081
        %2102 = vst.msk [vmem:[#allocation2 + $0x20] sm:$0xff] %vm951, %v2082
        %2103 = vst.msk [vmem:[#allocation2 + $0x28] sm:$0xff] %vm951, %v2083
        %2104 = vst.msk [vmem:[#allocation2 + $0x30] sm:$0xff] %vm951, %v2084
        %2105 = vst.msk [vmem:[#allocation2 + $0x38] sm:$0xff] %vm951, %v2085
        %2106 = vst.msk [vmem:[#allocation2 + $0x40] sm:$0xff] %vm951, %v2086
        %2107 = vst.msk [vmem:[#allocation2 + $0x48] sm:$0xff] %vm951, %v2087
        %2108 = vst.msk [vmem:[#allocation2 + $0x50] sm:$0xff] %vm951, %v2088
        %2109 = vst.msk [vmem:[#allocation2 + $0x58] sm:$0xff] %vm951, %v2089
        %2110 = vst.msk [vmem:[#allocation2 + $0x60] sm:$0xff] %vm951, %v2090
        %2111 = vst.msk [vmem:[#allocation2 + $0x68] sm:$0xff] %vm951, %v2091
        %2112 = vst.msk [vmem:[#allocation2 + $0x70] sm:$0xff] %vm951, %v2092
        %2113 = vst.msk [vmem:[#allocation2 + $0x78] sm:$0xff] %vm951, %v2093
      $region72: #{tpu_custom_call.1} parent=63 // pred_fallthru
        _
      %p2114 = scmp.eq.s32.totalorder %s24, 1
      // Predicated region
      $region73: #{tpu_custom_call.1} parent=63 // pred_check
        %p2115 = pneg %p2114
      $region74: #{tpu_custom_call.1} parent=63 // pred_check_branch
        %2117 = sbr.rel (%p2115) target = $region76
      $region75: #{tpu_custom_call.1} parent=63 // pred_region
        %v2118 = vld [vmem:[%s9] sm:$0xff]
        %v2119 = vld [vmem:[%s9 + $0x8] sm:$0xff]
        %v2120 = vld [vmem:[%s9 + $0x10] sm:$0xff]
        %v2121 = vld [vmem:[%s9 + $0x18] sm:$0xff]
        %v2122 = vld [vmem:[#allocation3] sm:$0x1]
        %v2124 = vlaneseq
        %v2125 = vshrl.u32 %v2124, 7
        %v2126 = vsub.s32 0, %v2125
        %v2127 = vrot.slane %v2122, %v2126
        %2128 = vset.pattern.permute.xlu0 0
        %2129 = vperm.xlu0 %2128, %v2127
        %v2130 = vpop.permute.xlu0 %2129
        %v2133 = vsel %vm951, %v2078, 0
        %v2136 = vsel %vm951, %v2079, 0
        %v2139 = vsel %vm951, %v2080, 0
        %v2142 = vsel %vm951, %v2081, 0
        %v2145 = vsel %vm951, %v2082, 0
        %v2148 = vsel %vm951, %v2083, 0
        %v2151 = vsel %vm951, %v2084, 0
        %v2154 = vsel %vm951, %v2085, 0
        %v2157 = vsel %vm951, %v2086, 0
        %v2160 = vsel %vm951, %v2087, 0
        %v2163 = vsel %vm951, %v2088, 0
        %v2166 = vsel %vm951, %v2089, 0
        %v2169 = vsel %vm951, %v2090, 0
        %v2172 = vsel %vm951, %v2091, 0
        %v2175 = vsel %vm951, %v2092, 0
        %v2178 = vsel %vm951, %v2093, 0
        %2180 = vmatprep.subr.mxu0 0.0
        %2181 = vmatpush1.msra.mxu0 %v2118
        %2182 = vmatprep.subr.mxu0 0.0
        %2183 = vmatpush1.msra.mxu0 %v2119
        %2184 = vmatprep.subr.mxu0 0.0
        %2185 = vmatpush1.msra.mxu0 %v2120
        %2186 = vmatprep.subr.mxu0 0.0
        %2187 = vmatpush1.msra.mxu0 %v2121
        %2188 = vmatprep.subr.mxu0 0.0
        %2189 = vmatpush1.msra.mxu0 0.0
        %2190 = vmatprep.subr.mxu0 0.0
        %2191 = vmatpush1.msra.mxu0 0.0
        %2192 = vmatprep.subr.mxu0 0.0
        %2193 = vmatpush1.msra.mxu0 0.0
        %2194 = vmatprep.subr.mxu0 0.0
        %2195 = vmatpush1.msra.mxu0 0.0
        %2196 = vmatprep.subr.mxu0 0.0
        %2197 = vmatpush1.msra.mxu0 0.0
        %2198 = vmatprep.subr.mxu0 0.0
        %2199 = vmatpush1.msra.mxu0 0.0
        %2200 = vmatprep.subr.mxu0 0.0
        %2201 = vmatpush1.msra.mxu0 0.0
        %2202 = vmatprep.subr.mxu0 0.0
        %2203 = vmatpush1.msra.mxu0 0.0
        %2204 = vmatprep.subr.mxu0 0.0
        %2205 = vmatpush1.msra.mxu0 0.0
        %2206 = vmatprep.subr.mxu0 0.0
        %2207 = vmatpush1.msra.mxu0 0.0
        %2208 = vmatprep.subr.mxu0 0.0
        %2209 = vmatpush1.msra.mxu0 0.0
        %2210 = vmatprep.subr.mxu0 0.0
        %2211 = vmatpush1.msra.mxu0 0.0
        %2212 = vmatprep.subr.mxu0 0.0
        %2213 = vmatpush1.msra.mxu0 0.0
        %2214 = vmatprep.subr.mxu0 0.0
        %2215 = vmatpush1.msra.mxu0 0.0
        %2216 = vmatprep.subr.mxu0 0.0
        %2217 = vmatpush1.msra.mxu0 0.0
        %2218 = vmatprep.subr.mxu0 0.0
        %2219 = vmatpush1.msra.mxu0 0.0
        %2220 = vmatprep.subr.mxu0 0.0
        %2221 = vmatpush1.msra.mxu0 0.0
        %2222 = vmatprep.subr.mxu0 0.0
        %2223 = vmatpush1.msra.mxu0 0.0
        %2224 = vmatprep.subr.mxu0 0.0
        %2225 = vmatpush1.msra.mxu0 0.0
        %2226 = vmatprep.subr.mxu0 0.0
        %2227 = vmatpush1.msra.mxu0 0.0
        %2228 = vmatprep.subr.mxu0 0.0
        %2229 = vmatpush1.msra.mxu0 0.0
        %2230 = vmatprep.subr.mxu0 0.0
        %2231 = vmatpush1.msra.mxu0 0.0
        %2232 = vmatprep.subr.mxu0 0.0
        %2233 = vmatpush1.msra.mxu0 0.0
        %2234 = vmatprep.subr.mxu0 0.0
        %2235 = vmatpush1.msra.mxu0 0.0
        %2236 = vmatprep.subr.mxu0 0.0
        %2237 = vmatpush1.msra.mxu0 0.0
        %2238 = vmatprep.subr.mxu0 0.0
        %2239 = vmatpush1.msra.mxu0 0.0
        %2240 = vmatprep.subr.mxu0 0.0
        %2241 = vmatpush1.msra.mxu0 0.0
        %2242 = vmatprep.subr.mxu0 0.0
        %2243 = vmatpush1.msra.mxu0 0.0
        %2244 = vmatprep.mubr.f32.mxu0 0.0
        %2245 = vmatmul.mubr.f32.gmra.mrb[0].mxu0 %v2133
        %v2246 = vpop.f32.mrb[0].mxu0
        %v2247 = vadd.f32 %v2130, %v2246
        %v2248 = vpop.f32.mrb[0].mxu0
        %2249 = vmatprep.mubr.f32.mxu0 0.0
        %2250 = vmatmul.mubr.f32.gmra.mrb[0].mxu0 %v2136
        %v2251 = vpop.f32.mrb[0].mxu0
        %v2252 = vadd.f32 %v2130, %v2251
        %v2253 = vpop.f32.mrb[0].mxu0
        %2254 = vmatprep.mubr.f32.mxu0 0.0
        %2255 = vmatmul.mubr.f32.gmra.mrb[0].mxu0 %v2139
        %v2256 = vpop.f32.mrb[0].mxu0
        %v2257 = vadd.f32 %v2130, %v2256
        %v2258 = vpop.f32.mrb[0].mxu0
        %2259 = vmatprep.mubr.f32.mxu0 0.0
        %2260 = vmatmul.mubr.f32.gmra.mrb[0].mxu0 %v2142
        %v2261 = vpop.f32.mrb[0].mxu0
        %v2262 = vadd.f32 %v2130, %v2261
        %v2263 = vpop.f32.mrb[0].mxu0
        %2264 = vmatprep.mubr.f32.mxu0 0.0
        %2265 = vmatmul.mubr.f32.gmra.mrb[0].mxu0 %v2145
        %v2266 = vpop.f32.mrb[0].mxu0
        %v2267 = vadd.f32 %v2130, %v2266
        %v2268 = vpop.f32.mrb[0].mxu0
        %2269 = vmatprep.mubr.f32.mxu0 0.0
        %2270 = vmatmul.mubr.f32.gmra.mrb[0].mxu0 %v2148
        %v2271 = vpop.f32.mrb[0].mxu0
        %v2272 = vadd.f32 %v2130, %v2271
        %v2273 = vpop.f32.mrb[0].mxu0
        %2274 = vmatprep.mubr.f32.mxu0 0.0
        %2275 = vmatmul.mubr.f32.gmra.mrb[0].mxu0 %v2151
        %v2276 = vpop.f32.mrb[0].mxu0
        %v2277 = vadd.f32 %v2130, %v2276
        %v2278 = vpop.f32.mrb[0].mxu0
        %2279 = vmatprep.mubr.f32.mxu0 0.0
        %2280 = vmatmul.mubr.f32.gmra.mrb[0].mxu0 %v2154
        %v2281 = vpop.f32.mrb[0].mxu0
        %v2282 = vadd.f32 %v2130, %v2281
        %v2283 = vpop.f32.mrb[0].mxu0
        %2284 = vmatprep.mubr.f32.mxu0 0.0
        %2285 = vmatmul.mubr.f32.gmra.mrb[0].mxu0 %v2157
        %v2286 = vpop.f32.mrb[0].mxu0
        %v2287 = vadd.f32 %v2130, %v2286
        %v2288 = vpop.f32.mrb[0].mxu0
        %2289 = vmatprep.mubr.f32.mxu0 0.0
        %2290 = vmatmul.mubr.f32.gmra.mrb[0].mxu0 %v2160
        %v2291 = vpop.f32.mrb[0].mxu0
        %v2292 = vadd.f32 %v2130, %v2291
        %v2293 = vpop.f32.mrb[0].mxu0
        %2294 = vmatprep.mubr.f32.mxu0 0.0
        %2295 = vmatmul.mubr.f32.gmra.mrb[0].mxu0 %v2163
        %v2296 = vpop.f32.mrb[0].mxu0
        %v2297 = vadd.f32 %v2130, %v2296
        %v2298 = vpop.f32.mrb[0].mxu0
        %2299 = vmatprep.mubr.f32.mxu0 0.0
        %2300 = vmatmul.mubr.f32.gmra.mrb[0].mxu0 %v2166
        %v2301 = vpop.f32.mrb[0].mxu0
        %v2302 = vadd.f32 %v2130, %v2301
        %v2303 = vpop.f32.mrb[0].mxu0
        %2304 = vmatprep.mubr.f32.mxu0 0.0
        %2305 = vmatmul.mubr.f32.gmra.mrb[0].mxu0 %v2169
        %v2306 = vpop.f32.mrb[0].mxu0
        %v2307 = vadd.f32 %v2130, %v2306
        %v2308 = vpop.f32.mrb[0].mxu0
        %2309 = vmatprep.mubr.f32.mxu0 0.0
        %2310 = vmatmul.mubr.f32.gmra.mrb[0].mxu0 %v2172
        %v2311 = vpop.f32.mrb[0].mxu0
        %v2312 = vadd.f32 %v2130, %v2311
        %v2313 = vpop.f32.mrb[0].mxu0
        %2314 = vmatprep.mubr.f32.mxu0 0.0
        %2315 = vmatmul.mubr.f32.gmra.mrb[0].mxu0 %v2175
        %v2316 = vpop.f32.mrb[0].mxu0
        %v2317 = vadd.f32 %v2130, %v2316
        %v2318 = vpop.f32.mrb[0].mxu0
        %2319 = vmatprep.mubr.f32.mxu0 0.0
        %2320 = vmatmul.mubr.f32.gmra.mrb[0].mxu0 %v2178
        %v2321 = vpop.f32.mrb[0].mxu0
        %v2322 = vadd.f32 %v2130, %v2321
        %v2323 = vpop.f32.mrb[0].mxu0
        %2324 = vdwg.mxu0
        %vm2325 = vcmask 15360
        %2326 = vst.msk [vmem:[%s11] sm:$0xff] %vm2325, %v2247
        %2327 = vst.msk [vmem:[%s11 + $0x8] sm:$0xff] %vm2325, %v2252
        %2328 = vst.msk [vmem:[%s11 + $0x10] sm:$0xff] %vm2325, %v2257
        %2329 = vst.msk [vmem:[%s11 + $0x18] sm:$0xff] %vm2325, %v2262
        %2330 = vst.msk [vmem:[%s11 + $0x20] sm:$0xff] %vm2325, %v2267
        %2331 = vst.msk [vmem:[%s11 + $0x28] sm:$0xff] %vm2325, %v2272
        %2332 = vst.msk [vmem:[%s11 + $0x30] sm:$0xff] %vm2325, %v2277
        %2333 = vst.msk [vmem:[%s11 + $0x38] sm:$0xff] %vm2325, %v2282
        %2334 = vst.msk [vmem:[%s11 + $0x40] sm:$0xff] %vm2325, %v2287
        %2335 = vst.msk [vmem:[%s11 + $0x48] sm:$0xff] %vm2325, %v2292
        %2336 = vst.msk [vmem:[%s11 + $0x50] sm:$0xff] %vm2325, %v2297
        %2337 = vst.msk [vmem:[%s11 + $0x58] sm:$0xff] %vm2325, %v2302
        %2338 = vst.msk [vmem:[%s11 + $0x60] sm:$0xff] %vm2325, %v2307
        %2339 = vst.msk [vmem:[%s11 + $0x68] sm:$0xff] %vm2325, %v2312
        %2340 = vst.msk [vmem:[%s11 + $0x70] sm:$0xff] %vm2325, %v2317
        %2341 = vst.msk [vmem:[%s11 + $0x78] sm:$0xff] %vm2325, %v2322
      $region76: #{tpu_custom_call.1} parent=63 // pred_fallthru
        _
      // Predicated region
      $region77: #{tpu_custom_call.1} parent=63 // pred_check
        %p2342 = pneg %p298
      $region78: #{tpu_custom_call.1} parent=63 // pred_check_branch
        %2344 = sbr.rel (%p2342) target = $region80
      $region79: #{tpu_custom_call.1} parent=63 // pred_region
        _
      $region80: #{tpu_custom_call.1} parent=63 // pred_fallthru
        _
      // Predicated region
      $region81: #{tpu_custom_call.1} parent=63 // pred_check
        %p2345 = pneg %p298
      $region82: #{tpu_custom_call.1} parent=63 // pred_check_branch
        %2347 = sbr.rel (%p2345) target = $region84
      $region83: #{tpu_custom_call.1} parent=63 // pred_region
        _
      $region84: #{tpu_custom_call.1} parent=63 // pred_fallthru
        _
    $region64: #{tpu_custom_call.1} parent=5 // pred_fallthru
      _
    %p2348 = scmp.le.s32.totalorder 2, %s19
    // Predicated region
    $region85: #{tpu_custom_call.1} parent=5 // pred_check
      %p2349 = pneg %p2348
    $region86: #{tpu_custom_call.1} parent=5 // pred_check_branch
      %2351 = sbr.rel (%p2349) target = $region88
    $region87: #{tpu_custom_call.1} parent=5 // pred_region
      %s2352 = ssub.s32 %s19, 2
    $region88: #{tpu_custom_call.1} parent=5 // pred_fallthru
      _
  $region6: #{tpu_custom_call.1} parent=0 // loop_footer
    %s23 = sadd.s32 1, %s19
  $region7: #{tpu_custom_call.1} parent=0 // loop_footer_branch
    %18 = sbr.rel target = $region3
  $region8: #{tpu_custom_call.1} parent=0 // loop_exit
    _

// kernel: tpu_custom_call.1
$region0: #{tpu_custom_call.1}
  #allocation0 [shape = 'u32[]', space=smem, size = 0x4, offset = 0x4, fixed_abs, tag = 'smem constant byte address 0x4 - core index']
  #allocation1 [shape = 'u32[144,128]{1,0:T(1,128)}', space=vmem, size = 0x12000, scoped, tag = 'internal scratch']
  #allocation2 [shape = 'f32[128,32]{1,0:T(8,128)}', space=vmem, size = 0x10000, scoped, tag = 'scratch operand']
  #allocation3 [shape = 'f32[1,1]{1,0:T(1,128)S(1)}', space=vmem, size = 0x200, scoped, tag = 'scoped memory for tpu_custom_call.1']
  %s0 = inlined_call_operand.vmem [shape: f32[128,3], index: 0, kind: input, shape index: {}]
  %s1 = inlined_call_operand.vmem [shape: f32[3,32], index: 1, kind: input, shape index: {}]
  %s2 = inlined_call_operand.vmem [shape: f32[1,32], index: 2, kind: input, shape index: {}]
  %s3 = inlined_call_operand.vmem [shape: f32[2,1,32], index: 3, kind: input, shape index: {}]
  %s4 = inlined_call_operand.vmem [shape: f32[2,1,32], index: 4, kind: input, shape index: {}]
  %s5 = inlined_call_operand.vmem [shape: bf16[2,96,32], index: 5, kind: input, shape index: {}]
  %s6 = inlined_call_operand.vmem [shape: f32[2,1,32], index: 6, kind: input, shape index: {}]
  %s7 = inlined_call_operand.vmem [shape: bf16[2,96,32], index: 7, kind: input, shape index: {}]
  %s8 = inlined_call_operand.vmem [shape: f32[2,1,32], index: 8, kind: input, shape index: {}]
  %s9 = inlined_call_operand.vmem [shape: f32[32,2], index: 9, kind: input, shape index: {}]
  %s10 = inlined_call_operand.<no memory space> [shape: f32[1,1], index: 10, kind: input, shape index: {}]
  %s11 = inlined_call_operand.vmem [shape: f32[128,2], index: 11, kind: output, shape index: {}]
  %s12 = sld [smem:[#allocation0]]
  $region89: #{tpu_custom_call.1} parent=0
    _
  %s14 = ssub.s32 1, %s12
  %s15 = scalar_select 0, %s14, %s12
  %v16 = vstv %s10
  %17 = vst [vmem:[#allocation3] sm:$0x1] %v16
  loop: start=0, step=1, limit=4
  $region2: #{tpu_custom_call.1} parent=0 // loop_pre_header
    _
  $region3: #{tpu_custom_call.1} parent=0 // loop_header
    %s19 = sphi 0, %s23
    %p20 = scmp.ge.s32.totalorder %s19, 4
    %s27 = sphi 0, %s27
    %s29 = sphi 0, %s27
    %s30 = sphi 0, %s29
    %s44 = sphi 0, %s30
    %s48 = sphi 0, %s48
    %s50 = sphi 0, %s48
    %s51 = sphi 0, %s50
    %s65 = sphi 0, %s51
    %s69 = sphi 0, %s69
    %s71 = sphi 0, %s69
    %s72 = sphi 0, %s71
    %s86 = sphi 0, %s72
    %s92 = sphi 0, %s94
    %s95 = sphi 0, %s92
    %s96 = sphi 0, %s95
    %s112 = sphi 0, %s96
    %s118 = sphi 0, %s120
    %s121 = sphi 0, %s118
    %s122 = sphi 0, %s121
    %s138 = sphi 0, %s122
    %s144 = sphi 0, %s146
    %s147 = sphi 0, %s144
    %s148 = sphi 0, %s147
    %s164 = sphi 0, %s148
    %s170 = sphi 0, %s172
    %s173 = sphi 0, %s170
    %s174 = sphi 0, %s173
    %s190 = sphi 0, %s174
    %s196 = sphi 0, %s198
    %s199 = sphi 0, %s196
    %s200 = sphi 0, %s199
    %s216 = sphi 0, %s200
    %s222 = sphi 0, %s224
    %s225 = sphi 0, %s222
    %s226 = sphi 0, %s225
    %s242 = sphi 0, %s226
    %s246 = sphi 0, %s246
    %s248 = sphi 0, %s246
    %s249 = sphi 0, %s248
    %s263 = sphi 0, %s249
    %s267 = sphi 0, %s267
    %s269 = sphi 0, %s267
    %s270 = sphi 0, %s269
    %s284 = sphi 0, %s270
    %s288 = sphi 0, %s288
    %s290 = sphi 0, %s288
    %s291 = sphi 0, %s290
    %s305 = sphi 0, %s291
  $region4: #{tpu_custom_call.1} parent=0 // loop_header_branch
    %22 = sbr.rel (%p20) target = $region8
  $region5: #{tpu_custom_call.1} parent=0 // loop_body
    %s24 = ssub.s32 %s19, 1
    %s25 = ssub.s32 %s19, 2
    %s26 = sadd.s32 %s19, 1
    %s28 = sadd.s32 %s27, 1
    %p31 = scmp.eq.s32.totalorder %s19, 1
    %p32 = scmp.ne.s32.totalorder %s27, %s29
    %p33 = scmp.eq.s32.totalorder %s19, 0
    %p34 = por %p32, %p33
    %p35 = scmp.ne.s32.totalorder %s27, %s29
    %p36 = scmp.eq.s32.totalorder %s24, 1
    %p37 = por %p35, %p36
    %p38 = scmp.ne.s32.totalorder %s29, %s30
    %p39 = scmp.eq.s32.totalorder %s24, 0
    %p40 = por %p38, %p39
    %p41 = scmp.ne.s32.totalorder %s29, %s30
    %p42 = scmp.eq.s32.totalorder %s25, 1
    %p43 = por %p41, %p42
    %p45 = scmp.ne.s32.totalorder %s30, %s44
    %p46 = scmp.eq.s32.totalorder %s25, 0
    %p47 = por %p45, %p46
    %s49 = sadd.s32 %s48, 1
    %p52 = scmp.eq.s32.totalorder %s19, 1
    %p53 = scmp.ne.s32.totalorder %s48, %s50
    %p54 = scmp.eq.s32.totalorder %s19, 0
    %p55 = por %p53, %p54
    %p56 = scmp.ne.s32.totalorder %s48, %s50
    %p57 = scmp.eq.s32.totalorder %s24, 1
    %p58 = por %p56, %p57
    %p59 = scmp.ne.s32.totalorder %s50, %s51
    %p60 = scmp.eq.s32.totalorder %s24, 0
    %p61 = por %p59, %p60
    %p62 = scmp.ne.s32.totalorder %s50, %s51
    %p63 = scmp.eq.s32.totalorder %s25, 1
    %p64 = por %p62, %p63
    %p66 = scmp.ne.s32.totalorder %s51, %s65
    %p67 = scmp.eq.s32.totalorder %s25, 0
    %p68 = por %p66, %p67
    %s70 = sadd.s32 %s69, 1
    %p73 = scmp.eq.s32.totalorder %s19, 1
    %p74 = scmp.ne.s32.totalorder %s69, %s71
    %p75 = scmp.eq.s32.totalorder %s19, 0
    %p76 = por %p74, %p75
    %p77 = scmp.ne.s32.totalorder %s69, %s71
    %p78 = scmp.eq.s32.totalorder %s24, 1
    %p79 = por %p77, %p78
    %p80 = scmp.ne.s32.totalorder %s71, %s72
    %p81 = scmp.eq.s32.totalorder %s24, 0
    %p82 = por %p80, %p81
    %p83 = scmp.ne.s32.totalorder %s71, %s72
    %p84 = scmp.eq.s32.totalorder %s25, 1
    %p85 = por %p83, %p84
    %p87 = scmp.ne.s32.totalorder %s72, %s86
    %p88 = scmp.eq.s32.totalorder %s25, 0
    %p89 = por %p87, %p88
    %s90 = ssub.s32 %s19, %s26
    %p91 = scmp.eq.s32.totalorder %s90, 0
    %s93 = sadd.s32 %s92, 1
    %s94 = scalar_select %p91, %s92, %s93
    %p97 = pneg %p91
    %p98 = scmp.eq.s32.totalorder %s19, 1
    %p99 = por %p97, %p98
    %p100 = scmp.ne.s32.totalorder %s92, %s95
    %p101 = scmp.eq.s32.totalorder %s19, 0
    %p102 = por %p100, %p101
    %p103 = scmp.ne.s32.totalorder %s92, %s95
    %p104 = scmp.eq.s32.totalorder %s24, 1
    %p105 = por %p103, %p104
    %p106 = scmp.ne.s32.totalorder %s95, %s96
    %p107 = scmp.eq.s32.totalorder %s24, 0
    %p108 = por %p106, %p107
    %p109 = scmp.ne.s32.totalorder %s95, %s96
    %p110 = scmp.eq.s32.totalorder %s25, 1
    %p111 = por %p109, %p110
    %p113 = scmp.ne.s32.totalorder %s96, %s112
    %p114 = scmp.eq.s32.totalorder %s25, 0
    %p115 = por %p113, %p114
    %s116 = ssub.s32 %s19, %s26
    %p117 = scmp.eq.s32.totalorder %s116, 0
    %s119 = sadd.s32 %s118, 1
    %s120 = scalar_select %p117, %s118, %s119
    %p123 = pneg %p117
    %p124 = scmp.eq.s32.totalorder %s19, 1
    %p125 = por %p123, %p124
    %p126 = scmp.ne.s32.totalorder %s118, %s121
    %p127 = scmp.eq.s32.totalorder %s19, 0
    %p128 = por %p126, %p127
    %p129 = scmp.ne.s32.totalorder %s118, %s121
    %p130 = scmp.eq.s32.totalorder %s24, 1
    %p131 = por %p129, %p130
    %p132 = scmp.ne.s32.totalorder %s121, %s122
    %p133 = scmp.eq.s32.totalorder %s24, 0
    %p134 = por %p132, %p133
    %p135 = scmp.ne.s32.totalorder %s121, %s122
    %p136 = scmp.eq.s32.totalorder %s25, 1
    %p137 = por %p135, %p136
    %p139 = scmp.ne.s32.totalorder %s122, %s138
    %p140 = scmp.eq.s32.totalorder %s25, 0
    %p141 = por %p139, %p140
    %s142 = ssub.s32 %s19, %s26
    %p143 = scmp.eq.s32.totalorder %s142, 0
    %s145 = sadd.s32 %s144, 1
    %s146 = scalar_select %p143, %s144, %s145
    %p149 = pneg %p143
    %p150 = scmp.eq.s32.totalorder %s19, 1
    %p151 = por %p149, %p150
    %p152 = scmp.ne.s32.totalorder %s144, %s147
    %p153 = scmp.eq.s32.totalorder %s19, 0
    %p154 = por %p152, %p153
    %p155 = scmp.ne.s32.totalorder %s144, %s147
    %p156 = scmp.eq.s32.totalorder %s24, 1
    %p157 = por %p155, %p156
    %p158 = scmp.ne.s32.totalorder %s147, %s148
    %p159 = scmp.eq.s32.totalorder %s24, 0
    %p160 = por %p158, %p159
    %p161 = scmp.ne.s32.totalorder %s147, %s148
    %p162 = scmp.eq.s32.totalorder %s25, 1
    %p163 = por %p161, %p162
    %p165 = scmp.ne.s32.totalorder %s148, %s164
    %p166 = scmp.eq.s32.totalorder %s25, 0
    %p167 = por %p165, %p166
    %s168 = ssub.s32 %s19, %s26
    %p169 = scmp.eq.s32.totalorder %s168, 0
    %s171 = sadd.s32 %s170, 1
    %s172 = scalar_select %p169, %s170, %s171
    %p175 = pneg %p169
    %p176 = scmp.eq.s32.totalorder %s19, 1
    %p177 = por %p175, %p176
    %p178 = scmp.ne.s32.totalorder %s170, %s173
    %p179 = scmp.eq.s32.totalorder %s19, 0
    %p180 = por %p178, %p179
    %p181 = scmp.ne.s32.totalorder %s170, %s173
    %p182 = scmp.eq.s32.totalorder %s24, 1
    %p183 = por %p181, %p182
    %p184 = scmp.ne.s32.totalorder %s173, %s174
    %p185 = scmp.eq.s32.totalorder %s24, 0
    %p186 = por %p184, %p185
    %p187 = scmp.ne.s32.totalorder %s173, %s174
    %p188 = scmp.eq.s32.totalorder %s25, 1
    %p189 = por %p187, %p188
    %p191 = scmp.ne.s32.totalorder %s174, %s190
    %p192 = scmp.eq.s32.totalorder %s25, 0
    %p193 = por %p191, %p192
    %s194 = ssub.s32 %s19, %s26
    %p195 = scmp.eq.s32.totalorder %s194, 0
    %s197 = sadd.s32 %s196, 1
    %s198 = scalar_select %p195, %s196, %s197
    %p201 = pneg %p195
    %p202 = scmp.eq.s32.totalorder %s19, 1
    %p203 = por %p201, %p202
    %p204 = scmp.ne.s32.totalorder %s196, %s199
    %p205 = scmp.eq.s32.totalorder %s19, 0
    %p206 = por %p204, %p205
    %p207 = scmp.ne.s32.totalorder %s196, %s199
    %p208 = scmp.eq.s32.totalorder %s24, 1
    %p209 = por %p207, %p208
    %p210 = scmp.ne.s32.totalorder %s199, %s200
    %p211 = scmp.eq.s32.totalorder %s24, 0
    %p212 = por %p210, %p211
    %p213 = scmp.ne.s32.totalorder %s199, %s200
    %p214 = scmp.eq.s32.totalorder %s25, 1
    %p215 = por %p213, %p214
    %p217 = scmp.ne.s32.totalorder %s200, %s216
    %p218 = scmp.eq.s32.totalorder %s25, 0
    %p219 = por %p217, %p218
    %s220 = ssub.s32 %s19, %s26
    %p221 = scmp.eq.s32.totalorder %s220, 0
    %s223 = sadd.s32 %s222, 1
    %s224 = scalar_select %p221, %s222, %s223
    %p227 = pneg %p221
    %p228 = scmp.eq.s32.totalorder %s19, 1
    %p229 = por %p227, %p228
    %p230 = scmp.ne.s32.totalorder %s222, %s225
    %p231 = scmp.eq.s32.totalorder %s19, 0
    %p232 = por %p230, %p231
    %p233 = scmp.ne.s32.totalorder %s222, %s225
    %p234 = scmp.eq.s32.totalorder %s24, 1
    %p235 = por %p233, %p234
    %p236 = scmp.ne.s32.totalorder %s225, %s226
    %p237 = scmp.eq.s32.totalorder %s24, 0
    %p238 = por %p236, %p237
    %p239 = scmp.ne.s32.totalorder %s225, %s226
    %p240 = scmp.eq.s32.totalorder %s25, 1
    %p241 = por %p239, %p240
    %p243 = scmp.ne.s32.totalorder %s226, %s242
    %p244 = scmp.eq.s32.totalorder %s25, 0
    %p245 = por %p243, %p244
    %s247 = sadd.s32 %s246, 1
    %p250 = scmp.eq.s32.totalorder %s19, 1
    %p251 = scmp.ne.s32.totalorder %s246, %s248
    %p252 = scmp.eq.s32.totalorder %s19, 0
    %p253 = por %p251, %p252
    %p254 = scmp.ne.s32.totalorder %s246, %s248
    %p255 = scmp.eq.s32.totalorder %s24, 1
    %p256 = por %p254, %p255
    %p257 = scmp.ne.s32.totalorder %s248, %s249
    %p258 = scmp.eq.s32.totalorder %s24, 0
    %p259 = por %p257, %p258
    %p260 = scmp.ne.s32.totalorder %s248, %s249
    %p261 = scmp.eq.s32.totalorder %s25, 1
    %p262 = por %p260, %p261
    %p264 = scmp.ne.s32.totalorder %s249, %s263
    %p265 = scmp.eq.s32.totalorder %s25, 0
    %p266 = por %p264, %p265
    %s268 = sadd.s32 %s267, 1
    %p271 = scmp.eq.s32.totalorder %s19, 1
    %p272 = scmp.ne.s32.totalorder %s267, %s269
    %p273 = scmp.eq.s32.totalorder %s19, 0
    %p274 = por %p272, %p273
    %p275 = scmp.ne.s32.totalorder %s267, %s269
    %p276 = scmp.eq.s32.totalorder %s24, 1
    %p277 = por %p275, %p276
    %p278 = scmp.ne.s32.totalorder %s269, %s270
    %p279 = scmp.eq.s32.totalorder %s24, 0
    %p280 = por %p278, %p279
    %p281 = scmp.ne.s32.totalorder %s269, %s270
    %p282 = scmp.eq.s32.totalorder %s25, 1
    %p283 = por %p281, %p282
    %p285 = scmp.ne.s32.totalorder %s270, %s284
    %p286 = scmp.eq.s32.totalorder %s25, 0
    %p287 = por %p285, %p286
    %s289 = sadd.s32 %s288, 1
    %p292 = scmp.eq.s32.totalorder %s19, 1
    %p293 = scmp.ne.s32.totalorder %s288, %s290
    %p294 = scmp.eq.s32.totalorder %s19, 0
    %p295 = por %p293, %p294
    %p296 = scmp.ne.s32.totalorder %s288, %s290
    %p297 = scmp.eq.s32.totalorder %s24, 1
    %p298 = por %p296, %p297
    %p299 = scmp.ne.s32.totalorder %s290, %s291
    %p300 = scmp.eq.s32.totalorder %s24, 0
    %p301 = por %p299, %p300
    %p302 = scmp.ne.s32.totalorder %s290, %s291
    %p303 = scmp.eq.s32.totalorder %s25, 1
    %p304 = por %p302, %p303
    %p306 = scmp.ne.s32.totalorder %s291, %s305
    %p307 = scmp.eq.s32.totalorder %s25, 0
    %p308 = por %p306, %p307
    %p309 = scmp.le.s32.totalorder 1, %s19
    %p310 = scmp.lt.s32.totalorder %s19, 3
    %p311 = pnand %p309, %p310
    %p312 = pneg %p311
    // Predicated region
    $region9: #{tpu_custom_call.1} parent=5 // pred_check
      _
    $region10: #{tpu_custom_call.1} parent=5 // pred_check_branch
      %314 = sbr.rel (%p311) target = $region12
    $region11: #{tpu_custom_call.1} parent=5 // pred_region
      %s315 = ssub.s32 %s19, 1
      // Predicated region
      $region13: #{tpu_custom_call.1} parent=11 // pred_check
        %p316 = pneg %p40
      $region14: #{tpu_custom_call.1} parent=11 // pred_check_branch
        %318 = sbr.rel (%p316) target = $region16
      $region15: #{tpu_custom_call.1} parent=11 // pred_region
        _
      $region16: #{tpu_custom_call.1} parent=11 // pred_fallthru
        _
      // Predicated region
      $region17: #{tpu_custom_call.1} parent=11 // pred_check
        %p319 = pneg %p61
      $region18: #{tpu_custom_call.1} parent=11 // pred_check_branch
        %321 = sbr.rel (%p319) target = $region20
      $region19: #{tpu_custom_call.1} parent=11 // pred_region
        _
      $region20: #{tpu_custom_call.1} parent=11 // pred_fallthru
        _
      // Predicated region
      $region21: #{tpu_custom_call.1} parent=11 // pred_check
        %p322 = pneg %p82
      $region22: #{tpu_custom_call.1} parent=11 // pred_check_branch
        %324 = sbr.rel (%p322) target = $region24
      $region23: #{tpu_custom_call.1} parent=11 // pred_region
        _
      $region24: #{tpu_custom_call.1} parent=11 // pred_fallthru
        _
      // Predicated region
      $region25: #{tpu_custom_call.1} parent=11 // pred_check
        %p325 = pneg %p259
      $region26: #{tpu_custom_call.1} parent=11 // pred_check_branch
        %327 = sbr.rel (%p325) target = $region28
      $region27: #{tpu_custom_call.1} parent=11 // pred_region
        _
      $region28: #{tpu_custom_call.1} parent=11 // pred_fallthru
        _
      // Predicated region
      $region29: #{tpu_custom_call.1} parent=11 // pred_check
        %p328 = pneg %p280
      $region30: #{tpu_custom_call.1} parent=11 // pred_check_branch
        %330 = sbr.rel (%p328) target = $region32
      $region31: #{tpu_custom_call.1} parent=11 // pred_region
        _
      $region32: #{tpu_custom_call.1} parent=11 // pred_fallthru
        _
    $region12: #{tpu_custom_call.1} parent=5 // pred_fallthru
      _
    %p331 = scmp.lt.s32.totalorder %s19, 2
    // Predicated region
    $region33: #{tpu_custom_call.1} parent=5 // pred_check
      %p332 = pneg %p331
    $region34: #{tpu_custom_call.1} parent=5 // pred_check_branch
      %334 = sbr.rel (%p332) target = $region36
    $region35: #{tpu_custom_call.1} parent=5 // pred_region
      // Predicated region
      $region37: #{tpu_custom_call.1} parent=35 // pred_check
        %p335 = pneg %p102
      $region38: #{tpu_custom_call.1} parent=35 // pred_check_branch
        %337 = sbr.rel (%p335) target = $region40
      $region39: #{tpu_custom_call.1} parent=35 // pred_region
        %p338 = scmp.lt.s32.totalorder %s19, 1
        %s339 = scalar_select %p338, %s19, 1
        %s340 = scalar_lea.vmem %s3, %s339
      $region40: #{tpu_custom_call.1} parent=35 // pred_fallthru
        _
      // Predicated region
      $region41: #{tpu_custom_call.1} parent=35 // pred_check
        %p341 = pneg %p128
      $region42: #{tpu_custom_call.1} parent=35 // pred_check_branch
        %343 = sbr.rel (%p341) target = $region44
      $region43: #{tpu_custom_call.1} parent=35 // pred_region
        %p344 = scmp.lt.s32.totalorder %s19, 1
        %s345 = scalar_select %p344, %s19, 1
        %s346 = scalar_lea.vmem %s4, %s345
      $region44: #{tpu_custom_call.1} parent=35 // pred_fallthru
        _
      // Predicated region
      $region45: #{tpu_custom_call.1} parent=35 // pred_check
        %p347 = pneg %p154
      $region46: #{tpu_custom_call.1} parent=35 // pred_check_branch
        %349 = sbr.rel (%p347) target = $region48
      $region47: #{tpu_custom_call.1} parent=35 // pred_region
        %p350 = scmp.lt.s32.totalorder %s19, 1
        %s351 = scalar_select %p350, %s19, 1
        %s352 = smul.addr %s351, 12
        %s353 = smul.addr %s352, 4
        %s354 = scalar_lea.vmem %s5, %s353
      $region48: #{tpu_custom_call.1} parent=35 // pred_fallthru
        _
      // Predicated region
      $region49: #{tpu_custom_call.1} parent=35 // pred_check
        %p355 = pneg %p180
      $region50: #{tpu_custom_call.1} parent=35 // pred_check_branch
        %357 = sbr.rel (%p355) target = $region52
      $region51: #{tpu_custom_call.1} parent=35 // pred_region
        %p358 = scmp.lt.s32.totalorder %s19, 1
        %s359 = scalar_select %p358, %s19, 1
        %s360 = scalar_lea.vmem %s6, %s359
      $region52: #{tpu_custom_call.1} parent=35 // pred_fallthru
        _
      // Predicated region
      $region53: #{tpu_custom_call.1} parent=35 // pred_check
        %p361 = pneg %p206
      $region54: #{tpu_custom_call.1} parent=35 // pred_check_branch
        %363 = sbr.rel (%p361) target = $region56
      $region55: #{tpu_custom_call.1} parent=35 // pred_region
        %p364 = scmp.lt.s32.totalorder %s19, 1
        %s365 = scalar_select %p364, %s19, 1
        %s366 = smul.addr %s365, 12
        %s367 = smul.addr %s366, 4
        %s368 = scalar_lea.vmem %s7, %s367
      $region56: #{tpu_custom_call.1} parent=35 // pred_fallthru
        _
      // Predicated region
      $region57: #{tpu_custom_call.1} parent=35 // pred_check
        %p369 = pneg %p232
      $region58: #{tpu_custom_call.1} parent=35 // pred_check_branch
        %371 = sbr.rel (%p369) target = $region60
      $region59: #{tpu_custom_call.1} parent=35 // pred_region
        %p372 = scmp.lt.s32.totalorder %s19, 1
        %s373 = scalar_select %p372, %s19, 1
        %s374 = scalar_lea.vmem %s8, %s373
      $region60: #{tpu_custom_call.1} parent=35 // pred_fallthru
        _
    $region36: #{tpu_custom_call.1} parent=5 // pred_fallthru
      _
    %p375 = scmp.le.s32.totalorder 1, %s19
    %p376 = scmp.lt.s32.totalorder %s19, 3
    %p377 = pnand %p375, %p376
    %p378 = pneg %p377
    // Predicated region
    $region61: #{tpu_custom_call.1} parent=5 // pred_check
      _
    $region62: #{tpu_custom_call.1} parent=5 // pred_check_branch
      %380 = sbr.rel (%p377) target = $region64
    $region63: #{tpu_custom_call.1} parent=5 // pred_region
      %s381 = ssub.s32 %s19, 1
      %p382 = pneg %p40
      %p383 = pneg %p37
      %p384 = pneg %p61
      %p385 = pneg %p58
      %p386 = pneg %p82
      %p387 = pneg %p79
      %p388 = scmp.lt.s32.totalorder %s24, 1
      %s389 = scalar_select %p388, %s24, 1
      %s390 = scalar_lea.vmem %s3, %s389
      %p391 = pneg %p108
      %p392 = pneg %p105
      %p393 = scmp.lt.s32.totalorder %s24, 1
      %s394 = scalar_select %p393, %s24, 1
      %s395 = scalar_lea.vmem %s4, %s394
      %p396 = pneg %p134
      %p397 = pneg %p131
      %p398 = scmp.lt.s32.totalorder %s24, 1
      %s399 = scalar_select %p398, %s24, 1
      %s400 = smul.addr %s399, 12
      %s401 = smul.addr %s400, 4
      %s402 = scalar_lea.vmem %s5, %s401
      %p403 = pneg %p160
      %p404 = pneg %p157
      %p405 = scmp.lt.s32.totalorder %s24, 1
      %s406 = scalar_select %p405, %s24, 1
      %s407 = scalar_lea.vmem %s6, %s406
      %p408 = pneg %p186
      %p409 = pneg %p183
      %p410 = scmp.lt.s32.totalorder %s24, 1
      %s411 = scalar_select %p410, %s24, 1
      %s412 = smul.addr %s411, 12
      %s413 = smul.addr %s412, 4
      %s414 = scalar_lea.vmem %s7, %s413
      %p415 = pneg %p212
      %p416 = pneg %p209
      %p417 = scmp.lt.s32.totalorder %s24, 1
      %s418 = scalar_select %p417, %s24, 1
      %s419 = scalar_lea.vmem %s8, %s418
      %p420 = pneg %p238
      %p421 = pneg %p235
      %p422 = pneg %p259
      %p423 = pneg %p256
      %p424 = pneg %p280
      %p425 = pneg %p277
      %p426 = pneg %p301
      %p427 = pneg %p298
      %p428 = scmp.lt.s32.totalorder %s24, 1
      %s429 = scalar_select %p428, %s24, 1
      %s430 = scalar_lea.vmem %s3, %s429
      %p431 = scmp.lt.s32.totalorder %s24, 1
      %s432 = scalar_select %p431, %s24, 1
      %s433 = scalar_lea.vmem %s4, %s432
      %p434 = scmp.lt.s32.totalorder %s24, 1
      %s435 = scalar_select %p434, %s24, 1
      %s436 = smul.addr %s435, 12
      %s437 = smul.addr %s436, 4
      %s438 = scalar_lea.vmem %s5, %s437
      %p439 = scmp.lt.s32.totalorder %s24, 1
      %s440 = scalar_select %p439, %s24, 1
      %s441 = scalar_lea.vmem %s6, %s440
      %p442 = scmp.lt.s32.totalorder %s24, 1
      %s443 = scalar_select %p442, %s24, 1
      %s444 = smul.addr %s443, 12
      %s445 = smul.addr %s444, 4
      %s446 = scalar_lea.vmem %s7, %s445
      %p447 = scmp.lt.s32.totalorder %s24, 1
      %s448 = scalar_select %p447, %s24, 1
      %s449 = scalar_lea.vmem %s8, %s448
      %p451 = scmp.eq.s32.totalorder %s24, 0
      // Predicated region
      $region65: #{tpu_custom_call.1} parent=63 // pred_check
        %p452 = pneg %p451
      $region66: #{tpu_custom_call.1} parent=63 // pred_check_branch
        %454 = sbr.rel (%p452) target = $region68
      $region67: #{tpu_custom_call.1} parent=63 // pred_region
        %v455 = vld [vmem:[%s0] sm:$0xff]
        %v456 = vld [vmem:[%s0 + $0x8] sm:$0xff]
        %v457 = vld [vmem:[%s0 + $0x10] sm:$0xff]
        %v458 = vld [vmem:[%s0 + $0x18] sm:$0xff]
        %v459 = vld [vmem:[%s0 + $0x20] sm:$0xff]
        %v460 = vld [vmem:[%s0 + $0x28] sm:$0xff]
        %v461 = vld [vmem:[%s0 + $0x30] sm:$0xff]
        %v462 = vld [vmem:[%s0 + $0x38] sm:$0xff]
        %v463 = vld [vmem:[%s0 + $0x40] sm:$0xff]
        %v464 = vld [vmem:[%s0 + $0x48] sm:$0xff]
        %v465 = vld [vmem:[%s0 + $0x50] sm:$0xff]
        %v466 = vld [vmem:[%s0 + $0x58] sm:$0xff]
        %v467 = vld [vmem:[%s0 + $0x60] sm:$0xff]
        %v468 = vld [vmem:[%s0 + $0x68] sm:$0xff]
        %v469 = vld [vmem:[%s0 + $0x70] sm:$0xff]
        %v470 = vld [vmem:[%s0 + $0x78] sm:$0xff]
        %v471 = vld [vmem:[%s1] sm:$0x7]
        %v472 = vld [vmem:[%s2] sm:$0x1]
        %v474 = vlaneseq
        %v475 = vshrl.u32 %v474, 7
        %v476 = vsub.s32 0, %v475
        %v477 = vrot.slane %v472, %v476
        %vm479 = vcmask 23552
        %v481 = vsel %vm479, %v455, 0
        %v484 = vsel %vm479, %v456, 0
        %v487 = vsel %vm479, %v457, 0
        %v490 = vsel %vm479, %v458, 0
        %v493 = vsel %vm479, %v459, 0
        %v496 = vsel %vm479, %v460, 0
        %v499 = vsel %vm479, %v461, 0
        %v502 = vsel %vm479, %v462, 0
        %v505 = vsel %vm479, %v463, 0
        %v508 = vsel %vm479, %v464, 0
        %v511 = vsel %vm479, %v465, 0
        %v514 = vsel %vm479, %v466, 0
        %v517 = vsel %vm479, %v467, 0
        %v520 = vsel %vm479, %v468, 0
        %v523 = vsel %vm479, %v469, 0
        %v526 = vsel %vm479, %v470, 0
        %vm528 = vcmask 1042432
        %v530 = vsel %vm528, %v471, 0
        %532 = vmatprep.subr.mxu0 0.0
        %533 = vmatpush1.msra.mxu0 %v530
        %534 = vmatprep.subr.mxu0 0.0
        %535 = vmatpush1.msra.mxu0 0.0
        %536 = vmatprep.subr.mxu0 0.0
        %537 = vmatpush1.msra.mxu0 0.0
        %538 = vmatprep.subr.mxu0 0.0
        %539 = vmatpush1.msra.mxu0 0.0
        %540 = vmatprep.subr.mxu0 0.0
        %541 = vmatpush1.msra.mxu0 0.0
        %542 = vmatprep.subr.mxu0 0.0
        %543 = vmatpush1.msra.mxu0 0.0
        %544 = vmatprep.subr.mxu0 0.0
        %545 = vmatpush1.msra.mxu0 0.0
        %546 = vmatprep.subr.mxu0 0.0
        %547 = vmatpush1.msra.mxu0 0.0
        %548 = vmatprep.subr.mxu0 0.0
        %549 = vmatpush1.msra.mxu0 0.0
        %550 = vmatprep.subr.mxu0 0.0
        %551 = vmatpush1.msra.mxu0 0.0
        %552 = vmatprep.subr.mxu0 0.0
        %553 = vmatpush1.msra.mxu0 0.0
        %554 = vmatprep.subr.mxu0 0.0
        %555 = vmatpush1.msra.mxu0 0.0
        %556 = vmatprep.subr.mxu0 0.0
        %557 = vmatpush1.msra.mxu0 0.0
        %558 = vmatprep.subr.mxu0 0.0
        %559 = vmatpush1.msra.mxu0 0.0
        %560 = vmatprep.subr.mxu0 0.0
        %561 = vmatpush1.msra.mxu0 0.0
        %562 = vmatprep.subr.mxu0 0.0
        %563 = vmatpush1.msra.mxu0 0.0
        %564 = vmatprep.subr.mxu0 0.0
        %565 = vmatpush1.msra.mxu0 0.0
        %566 = vmatprep.subr.mxu0 0.0
        %567 = vmatpush1.msra.mxu0 0.0
        %568 = vmatprep.subr.mxu0 0.0
        %569 = vmatpush1.msra.mxu0 0.0
        %570 = vmatprep.subr.mxu0 0.0
        %571 = vmatpush1.msra.mxu0 0.0
        %572 = vmatprep.subr.mxu0 0.0
        %573 = vmatpush1.msra.mxu0 0.0
        %574 = vmatprep.subr.mxu0 0.0
        %575 = vmatpush1.msra.mxu0 0.0
        %576 = vmatprep.subr.mxu0 0.0
        %577 = vmatpush1.msra.mxu0 0.0
        %578 = vmatprep.subr.mxu0 0.0
        %579 = vmatpush1.msra.mxu0 0.0
        %580 = vmatprep.subr.mxu0 0.0
        %581 = vmatpush1.msra.mxu0 0.0
        %582 = vmatprep.subr.mxu0 0.0
        %583 = vmatpush1.msra.mxu0 0.0
        %584 = vmatprep.subr.mxu0 0.0
        %585 = vmatpush1.msra.mxu0 0.0
        %586 = vmatprep.subr.mxu0 0.0
        %587 = vmatpush1.msra.mxu0 0.0
        %588 = vmatprep.subr.mxu0 0.0
        %589 = vmatpush1.msra.mxu0 0.0
        %590 = vmatprep.subr.mxu0 0.0
        %591 = vmatpush1.msra.mxu0 0.0
        %592 = vmatprep.subr.mxu0 0.0
        %593 = vmatpush1.msra.mxu0 0.0
        %594 = vmatprep.subr.mxu0 0.0
        %595 = vmatpush1.msra.mxu0 0.0
        %596 = vmatprep.mubr.f32.mxu0 0.0
        %597 = vmatmul.mubr.f32.gmra.mrb[0].mxu0 %v481
        %v598 = vpop.f32.mrb[0].mxu0
        %v599 = vadd.f32 %v477, %v598
        %v600 = vpop.f32.mrb[0].mxu0
        %601 = vmatprep.mubr.f32.mxu0 0.0
        %602 = vmatmul.mubr.f32.gmra.mrb[0].mxu0 %v484
        %v603 = vpop.f32.mrb[0].mxu0
        %v604 = vadd.f32 %v477, %v603
        %v605 = vpop.f32.mrb[0].mxu0
        %606 = vmatprep.mubr.f32.mxu0 0.0
        %607 = vmatmul.mubr.f32.gmra.mrb[0].mxu0 %v487
        %v608 = vpop.f32.mrb[0].mxu0
        %v609 = vadd.f32 %v477, %v608
        %v610 = vpop.f32.mrb[0].mxu0
        %611 = vmatprep.mubr.f32.mxu0 0.0
        %612 = vmatmul.mubr.f32.gmra.mrb[0].mxu0 %v490
        %v613 = vpop.f32.mrb[0].mxu0
        %v614 = vadd.f32 %v477, %v613
        %v615 = vpop.f32.mrb[0].mxu0
        %616 = vmatprep.mubr.f32.mxu0 0.0
        %617 = vmatmul.mubr.f32.gmra.mrb[0].mxu0 %v493
        %v618 = vpop.f32.mrb[0].mxu0
        %v619 = vadd.f32 %v477, %v618
        %v620 = vpop.f32.mrb[0].mxu0
        %621 = vmatprep.mubr.f32.mxu0 0.0
        %622 = vmatmul.mubr.f32.gmra.mrb[0].mxu0 %v496
        %v623 = vpop.f32.mrb[0].mxu0
        %v624 = vadd.f32 %v477, %v623
        %v625 = vpop.f32.mrb[0].mxu0
        %626 = vmatprep.mubr.f32.mxu0 0.0
        %627 = vmatmul.mubr.f32.gmra.mrb[0].mxu0 %v499
        %v628 = vpop.f32.mrb[0].mxu0
        %v629 = vadd.f32 %v477, %v628
        %v630 = vpop.f32.mrb[0].mxu0
        %631 = vmatprep.mubr.f32.mxu0 0.0
        %632 = vmatmul.mubr.f32.gmra.mrb[0].mxu0 %v502
        %v633 = vpop.f32.mrb[0].mxu0
        %v634 = vadd.f32 %v477, %v633
        %v635 = vpop.f32.mrb[0].mxu0
        %636 = vmatprep.mubr.f32.mxu0 0.0
        %637 = vmatmul.mubr.f32.gmra.mrb[0].mxu0 %v505
        %v638 = vpop.f32.mrb[0].mxu0
        %v639 = vadd.f32 %v477, %v638
        %v640 = vpop.f32.mrb[0].mxu0
        %641 = vmatprep.mubr.f32.mxu0 0.0
        %642 = vmatmul.mubr.f32.gmra.mrb[0].mxu0 %v508
        %v643 = vpop.f32.mrb[0].mxu0
        %v644 = vadd.f32 %v477, %v643
        %v645 = vpop.f32.mrb[0].mxu0
        %646 = vmatprep.mubr.f32.mxu0 0.0
        %647 = vmatmul.mubr.f32.gmra.mrb[0].mxu0 %v511
        %v648 = vpop.f32.mrb[0].mxu0
        %v649 = vadd.f32 %v477, %v648
        %v650 = vpop.f32.mrb[0].mxu0
        %651 = vmatprep.mubr.f32.mxu0 0.0
        %652 = vmatmul.mubr.f32.gmra.mrb[0].mxu0 %v514
        %v653 = vpop.f32.mrb[0].mxu0
        %v654 = vadd.f32 %v477, %v653
        %v655 = vpop.f32.mrb[0].mxu0
        %656 = vmatprep.mubr.f32.mxu0 0.0
        %657 = vmatmul.mubr.f32.gmra.mrb[0].mxu0 %v517
        %v658 = vpop.f32.mrb[0].mxu0
        %v659 = vadd.f32 %v477, %v658
        %v660 = vpop.f32.mrb[0].mxu0
        %661 = vmatprep.mubr.f32.mxu0 0.0
        %662 = vmatmul.mubr.f32.gmra.mrb[0].mxu0 %v520
        %v663 = vpop.f32.mrb[0].mxu0
        %v664 = vadd.f32 %v477, %v663
        %v665 = vpop.f32.mrb[0].mxu0
        %666 = vmatprep.mubr.f32.mxu0 0.0
        %667 = vmatmul.mubr.f32.gmra.mrb[0].mxu0 %v523
        %v668 = vpop.f32.mrb[0].mxu0
        %v669 = vadd.f32 %v477, %v668
        %v670 = vpop.f32.mrb[0].mxu0
        %671 = vmatprep.mubr.f32.mxu0 0.0
        %672 = vmatmul.mubr.f32.gmra.mrb[0].mxu0 %v526
        %v673 = vpop.f32.mrb[0].mxu0
        %v674 = vadd.f32 %v477, %v673
        %v675 = vpop.f32.mrb[0].mxu0
        %676 = vdwg.mxu0
        %vm677 = vcmask 261120
        %678 = vst.msk [vmem:[#allocation2] sm:$0xff] %vm677, %v599
        %679 = vst.msk [vmem:[#allocation2 + $0x8] sm:$0xff] %vm677, %v604
        %680 = vst.msk [vmem:[#allocation2 + $0x10] sm:$0xff] %vm677, %v609
        %681 = vst.msk [vmem:[#allocation2 + $0x18] sm:$0xff] %vm677, %v614
        %682 = vst.msk [vmem:[#allocation2 + $0x20] sm:$0xff] %vm677, %v619
        %683 = vst.msk [vmem:[#allocation2 + $0x28] sm:$0xff] %vm677, %v624
        %684 = vst.msk [vmem:[#allocation2 + $0x30] sm:$0xff] %vm677, %v629
        %685 = vst.msk [vmem:[#allocation2 + $0x38] sm:$0xff] %vm677, %v634
        %686 = vst.msk [vmem:[#allocation2 + $0x40] sm:$0xff] %vm677, %v639
        %687 = vst.msk [vmem:[#allocation2 + $0x48] sm:$0xff] %vm677, %v644
        %688 = vst.msk [vmem:[#allocation2 + $0x50] sm:$0xff] %vm677, %v649
        %689 = vst.msk [vmem:[#allocation2 + $0x58] sm:$0xff] %vm677, %v654
        %690 = vst.msk [vmem:[#allocation2 + $0x60] sm:$0xff] %vm677, %v659
        %691 = vst.msk [vmem:[#allocation2 + $0x68] sm:$0xff] %vm677, %v664
        %692 = vst.msk [vmem:[#allocation2 + $0x70] sm:$0xff] %vm677, %v669
        %693 = vst.msk [vmem:[#allocation2 + $0x78] sm:$0xff] %vm677, %v674
      $region68: #{tpu_custom_call.1} parent=63 // pred_fallthru
        _
      %v694 = vlaneseq
      %v695 = vshrl.u32 %v694, 7
      %v696 = vadd.s32 %v695, 8
      %v697 = vadd.s32 %v695, 16
      %v698 = vadd.s32 %v695, 24
      %v699 = vadd.s32 %v695, 32
      %v700 = vadd.s32 %v695, 40
      %v701 = vadd.s32 %v695, 48
      %v702 = vadd.s32 %v695, 56
      %v703 = vadd.s32 %v695, 64
      %v704 = vadd.s32 %v695, 72
      %v705 = vadd.s32 %v695, 80
      %v706 = vadd.s32 %v695, 88
      %v707 = vadd.s32 %v695, 96
      %v708 = vadd.s32 %v695, 104
      %v709 = vadd.s32 %v695, 112
      %v710 = vadd.s32 %v695, 120
      %vm711 = vcmp.lt.s32.totalorder %v695, 0
      %v712 = vsub.s32 0, %v695
      %v713 = vsel %vm711, %v712, %v695
      %v714 = vshrl.u32 %v713, 4
      %v715 = vand.u32 %v713, 15
      %v716 = vsub.s32 0, %v715
      %v717 = vsel %vm711, %v716, %v715
      %vm718 = vcmp.lt.s32.totalorder %v696, 0
      %v719 = vsub.s32 0, %v696
      %v720 = vsel %vm718, %v719, %v696
      %v721 = vshrl.u32 %v720, 4
      %v722 = vand.u32 %v720, 15
      %v723 = vsub.s32 0, %v722
      %v724 = vsel %vm718, %v723, %v722
      %vm725 = vcmp.lt.s32.totalorder %v697, 0
      %v726 = vsub.s32 0, %v697
      %v727 = vsel %vm725, %v726, %v697
      %v728 = vshrl.u32 %v727, 4
      %v729 = vand.u32 %v727, 15
      %v730 = vsub.s32 0, %v729
      %v731 = vsel %vm725, %v730, %v729
      %vm732 = vcmp.lt.s32.totalorder %v698, 0
      %v733 = vsub.s32 0, %v698
      %v734 = vsel %vm732, %v733, %v698
      %v735 = vshrl.u32 %v734, 4
      %v736 = vand.u32 %v734, 15
      %v737 = vsub.s32 0, %v736
      %v738 = vsel %vm732, %v737, %v736
      %vm739 = vcmp.lt.s32.totalorder %v699, 0
      %v740 = vsub.s32 0, %v699
      %v741 = vsel %vm739, %v740, %v699
      %v742 = vshrl.u32 %v741, 4
      %v743 = vand.u32 %v741, 15
      %v744 = vsub.s32 0, %v743
      %v745 = vsel %vm739, %v744, %v743
      %vm746 = vcmp.lt.s32.totalorder %v700, 0
      %v747 = vsub.s32 0, %v700
      %v748 = vsel %vm746, %v747, %v700
      %v749 = vshrl.u32 %v748, 4
      %v750 = vand.u32 %v748, 15
      %v751 = vsub.s32 0, %v750
      %v752 = vsel %vm746, %v751, %v750
      %vm753 = vcmp.lt.s32.totalorder %v701, 0
      %v754 = vsub.s32 0, %v701
      %v755 = vsel %vm753, %v754, %v701
      %v756 = vshrl.u32 %v755, 4
      %v757 = vand.u32 %v755, 15
      %v758 = vsub.s32 0, %v757
      %v759 = vsel %vm753, %v758, %v757
      %vm760 = vcmp.lt.s32.totalorder %v702, 0
      %v761 = vsub.s32 0, %v702
      %v762 = vsel %vm760, %v761, %v702
      %v763 = vshrl.u32 %v762, 4
      %v764 = vand.u32 %v762, 15
      %v765 = vsub.s32 0, %v764
      %v766 = vsel %vm760, %v765, %v764
      %vm767 = vcmp.lt.s32.totalorder %v703, 0
      %v768 = vsub.s32 0, %v703
      %v769 = vsel %vm767, %v768, %v703
      %v770 = vshrl.u32 %v769, 4
      %v771 = vand.u32 %v769, 15
      %v772 = vsub.s32 0, %v771
      %v773 = vsel %vm767, %v772, %v771
      %vm774 = vcmp.lt.s32.totalorder %v704, 0
      %v775 = vsub.s32 0, %v704
      %v776 = vsel %vm774, %v775, %v704
      %v777 = vshrl.u32 %v776, 4
      %v778 = vand.u32 %v776, 15
      %v779 = vsub.s32 0, %v778
      %v780 = vsel %vm774, %v779, %v778
      %vm781 = vcmp.lt.s32.totalorder %v705, 0
      %v782 = vsub.s32 0, %v705
      %v783 = vsel %vm781, %v782, %v705
      %v784 = vshrl.u32 %v783, 4
      %v785 = vand.u32 %v783, 15
      %v786 = vsub.s32 0, %v785
      %v787 = vsel %vm781, %v786, %v785
      %vm788 = vcmp.lt.s32.totalorder %v706, 0
      %v789 = vsub.s32 0, %v706
      %v790 = vsel %vm788, %v789, %v706
      %v791 = vshrl.u32 %v790, 4
      %v792 = vand.u32 %v790, 15
      %v793 = vsub.s32 0, %v792
      %v794 = vsel %vm788, %v793, %v792
      %vm795 = vcmp.lt.s32.totalorder %v707, 0
      %v796 = vsub.s32 0, %v707
      %v797 = vsel %vm795, %v796, %v707
      %v798 = vshrl.u32 %v797, 4
      %v799 = vand.u32 %v797, 15
      %v800 = vsub.s32 0, %v799
      %v801 = vsel %vm795, %v800, %v799
      %vm802 = vcmp.lt.s32.totalorder %v708, 0
      %v803 = vsub.s32 0, %v708
      %v804 = vsel %vm802, %v803, %v708
      %v805 = vshrl.u32 %v804, 4
      %v806 = vand.u32 %v804, 15
      %v807 = vsub.s32 0, %v806
      %v808 = vsel %vm802, %v807, %v806
      %vm809 = vcmp.lt.s32.totalorder %v709, 0
      %v810 = vsub.s32 0, %v709
      %v811 = vsel %vm809, %v810, %v709
      %v812 = vshrl.u32 %v811, 4
      %v813 = vand.u32 %v811, 15
      %v814 = vsub.s32 0, %v813
      %v815 = vsel %vm809, %v814, %v813
      %vm816 = vcmp.lt.s32.totalorder %v710, 0
      %v817 = vsub.s32 0, %v710
      %v818 = vsel %vm816, %v817, %v710
      %v819 = vshrl.u32 %v818, 4
      %v820 = vand.u32 %v818, 15
      %v821 = vsub.s32 0, %v820
      %v822 = vsel %vm816, %v821, %v820
      %vm823 = vcmp.ne.s32.totalorder %v717, 0
      %vm824 = vcmp.ne.s32.totalorder %v724, 0
      %vm825 = vcmp.ne.s32.totalorder %v731, 0
      %vm826 = vcmp.ne.s32.totalorder %v738, 0
      %vm827 = vcmp.ne.s32.totalorder %v745, 0
      %vm828 = vcmp.ne.s32.totalorder %v752, 0
      %vm829 = vcmp.ne.s32.totalorder %v759, 0
      %vm830 = vcmp.ne.s32.totalorder %v766, 0
      %vm831 = vcmp.ne.s32.totalorder %v773, 0
      %vm832 = vcmp.ne.s32.totalorder %v780, 0
      %vm833 = vcmp.ne.s32.totalorder %v787, 0
      %vm834 = vcmp.ne.s32.totalorder %v794, 0
      %vm835 = vcmp.ne.s32.totalorder %v801, 0
      %vm836 = vcmp.ne.s32.totalorder %v808, 0
      %vm837 = vcmp.ne.s32.totalorder %v815, 0
      %vm838 = vcmp.ne.s32.totalorder %v822, 0
      %vm839 = vcmp.lt.s32.totalorder %v717, 0
      %vm840 = vcmp.lt.s32.totalorder %v724, 0
      %vm841 = vcmp.lt.s32.totalorder %v731, 0
      %vm842 = vcmp.lt.s32.totalorder %v738, 0
      %vm843 = vcmp.lt.s32.totalorder %v745, 0
      %vm844 = vcmp.lt.s32.totalorder %v752, 0
      %vm845 = vcmp.lt.s32.totalorder %v759, 0
      %vm846 = vcmp.lt.s32.totalorder %v766, 0
      %vm847 = vcmp.lt.s32.totalorder %v773, 0
      %vm848 = vcmp.lt.s32.totalorder %v780, 0
      %vm849 = vcmp.lt.s32.totalorder %v787, 0
      %vm850 = vcmp.lt.s32.totalorder %v794, 0
      %vm851 = vcmp.lt.s32.totalorder %v801, 0
      %vm852 = vcmp.lt.s32.totalorder %v808, 0
      %vm853 = vcmp.lt.s32.totalorder %v815, 0
      %vm854 = vcmp.lt.s32.totalorder %v822, 0
      %vm855 = vmand %vm839, %vm823
      %vm856 = vmand %vm840, %vm824
      %vm857 = vmand %vm841, %vm825
      %vm858 = vmand %vm842, %vm826
      %vm859 = vmand %vm843, %vm827
      %vm860 = vmand %vm844, %vm828
      %vm861 = vmand %vm845, %vm829
      %vm862 = vmand %vm846, %vm830
      %vm863 = vmand %vm847, %vm831
      %vm864 = vmand %vm848, %vm832
      %vm865 = vmand %vm849, %vm833
      %vm866 = vmand %vm850, %vm834
      %vm867 = vmand %vm851, %vm835
      %vm868 = vmand %vm852, %vm836
      %vm869 = vmand %vm853, %vm837
      %vm870 = vmand %vm854, %vm838
      %v871 = vadd.s32 %v717, 16
      %v872 = vadd.s32 %v724, 16
      %v873 = vadd.s32 %v731, 16
      %v874 = vadd.s32 %v738, 16
      %v875 = vadd.s32 %v745, 16
      %v876 = vadd.s32 %v752, 16
      %v877 = vadd.s32 %v759, 16
      %v878 = vadd.s32 %v766, 16
      %v879 = vadd.s32 %v773, 16
      %v880 = vadd.s32 %v780, 16
      %v881 = vadd.s32 %v787, 16
      %v882 = vadd.s32 %v794, 16
      %v883 = vadd.s32 %v801, 16
      %v884 = vadd.s32 %v808, 16
      %v885 = vadd.s32 %v815, 16
      %v886 = vadd.s32 %v822, 16
      %v887 = vsel %vm855, %v871, %v717
      %v888 = vsel %vm856, %v872, %v724
      %v889 = vsel %vm857, %v873, %v731
      %v890 = vsel %vm858, %v874, %v738
      %v891 = vsel %vm859, %v875, %v745
      %v892 = vsel %vm860, %v876, %v752
      %v893 = vsel %vm861, %v877, %v759
      %v894 = vsel %vm862, %v878, %v766
      %v895 = vsel %vm863, %v879, %v773
      %v896 = vsel %vm864, %v880, %v780
      %v897 = vsel %vm865, %v881, %v787
      %v898 = vsel %vm866, %v882, %v794
      %v899 = vsel %vm867, %v883, %v801
      %v900 = vsel %vm868, %v884, %v808
      %v901 = vsel %vm869, %v885, %v815
      %v902 = vsel %vm870, %v886, %v822
      %vm903 = vcmp.ge.s32.totalorder %v887, 3
      %vm904 = vcmp.ge.s32.totalorder %v888, 3
      %vm905 = vcmp.ge.s32.totalorder %v889, 3
      %vm906 = vcmp.ge.s32.totalorder %v890, 3
      %vm907 = vcmp.ge.s32.totalorder %v891, 3
      %vm908 = vcmp.ge.s32.totalorder %v892, 3
      %vm909 = vcmp.ge.s32.totalorder %v893, 3
      %vm910 = vcmp.ge.s32.totalorder %v894, 3
      %vm911 = vcmp.ge.s32.totalorder %v895, 3
      %vm912 = vcmp.ge.s32.totalorder %v896, 3
      %vm913 = vcmp.ge.s32.totalorder %v897, 3
      %vm914 = vcmp.ge.s32.totalorder %v898, 3
      %vm915 = vcmp.ge.s32.totalorder %v899, 3
      %vm916 = vcmp.ge.s32.totalorder %v900, 3
      %vm917 = vcmp.ge.s32.totalorder %v901, 3
      %vm918 = vcmp.ge.s32.totalorder %v902, 3
      %vm919 = vcmp.lt.s32.totalorder %v887, 13
      %vm920 = vcmp.lt.s32.totalorder %v888, 13
      %vm921 = vcmp.lt.s32.totalorder %v889, 13
      %vm922 = vcmp.lt.s32.totalorder %v890, 13
      %vm923 = vcmp.lt.s32.totalorder %v891, 13
      %vm924 = vcmp.lt.s32.totalorder %v892, 13
      %vm925 = vcmp.lt.s32.totalorder %v893, 13
      %vm926 = vcmp.lt.s32.totalorder %v894, 13
      %vm927 = vcmp.lt.s32.totalorder %v895, 13
      %vm928 = vcmp.lt.s32.totalorder %v896, 13
      %vm929 = vcmp.lt.s32.totalorder %v897, 13
      %vm930 = vcmp.lt.s32.totalorder %v898, 13
      %vm931 = vcmp.lt.s32.totalorder %v899, 13
      %vm932 = vcmp.lt.s32.totalorder %v900, 13
      %vm933 = vcmp.lt.s32.totalorder %v901, 13
      %vm934 = vcmp.lt.s32.totalorder %v902, 13
      %v935 = vld [vmem:[#allocation2] sm:$0xff]
      %v936 = vld [vmem:[#allocation2 + $0x8] sm:$0xff]
      %v937 = vld [vmem:[#allocation2 + $0x10] sm:$0xff]
      %v938 = vld [vmem:[#allocation2 + $0x18] sm:$0xff]
      %v939 = vld [vmem:[#allocation2 + $0x20] sm:$0xff]
      %v940 = vld [vmem:[#allocation2 + $0x28] sm:$0xff]
      %v941 = vld [vmem:[#allocation2 + $0x30] sm:$0xff]
      %v942 = vld [vmem:[#allocation2 + $0x38] sm:$0xff]
      %v943 = vld [vmem:[#allocation2 + $0x40] sm:$0xff]
      %v944 = vld [vmem:[#allocation2 + $0x48] sm:$0xff]
      %v945 = vld [vmem:[#allocation2 + $0x50] sm:$0xff]
      %v946 = vld [vmem:[#allocation2 + $0x58] sm:$0xff]
      %v947 = vld [vmem:[#allocation2 + $0x60] sm:$0xff]
      %v948 = vld [vmem:[#allocation2 + $0x68] sm:$0xff]
      %v949 = vld [vmem:[#allocation2 + $0x70] sm:$0xff]
      %v950 = vld [vmem:[#allocation2 + $0x78] sm:$0xff]
      %vm951 = vcmask 261120
      %v952 = vsel %vm951, %v935, 0.0
      %v953 = vsel %vm951, %v936, 0.0
      %v954 = vadd.f32 %v952, %v953
      %v955 = vsel %vm951, %v937, 0.0
      %v956 = vadd.f32 %v954, %v955
      %v957 = vsel %vm951, %v938, 0.0
      %v958 = vadd.f32 %v956, %v957
      %v959 = vsel %vm951, %v939, 0.0
      %v960 = vadd.f32 %v958, %v959
      %v961 = vsel %vm951, %v940, 0.0
      %v962 = vadd.f32 %v960, %v961
      %v963 = vsel %vm951, %v941, 0.0
      %v964 = vadd.f32 %v962, %v963
      %v965 = vsel %vm951, %v942, 0.0
      %v966 = vadd.f32 %v964, %v965
      %v967 = vsel %vm951, %v943, 0.0
      %v968 = vadd.f32 %v966, %v967
      %v969 = vsel %vm951, %v944, 0.0
      %v970 = vadd.f32 %v968, %v969
      %v971 = vsel %vm951, %v945, 0.0
      %v972 = vadd.f32 %v970, %v971
      %v973 = vsel %vm951, %v946, 0.0
      %v974 = vadd.f32 %v972, %v973
      %v975 = vsel %vm951, %v947, 0.0
      %v976 = vadd.f32 %v974, %v975
      %v977 = vsel %vm951, %v948, 0.0
      %v978 = vadd.f32 %v976, %v977
      %v979 = vsel %vm951, %v949, 0.0
      %v980 = vadd.f32 %v978, %v979
      %v981 = vsel %vm951, %v950, 0.0
      %v982 = vadd.f32 %v980, %v981
      %v983 = vrot.slane %v982, 4
      %v984 = vadd.f32 %v982, %v983
      %v985 = vrot.slane %v984, 2
      %v986 = vadd.f32 %v984, %v985
      %v987 = vrot.slane %v986, 1
      %v988 = vadd.f32 %v986, %v987
      %v989 = vmul.f32 %v988, 0.0078125
      %v990 = vmul.f32 %v935, %v935
      %v991 = vmul.f32 %v936, %v936
      %v992 = vmul.f32 %v937, %v937
      %v993 = vmul.f32 %v938, %v938
      %v994 = vmul.f32 %v939, %v939
      %v995 = vmul.f32 %v940, %v940
      %v996 = vmul.f32 %v941, %v941
      %v997 = vmul.f32 %v942, %v942
      %v998 = vmul.f32 %v943, %v943
      %v999 = vmul.f32 %v944, %v944
      %v1000 = vmul.f32 %v945, %v945
      %v1001 = vmul.f32 %v946, %v946
      %v1002 = vmul.f32 %v947, %v947
      %v1003 = vmul.f32 %v948, %v948
      %v1004 = vmul.f32 %v949, %v949
      %v1005 = vmul.f32 %v950, %v950
      %v1006 = vsel %vm951, %v990, 0.0
      %v1007 = vsel %vm951, %v991, 0.0
      %v1008 = vadd.f32 %v1006, %v1007
      %v1009 = vsel %vm951, %v992, 0.0
      %v1010 = vadd.f32 %v1008, %v1009
      %v1011 = vsel %vm951, %v993, 0.0
      %v1012 = vadd.f32 %v1010, %v1011
      %v1013 = vsel %vm951, %v994, 0.0
      %v1014 = vadd.f32 %v1012, %v1013
      %v1015 = vsel %vm951, %v995, 0.0
      %v1016 = vadd.f32 %v1014, %v1015
      %v1017 = vsel %vm951, %v996, 0.0
      %v1018 = vadd.f32 %v1016, %v1017
      %v1019 = vsel %vm951, %v997, 0.0
      %v1020 = vadd.f32 %v1018, %v1019
      %v1021 = vsel %vm951, %v998, 0.0
      %v1022 = vadd.f32 %v1020, %v1021
      %v1023 = vsel %vm951, %v999, 0.0
      %v1024 = vadd.f32 %v1022, %v1023
      %v1025 = vsel %vm951, %v1000, 0.0
      %v1026 = vadd.f32 %v1024, %v1025
      %v1027 = vsel %vm951, %v1001, 0.0
      %v1028 = vadd.f32 %v1026, %v1027
      %v1029 = vsel %vm951, %v1002, 0.0
      %v1030 = vadd.f32 %v1028, %v1029
      %v1031 = vsel %vm951, %v1003, 0.0
      %v1032 = vadd.f32 %v1030, %v1031
      %v1033 = vsel %vm951, %v1004, 0.0
      %v1034 = vadd.f32 %v1032, %v1033
      %v1035 = vsel %vm951, %v1005, 0.0
      %v1036 = vadd.f32 %v1034, %v1035
      %v1037 = vrot.slane %v1036, 4
      %v1038 = vadd.f32 %v1036, %v1037
      %v1039 = vrot.slane %v1038, 2
      %v1040 = vadd.f32 %v1038, %v1039
      %v1041 = vrot.slane %v1040, 1
      %v1042 = vadd.f32 %v1040, %v1041
      %v1043 = vmul.f32 %v1042, 0.0078125
      %v1044 = vmul.f32 %v989, %v989
      %v1045 = vsub.f32 %v1043, %v1044
      %v1046 = vmax.f32 %v1045, 0.0
      %v1047 = vld [vmem:[%s430] sm:$0x1]
      %v1048 = vadd.f32 %v1046, 1e-05
      %v1049 = vrsqrt.pop %v1048
      %v1050 = vmul.f32 %v1047, %v1049
      %v1051 = vld [vmem:[%s433] sm:$0x1]
      %v1052 = vmul.f32 %v989, %v1050
      %v1053 = vsub.f32 %v1051, %v1052
      %v1055 = vlaneseq
      %v1056 = vshrl.u32 %v1055, 7
      %v1057 = vsub.s32 0, %v1056
      %v1058 = vrot.slane %v1050, %v1057
      %v1060 = vmul.f32 %v935, %v1058
      %v1061 = vmul.f32 %v936, %v1058
      %v1062 = vmul.f32 %v937, %v1058
      %v1063 = vmul.f32 %v938, %v1058
      %v1064 = vmul.f32 %v939, %v1058
      %v1065 = vmul.f32 %v940, %v1058
      %v1066 = vmul.f32 %v941, %v1058
      %v1067 = vmul.f32 %v942, %v1058
      %v1068 = vmul.f32 %v943, %v1058
      %v1069 = vmul.f32 %v944, %v1058
      %v1070 = vmul.f32 %v945, %v1058
      %v1071 = vmul.f32 %v946, %v1058
      %v1072 = vmul.f32 %v947, %v1058
      %v1073 = vmul.f32 %v948, %v1058
      %v1074 = vmul.f32 %v949, %v1058
      %v1075 = vmul.f32 %v950, %v1058
      %v1077 = vlaneseq
      %v1078 = vshrl.u32 %v1077, 7
      %v1079 = vsub.s32 0, %v1078
      %v1080 = vrot.slane %v1053, %v1079
      %v1082 = vadd.f32 %v1060, %v1080
      %v1083 = vadd.f32 %v1061, %v1080
      %v1084 = vadd.f32 %v1062, %v1080
      %v1085 = vadd.f32 %v1063, %v1080
      %v1086 = vadd.f32 %v1064, %v1080
      %v1087 = vadd.f32 %v1065, %v1080
      %v1088 = vadd.f32 %v1066, %v1080
      %v1089 = vadd.f32 %v1067, %v1080
      %v1090 = vadd.f32 %v1068, %v1080
      %v1091 = vadd.f32 %v1069, %v1080
      %v1092 = vadd.f32 %v1070, %v1080
      %v1093 = vadd.f32 %v1071, %v1080
      %v1094 = vadd.f32 %v1072, %v1080
      %v1095 = vadd.f32 %v1073, %v1080
      %v1096 = vadd.f32 %v1074, %v1080
      %v1097 = vadd.f32 %v1075, %v1080
      %v1098 = vrot.slane %v1082, 5
      %v1099 = vrot.slane %v1083, 5
      %v1100 = vrot.slane %v1084, 5
      %v1101 = vrot.slane %v1085, 5
      %v1102 = vrot.slane %v1086, 5
      %v1103 = vrot.slane %v1087, 5
      %v1104 = vrot.slane %v1088, 5
      %v1105 = vrot.slane %v1089, 5
      %v1106 = vrot.slane %v1090, 5
      %v1107 = vrot.slane %v1091, 5
      %v1108 = vrot.slane %v1092, 5
      %v1109 = vrot.slane %v1093, 5
      %v1110 = vrot.slane %v1094, 5
      %v1111 = vrot.slane %v1095, 5
      %v1112 = vrot.slane %v1096, 5
      %v1113 = vrot.slane %v1097, 5
      %vm1114 = vcmp.lt.s32.totalorder %v695, 3
      %v1115 = vsel %vm1114, %v1112, %v1113
      %v1116 = vsel %vm1114, %v1111, %v1112
      %v1117 = vsel %vm1114, %v1110, %v1111
      %v1118 = vsel %vm1114, %v1109, %v1110
      %v1119 = vsel %vm1114, %v1108, %v1109
      %v1120 = vsel %vm1114, %v1107, %v1108
      %v1121 = vsel %vm1114, %v1106, %v1107
      %v1122 = vsel %vm1114, %v1105, %v1106
      %v1123 = vsel %vm1114, %v1104, %v1105
      %v1124 = vsel %vm1114, %v1103, %v1104
      %v1125 = vsel %vm1114, %v1102, %v1103
      %v1126 = vsel %vm1114, %v1101, %v1102
      %v1127 = vsel %vm1114, %v1100, %v1101
      %v1128 = vsel %vm1114, %v1099, %v1100
      %v1129 = vsel %vm1114, %v1098, %v1099
      %v1130 = vsel %vm1114, %v1113, %v1098
      %v1131 = vsel %vm903, 1, 0
      %v1132 = vsel %vm904, 1, 0
      %v1133 = vsel %vm905, 1, 0
      %v1134 = vsel %vm906, 1, 0
      %v1135 = vsel %vm907, 1, 0
      %v1136 = vsel %vm908, 1, 0
      %v1137 = vsel %vm909, 1, 0
      %v1138 = vsel %vm910, 1, 0
      %v1139 = vsel %vm911, 1, 0
      %v1140 = vsel %vm912, 1, 0
      %v1141 = vsel %vm913, 1, 0
      %v1142 = vsel %vm914, 1, 0
      %v1143 = vsel %vm915, 1, 0
      %v1144 = vsel %vm916, 1, 0
      %v1145 = vsel %vm917, 1, 0
      %v1146 = vsel %vm918, 1, 0
      %vm1147 = vcmp.eq.s32.totalorder %v1131, 1
      %vm1148 = vcmp.eq.s32.totalorder %v1132, 1
      %vm1149 = vcmp.eq.s32.totalorder %v1133, 1
      %vm1150 = vcmp.eq.s32.totalorder %v1134, 1
      %vm1151 = vcmp.eq.s32.totalorder %v1135, 1
      %vm1152 = vcmp.eq.s32.totalorder %v1136, 1
      %vm1153 = vcmp.eq.s32.totalorder %v1137, 1
      %vm1154 = vcmp.eq.s32.totalorder %v1138, 1
      %vm1155 = vcmp.eq.s32.totalorder %v1139, 1
      %vm1156 = vcmp.eq.s32.totalorder %v1140, 1
      %vm1157 = vcmp.eq.s32.totalorder %v1141, 1
      %vm1158 = vcmp.eq.s32.totalorder %v1142, 1
      %vm1159 = vcmp.eq.s32.totalorder %v1143, 1
      %vm1160 = vcmp.eq.s32.totalorder %v1144, 1
      %vm1161 = vcmp.eq.s32.totalorder %v1145, 1
      %vm1162 = vcmp.eq.s32.totalorder %v1146, 1
      %v1163 = vsel %vm1147, %v1130, 0.0
      %v1164 = vsel %vm1148, %v1129, 0.0
      %v1165 = vsel %vm1149, %v1128, 0.0
      %v1166 = vsel %vm1150, %v1127, 0.0
      %v1167 = vsel %vm1151, %v1126, 0.0
      %v1168 = vsel %vm1152, %v1125, 0.0
      %v1169 = vsel %vm1153, %v1124, 0.0
      %v1170 = vsel %vm1154, %v1123, 0.0
      %v1171 = vsel %vm1155, %v1122, 0.0
      %v1172 = vsel %vm1156, %v1121, 0.0
      %v1173 = vsel %vm1157, %v1120, 0.0
      %v1174 = vsel %vm1158, %v1119, 0.0
      %v1175 = vsel %vm1159, %v1118, 0.0
      %v1176 = vsel %vm1160, %v1117, 0.0
      %v1177 = vsel %vm1161, %v1116, 0.0
      %v1178 = vsel %vm1162, %v1115, 0.0
      %v1179 = vrot.slane %v1082, 3
      %v1180 = vrot.slane %v1083, 3
      %v1181 = vrot.slane %v1084, 3
      %v1182 = vrot.slane %v1085, 3
      %v1183 = vrot.slane %v1086, 3
      %v1184 = vrot.slane %v1087, 3
      %v1185 = vrot.slane %v1088, 3
      %v1186 = vrot.slane %v1089, 3
      %v1187 = vrot.slane %v1090, 3
      %v1188 = vrot.slane %v1091, 3
      %v1189 = vrot.slane %v1092, 3
      %v1190 = vrot.slane %v1093, 3
      %v1191 = vrot.slane %v1094, 3
      %v1192 = vrot.slane %v1095, 3
      %v1193 = vrot.slane %v1096, 3
      %v1194 = vrot.slane %v1097, 3
      %vm1195 = vcmp.lt.s32.totalorder %v695, 5
      %v1196 = vsel %vm1195, %v1193, %v1194
      %v1197 = vsel %vm1195, %v1192, %v1193
      %v1198 = vsel %vm1195, %v1191, %v1192
      %v1199 = vsel %vm1195, %v1190, %v1191
      %v1200 = vsel %vm1195, %v1189, %v1190
      %v1201 = vsel %vm1195, %v1188, %v1189
      %v1202 = vsel %vm1195, %v1187, %v1188
      %v1203 = vsel %vm1195, %v1186, %v1187
      %v1204 = vsel %vm1195, %v1185, %v1186
      %v1205 = vsel %vm1195, %v1184, %v1185
      %v1206 = vsel %vm1195, %v1183, %v1184
      %v1207 = vsel %vm1195, %v1182, %v1183
      %v1208 = vsel %vm1195, %v1181, %v1182
      %v1209 = vsel %vm1195, %v1180, %v1181
      %v1210 = vsel %vm1195, %v1179, %v1180
      %v1211 = vsel %vm1195, %v1194, %v1179
      %v1212 = vsel %vm919, 1, 0
      %v1213 = vsel %vm920, 1, 0
      %v1214 = vsel %vm921, 1, 0
      %v1215 = vsel %vm922, 1, 0
      %v1216 = vsel %vm923, 1, 0
      %v1217 = vsel %vm924, 1, 0
      %v1218 = vsel %vm925, 1, 0
      %v1219 = vsel %vm926, 1, 0
      %v1220 = vsel %vm927, 1, 0
      %v1221 = vsel %vm928, 1, 0
      %v1222 = vsel %vm929, 1, 0
      %v1223 = vsel %vm930, 1, 0
      %v1224 = vsel %vm931, 1, 0
      %v1225 = vsel %vm932, 1, 0
      %v1226 = vsel %vm933, 1, 0
      %v1227 = vsel %vm934, 1, 0
      %vm1228 = vcmp.eq.s32.totalorder %v1212, 1
      %vm1229 = vcmp.eq.s32.totalorder %v1213, 1
      %vm1230 = vcmp.eq.s32.totalorder %v1214, 1
      %vm1231 = vcmp.eq.s32.totalorder %v1215, 1
      %vm1232 = vcmp.eq.s32.totalorder %v1216, 1
      %vm1233 = vcmp.eq.s32.totalorder %v1217, 1
      %vm1234 = vcmp.eq.s32.totalorder %v1218, 1
      %vm1235 = vcmp.eq.s32.totalorder %v1219, 1
      %vm1236 = vcmp.eq.s32.totalorder %v1220, 1
      %vm1237 = vcmp.eq.s32.totalorder %v1221, 1
      %vm1238 = vcmp.eq.s32.totalorder %v1222, 1
      %vm1239 = vcmp.eq.s32.totalorder %v1223, 1
      %vm1240 = vcmp.eq.s32.totalorder %v1224, 1
      %vm1241 = vcmp.eq.s32.totalorder %v1225, 1
      %vm1242 = vcmp.eq.s32.totalorder %v1226, 1
      %vm1243 = vcmp.eq.s32.totalorder %v1227, 1
      %v1244 = vsel %vm1228, %v1210, 0.0
      %v1245 = vsel %vm1229, %v1209, 0.0
      %v1246 = vsel %vm1230, %v1208, 0.0
      %v1247 = vsel %vm1231, %v1207, 0.0
      %v1248 = vsel %vm1232, %v1206, 0.0
      %v1249 = vsel %vm1233, %v1205, 0.0
      %v1250 = vsel %vm1234, %v1204, 0.0
      %v1251 = vsel %vm1235, %v1203, 0.0
      %v1252 = vsel %vm1236, %v1202, 0.0
      %v1253 = vsel %vm1237, %v1201, 0.0
      %v1254 = vsel %vm1238, %v1200, 0.0
      %v1255 = vsel %vm1239, %v1199, 0.0
      %v1256 = vsel %vm1240, %v1198, 0.0
      %v1257 = vsel %vm1241, %v1197, 0.0
      %v1258 = vsel %vm1242, %v1196, 0.0
      %v1259 = vsel %vm1243, %v1211, 0.0
      %1276 = vrot.lane.b32.xlu0 %v1082, 32
      %v1277 = vpop.permute.xlu0 %1276
      %1278 = vrot.lane.b32.xlu0 %v1083, 32
      %v1279 = vpop.permute.xlu0 %1278
      %1280 = vrot.lane.b32.xlu0 %v1084, 32
      %v1281 = vpop.permute.xlu0 %1280
      %1282 = vrot.lane.b32.xlu0 %v1085, 32
      %v1283 = vpop.permute.xlu0 %1282
      %1284 = vrot.lane.b32.xlu0 %v1086, 32
      %v1285 = vpop.permute.xlu0 %1284
      %1286 = vrot.lane.b32.xlu0 %v1087, 32
      %v1287 = vpop.permute.xlu0 %1286
      %1288 = vrot.lane.b32.xlu0 %v1088, 32
      %v1289 = vpop.permute.xlu0 %1288
      %1290 = vrot.lane.b32.xlu0 %v1089, 32
      %v1291 = vpop.permute.xlu0 %1290
      %1292 = vrot.lane.b32.xlu0 %v1090, 32
      %v1293 = vpop.permute.xlu0 %1292
      %1294 = vrot.lane.b32.xlu0 %v1091, 32
      %v1295 = vpop.permute.xlu0 %1294
      %1296 = vrot.lane.b32.xlu0 %v1092, 32
      %v1297 = vpop.permute.xlu0 %1296
      %1298 = vrot.lane.b32.xlu0 %v1093, 32
      %v1299 = vpop.permute.xlu0 %1298
      %1300 = vrot.lane.b32.xlu0 %v1094, 32
      %v1301 = vpop.permute.xlu0 %1300
      %1302 = vrot.lane.b32.xlu0 %v1095, 32
      %v1303 = vpop.permute.xlu0 %1302
      %1304 = vrot.lane.b32.xlu0 %v1096, 32
      %v1305 = vpop.permute.xlu0 %1304
      %1306 = vrot.lane.b32.xlu0 %v1097, 32
      %v1307 = vpop.permute.xlu0 %1306
      %1340 = vrot.lane.b32.xlu0 %v1244, 64
      %v1341 = vpop.permute.xlu0 %1340
      %1342 = vrot.lane.b32.xlu0 %v1245, 64
      %v1343 = vpop.permute.xlu0 %1342
      %1344 = vrot.lane.b32.xlu0 %v1246, 64
      %v1345 = vpop.permute.xlu0 %1344
      %1346 = vrot.lane.b32.xlu0 %v1247, 64
      %v1347 = vpop.permute.xlu0 %1346
      %1348 = vrot.lane.b32.xlu0 %v1248, 64
      %v1349 = vpop.permute.xlu0 %1348
      %1350 = vrot.lane.b32.xlu0 %v1249, 64
      %v1351 = vpop.permute.xlu0 %1350
      %1352 = vrot.lane.b32.xlu0 %v1250, 64
      %v1353 = vpop.permute.xlu0 %1352
      %1354 = vrot.lane.b32.xlu0 %v1251, 64
      %v1355 = vpop.permute.xlu0 %1354
      %1356 = vrot.lane.b32.xlu0 %v1252, 64
      %v1357 = vpop.permute.xlu0 %1356
      %1358 = vrot.lane.b32.xlu0 %v1253, 64
      %v1359 = vpop.permute.xlu0 %1358
      %1360 = vrot.lane.b32.xlu0 %v1254, 64
      %v1361 = vpop.permute.xlu0 %1360
      %1362 = vrot.lane.b32.xlu0 %v1255, 64
      %v1363 = vpop.permute.xlu0 %1362
      %1364 = vrot.lane.b32.xlu0 %v1256, 64
      %v1365 = vpop.permute.xlu0 %1364
      %1366 = vrot.lane.b32.xlu0 %v1257, 64
      %v1367 = vpop.permute.xlu0 %1366
      %1368 = vrot.lane.b32.xlu0 %v1258, 64
      %v1369 = vpop.permute.xlu0 %1368
      %1370 = vrot.lane.b32.xlu0 %v1259, 64
      %v1371 = vpop.permute.xlu0 %1370
      %v1388 = vsel %vm951, %v1163, %v1277
      %v1389 = vsel %vm951, %v1164, %v1279
      %v1390 = vsel %vm951, %v1165, %v1281
      %v1391 = vsel %vm951, %v1166, %v1283
      %v1392 = vsel %vm951, %v1167, %v1285
      %v1393 = vsel %vm951, %v1168, %v1287
      %v1394 = vsel %vm951, %v1169, %v1289
      %v1395 = vsel %vm951, %v1170, %v1291
      %v1396 = vsel %vm951, %v1171, %v1293
      %v1397 = vsel %vm951, %v1172, %v1295
      %v1398 = vsel %vm951, %v1173, %v1297
      %v1399 = vsel %vm951, %v1174, %v1299
      %v1400 = vsel %vm951, %v1175, %v1301
      %v1401 = vsel %vm951, %v1176, %v1303
      %v1402 = vsel %vm951, %v1177, %v1305
      %v1403 = vsel %vm951, %v1178, %v1307
      %vm1404 = vcmask 523264
      %v1405 = vsel %vm1404, %v1388, %v1341
      %v1406 = vsel %vm1404, %v1389, %v1343
      %v1407 = vsel %vm1404, %v1390, %v1345
      %v1408 = vsel %vm1404, %v1391, %v1347
      %v1409 = vsel %vm1404, %v1392, %v1349
      %v1410 = vsel %vm1404, %v1393, %v1351
      %v1411 = vsel %vm1404, %v1394, %v1353
      %v1412 = vsel %vm1404, %v1395, %v1355
      %v1413 = vsel %vm1404, %v1396, %v1357
      %v1414 = vsel %vm1404, %v1397, %v1359
      %v1415 = vsel %vm1404, %v1398, %v1361
      %v1416 = vsel %vm1404, %v1399, %v1363
      %v1417 = vsel %vm1404, %v1400, %v1365
      %v1418 = vsel %vm1404, %v1401, %v1367
      %v1419 = vsel %vm1404, %v1402, %v1369
      %v1420 = vsel %vm1404, %v1403, %v1371
      %v1421 = vpack.c.bf16 %v1406, %v1405
      %v1422 = vpack.c.bf16 %v1408, %v1407
      %v1423 = vpack.c.bf16 %v1410, %v1409
      %v1424 = vpack.c.bf16 %v1412, %v1411
      %v1425 = vpack.c.bf16 %v1414, %v1413
      %v1426 = vpack.c.bf16 %v1416, %v1415
      %v1427 = vpack.c.bf16 %v1418, %v1417
      %v1428 = vpack.c.bf16 %v1420, %v1419
      %v1429 = vld [vmem:[%s438] sm:$0xf]
      %v1430 = vld [vmem:[%s438 + $0x4] sm:$0xf]
      %v1431 = vld [vmem:[%s438 + $0x8] sm:$0xf]
      %v1432 = vld [vmem:[%s438 + $0xc] sm:$0xf]
      %v1433 = vld [vmem:[%s438 + $0x10] sm:$0xf]
      %v1434 = vld [vmem:[%s438 + $0x14] sm:$0xf]
      %v1435 = vld [vmem:[%s438 + $0x18] sm:$0xf]
      %v1436 = vld [vmem:[%s438 + $0x1c] sm:$0xf]
      %v1437 = vld [vmem:[%s438 + $0x20] sm:$0xf]
      %v1438 = vld [vmem:[%s438 + $0x24] sm:$0xf]
      %v1439 = vld [vmem:[%s438 + $0x28] sm:$0xf]
      %v1440 = vld [vmem:[%s438 + $0x2c] sm:$0xf]
      %v1441 = vld [vmem:[%s441] sm:$0x1]
      %v1443 = vlaneseq
      %v1444 = vshrl.u32 %v1443, 7
      %v1445 = vsub.s32 0, %v1444
      %v1446 = vrot.slane %v1441, %v1445
      %v1460 = vunpack.c.l.b16 %v1429
      %v1461 = vunpack.c.l.b16 %v1430
      %v1462 = vunpack.c.l.b16 %v1431
      %v1463 = vunpack.c.l.b16 %v1432
      %v1464 = vunpack.c.l.b16 %v1433
      %v1465 = vunpack.c.l.b16 %v1434
      %v1466 = vunpack.c.l.b16 %v1435
      %v1467 = vunpack.c.l.b16 %v1436
      %v1468 = vunpack.c.l.b16 %v1437
      %v1469 = vunpack.c.l.b16 %v1438
      %v1470 = vunpack.c.l.b16 %v1439
      %v1471 = vunpack.c.l.b16 %v1440
      %v1472 = vpack.c.b16 %v1461, %v1460
      %v1473 = vpack.c.b16 %v1463, %v1462
      %v1474 = vpack.c.b16 %v1465, %v1464
      %v1475 = vpack.c.b16 %v1467, %v1466
      %v1476 = vpack.c.b16 %v1469, %v1468
      %v1477 = vpack.c.b16 %v1471, %v1470
      %vm1484 = vcmask 785408
      %v1486 = vsel %vm1484, %v1421, 0
      %v1489 = vsel %vm1484, %v1422, 0
      %v1492 = vsel %vm1484, %v1423, 0
      %v1495 = vsel %vm1484, %v1424, 0
      %v1498 = vsel %vm1484, %v1425, 0
      %v1501 = vsel %vm1484, %v1426, 0
      %v1504 = vsel %vm1484, %v1427, 0
      %v1507 = vsel %vm1484, %v1428, 0
      %1509 = vmatprep.subr.bf16.mxu0 0
      %1510 = vmatpush1.bf16.msra.mxu0 %v1472
      %1511 = vmatprep.subr.bf16.mxu0 0
      %1512 = vmatpush1.bf16.msra.mxu0 %v1473
      %1513 = vmatprep.subr.bf16.mxu0 0
      %1514 = vmatpush1.bf16.msra.mxu0 %v1474
      %1515 = vmatprep.subr.bf16.mxu0 0
      %1516 = vmatpush1.bf16.msra.mxu0 %v1475
      %1517 = vmatprep.subr.bf16.mxu0 0
      %1518 = vmatpush1.bf16.msra.mxu0 %v1476
      %1519 = vmatprep.subr.bf16.mxu0 0
      %1520 = vmatpush1.bf16.msra.mxu0 %v1477
      %1521 = vmatprep.subr.bf16.mxu0 0
      %1522 = vmatpush1.bf16.msra.mxu0 0
      %1523 = vmatprep.subr.bf16.mxu0 0
      %1524 = vmatpush1.bf16.msra.mxu0 0
      %1525 = vmatprep.subr.bf16.mxu0 0
      %1526 = vmatpush1.bf16.msra.mxu0 0
      %1527 = vmatprep.subr.bf16.mxu0 0
      %1528 = vmatpush1.bf16.msra.mxu0 0
      %1529 = vmatprep.subr.bf16.mxu0 0
      %1530 = vmatpush1.bf16.msra.mxu0 0
      %1531 = vmatprep.subr.bf16.mxu0 0
      %1532 = vmatpush1.bf16.msra.mxu0 0
      %1533 = vmatprep.subr.bf16.mxu0 0
      %1534 = vmatpush1.bf16.msra.mxu0 0
      %1535 = vmatprep.subr.bf16.mxu0 0
      %1536 = vmatpush1.bf16.msra.mxu0 0
      %1537 = vmatprep.subr.bf16.mxu0 0
      %1538 = vmatpush1.bf16.msra.mxu0 0
      %1539 = vmatprep.subr.bf16.mxu0 0
      %1540 = vmatpush1.bf16.msra.mxu0 0
      %1541 = vmatprep.mubr.bf16.mxu0 0
      %1542 = vmatmul.mubr.bf16.gmra.mrb[0].mxu0 %v1486
      %v1543 = vpop.f32.mrb[0].mxu0
      %v1544 = vadd.f32 %v1446, %v1543
      %v1545 = vpop.f32.mrb[0].mxu0
      %v1546 = vpop.f32.mrb[0].mxu0
      %v1547 = vadd.f32 %v1446, %v1546
      %v1548 = vpop.f32.mrb[0].mxu0
      %1549 = vmatprep.mubr.bf16.mxu0 0
      %1550 = vmatmul.mubr.bf16.gmra.mrb[0].mxu0 %v1489
      %v1551 = vpop.f32.mrb[0].mxu0
      %v1552 = vadd.f32 %v1446, %v1551
      %v1553 = vpop.f32.mrb[0].mxu0
      %v1554 = vpop.f32.mrb[0].mxu0
      %v1555 = vadd.f32 %v1446, %v1554
      %v1556 = vpop.f32.mrb[0].mxu0
      %1557 = vmatprep.mubr.bf16.mxu0 0
      %1558 = vmatmul.mubr.bf16.gmra.mrb[0].mxu0 %v1492
      %v1559 = vpop.f32.mrb[0].mxu0
      %v1560 = vadd.f32 %v1446, %v1559
      %v1561 = vpop.f32.mrb[0].mxu0
      %v1562 = vpop.f32.mrb[0].mxu0
      %v1563 = vadd.f32 %v1446, %v1562
      %v1564 = vpop.f32.mrb[0].mxu0
      %1565 = vmatprep.mubr.bf16.mxu0 0
      %1566 = vmatmul.mubr.bf16.gmra.mrb[0].mxu0 %v1495
      %v1567 = vpop.f32.mrb[0].mxu0
      %v1568 = vadd.f32 %v1446, %v1567
      %v1569 = vpop.f32.mrb[0].mxu0
      %v1570 = vpop.f32.mrb[0].mxu0
      %v1571 = vadd.f32 %v1446, %v1570
      %v1572 = vpop.f32.mrb[0].mxu0
      %1573 = vmatprep.mubr.bf16.mxu0 0
      %1574 = vmatmul.mubr.bf16.gmra.mrb[0].mxu0 %v1498
      %v1575 = vpop.f32.mrb[0].mxu0
      %v1576 = vadd.f32 %v1446, %v1575
      %v1577 = vpop.f32.mrb[0].mxu0
      %v1578 = vpop.f32.mrb[0].mxu0
      %v1579 = vadd.f32 %v1446, %v1578
      %v1580 = vpop.f32.mrb[0].mxu0
      %1581 = vmatprep.mubr.bf16.mxu0 0
      %1582 = vmatmul.mubr.bf16.gmra.mrb[0].mxu0 %v1501
      %v1583 = vpop.f32.mrb[0].mxu0
      %v1584 = vadd.f32 %v1446, %v1583
      %v1585 = vpop.f32.mrb[0].mxu0
      %v1586 = vpop.f32.mrb[0].mxu0
      %v1587 = vadd.f32 %v1446, %v1586
      %v1588 = vpop.f32.mrb[0].mxu0
      %1589 = vmatprep.mubr.bf16.mxu0 0
      %1590 = vmatmul.mubr.bf16.gmra.mrb[0].mxu0 %v1504
      %v1591 = vpop.f32.mrb[0].mxu0
      %v1592 = vadd.f32 %v1446, %v1591
      %v1593 = vpop.f32.mrb[0].mxu0
      %v1594 = vpop.f32.mrb[0].mxu0
      %v1595 = vadd.f32 %v1446, %v1594
      %v1596 = vpop.f32.mrb[0].mxu0
      %1597 = vmatprep.mubr.bf16.mxu0 0
      %1598 = vmatmul.mubr.bf16.gmra.mrb[0].mxu0 %v1507
      %v1599 = vpop.f32.mrb[0].mxu0
      %v1600 = vadd.f32 %v1446, %v1599
      %v1601 = vpop.f32.mrb[0].mxu0
      %v1602 = vpop.f32.mrb[0].mxu0
      %v1603 = vadd.f32 %v1446, %v1602
      %v1604 = vpop.f32.mrb[0].mxu0
      %1605 = vdwg.mxu0
      %v1606 = vmax.f32 %v1544, 0.0
      %v1607 = vmax.f32 %v1547, 0.0
      %v1608 = vmax.f32 %v1552, 0.0
      %v1609 = vmax.f32 %v1555, 0.0
      %v1610 = vmax.f32 %v1560, 0.0
      %v1611 = vmax.f32 %v1563, 0.0
      %v1612 = vmax.f32 %v1568, 0.0
      %v1613 = vmax.f32 %v1571, 0.0
      %v1614 = vmax.f32 %v1576, 0.0
      %v1615 = vmax.f32 %v1579, 0.0
      %v1616 = vmax.f32 %v1584, 0.0
      %v1617 = vmax.f32 %v1587, 0.0
      %v1618 = vmax.f32 %v1592, 0.0
      %v1619 = vmax.f32 %v1595, 0.0
      %v1620 = vmax.f32 %v1600, 0.0
      %v1621 = vmax.f32 %v1603, 0.0
      %v1622 = vrot.slane %v1606, 5
      %v1623 = vrot.slane %v1607, 5
      %v1624 = vrot.slane %v1608, 5
      %v1625 = vrot.slane %v1609, 5
      %v1626 = vrot.slane %v1610, 5
      %v1627 = vrot.slane %v1611, 5
      %v1628 = vrot.slane %v1612, 5
      %v1629 = vrot.slane %v1613, 5
      %v1630 = vrot.slane %v1614, 5
      %v1631 = vrot.slane %v1615, 5
      %v1632 = vrot.slane %v1616, 5
      %v1633 = vrot.slane %v1617, 5
      %v1634 = vrot.slane %v1618, 5
      %v1635 = vrot.slane %v1619, 5
      %v1636 = vrot.slane %v1620, 5
      %v1637 = vrot.slane %v1621, 5
      %v1638 = vsel %vm1114, %v1636, %v1637
      %v1639 = vsel %vm1114, %v1635, %v1636
      %v1640 = vsel %vm1114, %v1634, %v1635
      %v1641 = vsel %vm1114, %v1633, %v1634
      %v1642 = vsel %vm1114, %v1632, %v1633
      %v1643 = vsel %vm1114, %v1631, %v1632
      %v1644 = vsel %vm1114, %v1630, %v1631
      %v1645 = vsel %vm1114, %v1629, %v1630
      %v1646 = vsel %vm1114, %v1628, %v1629
      %v1647 = vsel %vm1114, %v1627, %v1628
      %v1648 = vsel %vm1114, %v1626, %v1627
      %v1649 = vsel %vm1114, %v1625, %v1626
      %v1650 = vsel %vm1114, %v1624, %v1625
      %v1651 = vsel %vm1114, %v1623, %v1624
      %v1652 = vsel %vm1114, %v1622, %v1623
      %v1653 = vsel %vm1114, %v1637, %v1622
      %v1654 = vsel %vm1147, %v1653, 0.0
      %v1655 = vsel %vm1148, %v1652, 0.0
      %v1656 = vsel %vm1149, %v1651, 0.0
      %v1657 = vsel %vm1150, %v1650, 0.0
      %v1658 = vsel %vm1151, %v1649, 0.0
      %v1659 = vsel %vm1152, %v1648, 0.0
      %v1660 = vsel %vm1153, %v1647, 0.0
      %v1661 = vsel %vm1154, %v1646, 0.0
      %v1662 = vsel %vm1155, %v1645, 0.0
      %v1663 = vsel %vm1156, %v1644, 0.0
      %v1664 = vsel %vm1157, %v1643, 0.0
      %v1665 = vsel %vm1158, %v1642, 0.0
      %v1666 = vsel %vm1159, %v1641, 0.0
      %v1667 = vsel %vm1160, %v1640, 0.0
      %v1668 = vsel %vm1161, %v1639, 0.0
      %v1669 = vsel %vm1162, %v1638, 0.0
      %v1670 = vrot.slane %v1606, 3
      %v1671 = vrot.slane %v1607, 3
      %v1672 = vrot.slane %v1608, 3
      %v1673 = vrot.slane %v1609, 3
      %v1674 = vrot.slane %v1610, 3
      %v1675 = vrot.slane %v1611, 3
      %v1676 = vrot.slane %v1612, 3
      %v1677 = vrot.slane %v1613, 3
      %v1678 = vrot.slane %v1614, 3
      %v1679 = vrot.slane %v1615, 3
      %v1680 = vrot.slane %v1616, 3
      %v1681 = vrot.slane %v1617, 3
      %v1682 = vrot.slane %v1618, 3
      %v1683 = vrot.slane %v1619, 3
      %v1684 = vrot.slane %v1620, 3
      %v1685 = vrot.slane %v1621, 3
      %v1686 = vsel %vm1195, %v1684, %v1685
      %v1687 = vsel %vm1195, %v1683, %v1684
      %v1688 = vsel %vm1195, %v1682, %v1683
      %v1689 = vsel %vm1195, %v1681, %v1682
      %v1690 = vsel %vm1195, %v1680, %v1681
      %v1691 = vsel %vm1195, %v1679, %v1680
      %v1692 = vsel %vm1195, %v1678, %v1679
      %v1693 = vsel %vm1195, %v1677, %v1678
      %v1694 = vsel %vm1195, %v1676, %v1677
      %v1695 = vsel %vm1195, %v1675, %v1676
      %v1696 = vsel %vm1195, %v1674, %v1675
      %v1697 = vsel %vm1195, %v1673, %v1674
      %v1698 = vsel %vm1195, %v1672, %v1673
      %v1699 = vsel %vm1195, %v1671, %v1672
      %v1700 = vsel %vm1195, %v1670, %v1671
      %v1701 = vsel %vm1195, %v1685, %v1670
      %v1702 = vsel %vm1228, %v1700, 0.0
      %v1703 = vsel %vm1229, %v1699, 0.0
      %v1704 = vsel %vm1230, %v1698, 0.0
      %v1705 = vsel %vm1231, %v1697, 0.0
      %v1706 = vsel %vm1232, %v1696, 0.0
      %v1707 = vsel %vm1233, %v1695, 0.0
      %v1708 = vsel %vm1234, %v1694, 0.0
      %v1709 = vsel %vm1235, %v1693, 0.0
      %v1710 = vsel %vm1236, %v1692, 0.0
      %v1711 = vsel %vm1237, %v1691, 0.0
      %v1712 = vsel %vm1238, %v1690, 0.0
      %v1713 = vsel %vm1239, %v1689, 0.0
      %v1714 = vsel %vm1240, %v1688, 0.0
      %v1715 = vsel %vm1241, %v1687, 0.0
      %v1716 = vsel %vm1242, %v1686, 0.0
      %v1717 = vsel %vm1243, %v1701, 0.0
      %1734 = vrot.lane.b32.xlu0 %v1606, 32
      %v1735 = vpop.permute.xlu0 %1734
      %1736 = vrot.lane.b32.xlu0 %v1607, 32
      %v1737 = vpop.permute.xlu0 %1736
      %1738 = vrot.lane.b32.xlu0 %v1608, 32
      %v1739 = vpop.permute.xlu0 %1738
      %1740 = vrot.lane.b32.xlu0 %v1609, 32
      %v1741 = vpop.permute.xlu0 %1740
      %1742 = vrot.lane.b32.xlu0 %v1610, 32
      %v1743 = vpop.permute.xlu0 %1742
      %1744 = vrot.lane.b32.xlu0 %v1611, 32
      %v1745 = vpop.permute.xlu0 %1744
      %1746 = vrot.lane.b32.xlu0 %v1612, 32
      %v1747 = vpop.permute.xlu0 %1746
      %1748 = vrot.lane.b32.xlu0 %v1613, 32
      %v1749 = vpop.permute.xlu0 %1748
      %1750 = vrot.lane.b32.xlu0 %v1614, 32
      %v1751 = vpop.permute.xlu0 %1750
      %1752 = vrot.lane.b32.xlu0 %v1615, 32
      %v1753 = vpop.permute.xlu0 %1752
      %1754 = vrot.lane.b32.xlu0 %v1616, 32
      %v1755 = vpop.permute.xlu0 %1754
      %1756 = vrot.lane.b32.xlu0 %v1617, 32
      %v1757 = vpop.permute.xlu0 %1756
      %1758 = vrot.lane.b32.xlu0 %v1618, 32
      %v1759 = vpop.permute.xlu0 %1758
      %1760 = vrot.lane.b32.xlu0 %v1619, 32
      %v1761 = vpop.permute.xlu0 %1760
      %1762 = vrot.lane.b32.xlu0 %v1620, 32
      %v1763 = vpop.permute.xlu0 %1762
      %1764 = vrot.lane.b32.xlu0 %v1621, 32
      %v1765 = vpop.permute.xlu0 %1764
      %1798 = vrot.lane.b32.xlu0 %v1702, 64
      %v1799 = vpop.permute.xlu0 %1798
      %1800 = vrot.lane.b32.xlu0 %v1703, 64
      %v1801 = vpop.permute.xlu0 %1800
      %1802 = vrot.lane.b32.xlu0 %v1704, 64
      %v1803 = vpop.permute.xlu0 %1802
      %1804 = vrot.lane.b32.xlu0 %v1705, 64
      %v1805 = vpop.permute.xlu0 %1804
      %1806 = vrot.lane.b32.xlu0 %v1706, 64
      %v1807 = vpop.permute.xlu0 %1806
      %1808 = vrot.lane.b32.xlu0 %v1707, 64
      %v1809 = vpop.permute.xlu0 %1808
      %1810 = vrot.lane.b32.xlu0 %v1708, 64
      %v1811 = vpop.permute.xlu0 %1810
      %1812 = vrot.lane.b32.xlu0 %v1709, 64
      %v1813 = vpop.permute.xlu0 %1812
      %1814 = vrot.lane.b32.xlu0 %v1710, 64
      %v1815 = vpop.permute.xlu0 %1814
      %1816 = vrot.lane.b32.xlu0 %v1711, 64
      %v1817 = vpop.permute.xlu0 %1816
      %1818 = vrot.lane.b32.xlu0 %v1712, 64
      %v1819 = vpop.permute.xlu0 %1818
      %1820 = vrot.lane.b32.xlu0 %v1713, 64
      %v1821 = vpop.permute.xlu0 %1820
      %1822 = vrot.lane.b32.xlu0 %v1714, 64
      %v1823 = vpop.permute.xlu0 %1822
      %1824 = vrot.lane.b32.xlu0 %v1715, 64
      %v1825 = vpop.permute.xlu0 %1824
      %1826 = vrot.lane.b32.xlu0 %v1716, 64
      %v1827 = vpop.permute.xlu0 %1826
      %1828 = vrot.lane.b32.xlu0 %v1717, 64
      %v1829 = vpop.permute.xlu0 %1828
      %v1846 = vsel %vm951, %v1654, %v1735
      %v1847 = vsel %vm951, %v1655, %v1737
      %v1848 = vsel %vm951, %v1656, %v1739
      %v1849 = vsel %vm951, %v1657, %v1741
      %v1850 = vsel %vm951, %v1658, %v1743
      %v1851 = vsel %vm951, %v1659, %v1745
      %v1852 = vsel %vm951, %v1660, %v1747
      %v1853 = vsel %vm951, %v1661, %v1749
      %v1854 = vsel %vm951, %v1662, %v1751
      %v1855 = vsel %vm951, %v1663, %v1753
      %v1856 = vsel %vm951, %v1664, %v1755
      %v1857 = vsel %vm951, %v1665, %v1757
      %v1858 = vsel %vm951, %v1666, %v1759
      %v1859 = vsel %vm951, %v1667, %v1761
      %v1860 = vsel %vm951, %v1668, %v1763
      %v1861 = vsel %vm951, %v1669, %v1765
      %v1862 = vsel %vm1404, %v1846, %v1799
      %v1863 = vsel %vm1404, %v1847, %v1801
      %v1864 = vsel %vm1404, %v1848, %v1803
      %v1865 = vsel %vm1404, %v1849, %v1805
      %v1866 = vsel %vm1404, %v1850, %v1807
      %v1867 = vsel %vm1404, %v1851, %v1809
      %v1868 = vsel %vm1404, %v1852, %v1811
      %v1869 = vsel %vm1404, %v1853, %v1813
      %v1870 = vsel %vm1404, %v1854, %v1815
      %v1871 = vsel %vm1404, %v1855, %v1817
      %v1872 = vsel %vm1404, %v1856, %v1819
      %v1873 = vsel %vm1404, %v1857, %v1821
      %v1874 = vsel %vm1404, %v1858, %v1823
      %v1875 = vsel %vm1404, %v1859, %v1825
      %v1876 = vsel %vm1404, %v1860, %v1827
      %v1877 = vsel %vm1404, %v1861, %v1829
      %v1878 = vpack.c.bf16 %v1863, %v1862
      %v1879 = vpack.c.bf16 %v1865, %v1864
      %v1880 = vpack.c.bf16 %v1867, %v1866
      %v1881 = vpack.c.bf16 %v1869, %v1868
      %v1882 = vpack.c.bf16 %v1871, %v1870
      %v1883 = vpack.c.bf16 %v1873, %v1872
      %v1884 = vpack.c.bf16 %v1875, %v1874
      %v1885 = vpack.c.bf16 %v1877, %v1876
      %v1886 = vld [vmem:[%s446] sm:$0xf]
      %v1887 = vld [vmem:[%s446 + $0x4] sm:$0xf]
      %v1888 = vld [vmem:[%s446 + $0x8] sm:$0xf]
      %v1889 = vld [vmem:[%s446 + $0xc] sm:$0xf]
      %v1890 = vld [vmem:[%s446 + $0x10] sm:$0xf]
      %v1891 = vld [vmem:[%s446 + $0x14] sm:$0xf]
      %v1892 = vld [vmem:[%s446 + $0x18] sm:$0xf]
      %v1893 = vld [vmem:[%s446 + $0x1c] sm:$0xf]
      %v1894 = vld [vmem:[%s446 + $0x20] sm:$0xf]
      %v1895 = vld [vmem:[%s446 + $0x24] sm:$0xf]
      %v1896 = vld [vmem:[%s446 + $0x28] sm:$0xf]
      %v1897 = vld [vmem:[%s446 + $0x2c] sm:$0xf]
      %v1898 = vld [vmem:[%s449] sm:$0x1]
      %v1900 = vlaneseq
      %v1901 = vshrl.u32 %v1900, 7
      %v1902 = vsub.s32 0, %v1901
      %v1903 = vrot.slane %v1898, %v1902
      %v1917 = vunpack.c.l.b16 %v1886
      %v1918 = vunpack.c.l.b16 %v1887
      %v1919 = vunpack.c.l.b16 %v1888
      %v1920 = vunpack.c.l.b16 %v1889
      %v1921 = vunpack.c.l.b16 %v1890
      %v1922 = vunpack.c.l.b16 %v1891
      %v1923 = vunpack.c.l.b16 %v1892
      %v1924 = vunpack.c.l.b16 %v1893
      %v1925 = vunpack.c.l.b16 %v1894
      %v1926 = vunpack.c.l.b16 %v1895
      %v1927 = vunpack.c.l.b16 %v1896
      %v1928 = vunpack.c.l.b16 %v1897
      %v1929 = vpack.c.b16 %v1918, %v1917
      %v1930 = vpack.c.b16 %v1920, %v1919
      %v1931 = vpack.c.b16 %v1922, %v1921
      %v1932 = vpack.c.b16 %v1924, %v1923
      %v1933 = vpack.c.b16 %v1926, %v1925
      %v1934 = vpack.c.b16 %v1928, %v1927
      %v1942 = vsel %vm1484, %v1878, 0
      %v1945 = vsel %vm1484, %v1879, 0
      %v1948 = vsel %vm1484, %v1880, 0
      %v1951 = vsel %vm1484, %v1881, 0
      %v1954 = vsel %vm1484, %v1882, 0
      %v1957 = vsel %vm1484, %v1883, 0
      %v1960 = vsel %vm1484, %v1884, 0
      %v1963 = vsel %vm1484, %v1885, 0
      %1965 = vmatprep.subr.bf16.mxu0 0
      %1966 = vmatpush1.bf16.msra.mxu0 %v1929
      %1967 = vmatprep.subr.bf16.mxu0 0
      %1968 = vmatpush1.bf16.msra.mxu0 %v1930
      %1969 = vmatprep.subr.bf16.mxu0 0
      %1970 = vmatpush1.bf16.msra.mxu0 %v1931
      %1971 = vmatprep.subr.bf16.mxu0 0
      %1972 = vmatpush1.bf16.msra.mxu0 %v1932
      %1973 = vmatprep.subr.bf16.mxu0 0
      %1974 = vmatpush1.bf16.msra.mxu0 %v1933
      %1975 = vmatprep.subr.bf16.mxu0 0
      %1976 = vmatpush1.bf16.msra.mxu0 %v1934
      %1977 = vmatprep.subr.bf16.mxu0 0
      %1978 = vmatpush1.bf16.msra.mxu0 0
      %1979 = vmatprep.subr.bf16.mxu0 0
      %1980 = vmatpush1.bf16.msra.mxu0 0
      %1981 = vmatprep.subr.bf16.mxu0 0
      %1982 = vmatpush1.bf16.msra.mxu0 0
      %1983 = vmatprep.subr.bf16.mxu0 0
      %1984 = vmatpush1.bf16.msra.mxu0 0
      %1985 = vmatprep.subr.bf16.mxu0 0
      %1986 = vmatpush1.bf16.msra.mxu0 0
      %1987 = vmatprep.subr.bf16.mxu0 0
      %1988 = vmatpush1.bf16.msra.mxu0 0
      %1989 = vmatprep.subr.bf16.mxu0 0
      %1990 = vmatpush1.bf16.msra.mxu0 0
      %1991 = vmatprep.subr.bf16.mxu0 0
      %1992 = vmatpush1.bf16.msra.mxu0 0
      %1993 = vmatprep.subr.bf16.mxu0 0
      %1994 = vmatpush1.bf16.msra.mxu0 0
      %1995 = vmatprep.subr.bf16.mxu0 0
      %1996 = vmatpush1.bf16.msra.mxu0 0
      %1997 = vmatprep.mubr.bf16.mxu0 0
      %1998 = vmatmul.mubr.bf16.gmra.mrb[0].mxu0 %v1942
      %v1999 = vpop.f32.mrb[0].mxu0
      %v2000 = vadd.f32 %v1903, %v1999
      %v2001 = vpop.f32.mrb[0].mxu0
      %v2002 = vpop.f32.mrb[0].mxu0
      %v2003 = vadd.f32 %v1903, %v2002
      %v2004 = vpop.f32.mrb[0].mxu0
      %2005 = vmatprep.mubr.bf16.mxu0 0
      %2006 = vmatmul.mubr.bf16.gmra.mrb[0].mxu0 %v1945
      %v2007 = vpop.f32.mrb[0].mxu0
      %v2008 = vadd.f32 %v1903, %v2007
      %v2009 = vpop.f32.mrb[0].mxu0
      %v2010 = vpop.f32.mrb[0].mxu0
      %v2011 = vadd.f32 %v1903, %v2010
      %v2012 = vpop.f32.mrb[0].mxu0
      %2013 = vmatprep.mubr.bf16.mxu0 0
      %2014 = vmatmul.mubr.bf16.gmra.mrb[0].mxu0 %v1948
      %v2015 = vpop.f32.mrb[0].mxu0
      %v2016 = vadd.f32 %v1903, %v2015
      %v2017 = vpop.f32.mrb[0].mxu0
      %v2018 = vpop.f32.mrb[0].mxu0
      %v2019 = vadd.f32 %v1903, %v2018
      %v2020 = vpop.f32.mrb[0].mxu0
      %2021 = vmatprep.mubr.bf16.mxu0 0
      %2022 = vmatmul.mubr.bf16.gmra.mrb[0].mxu0 %v1951
      %v2023 = vpop.f32.mrb[0].mxu0
      %v2024 = vadd.f32 %v1903, %v2023
      %v2025 = vpop.f32.mrb[0].mxu0
      %v2026 = vpop.f32.mrb[0].mxu0
      %v2027 = vadd.f32 %v1903, %v2026
      %v2028 = vpop.f32.mrb[0].mxu0
      %2029 = vmatprep.mubr.bf16.mxu0 0
      %2030 = vmatmul.mubr.bf16.gmra.mrb[0].mxu0 %v1954
      %v2031 = vpop.f32.mrb[0].mxu0
      %v2032 = vadd.f32 %v1903, %v2031
      %v2033 = vpop.f32.mrb[0].mxu0
      %v2034 = vpop.f32.mrb[0].mxu0
      %v2035 = vadd.f32 %v1903, %v2034
      %v2036 = vpop.f32.mrb[0].mxu0
      %2037 = vmatprep.mubr.bf16.mxu0 0
      %2038 = vmatmul.mubr.bf16.gmra.mrb[0].mxu0 %v1957
      %v2039 = vpop.f32.mrb[0].mxu0
      %v2040 = vadd.f32 %v1903, %v2039
      %v2041 = vpop.f32.mrb[0].mxu0
      %v2042 = vpop.f32.mrb[0].mxu0
      %v2043 = vadd.f32 %v1903, %v2042
      %v2044 = vpop.f32.mrb[0].mxu0
      %2045 = vmatprep.mubr.bf16.mxu0 0
      %2046 = vmatmul.mubr.bf16.gmra.mrb[0].mxu0 %v1960
      %v2047 = vpop.f32.mrb[0].mxu0
      %v2048 = vadd.f32 %v1903, %v2047
      %v2049 = vpop.f32.mrb[0].mxu0
      %v2050 = vpop.f32.mrb[0].mxu0
      %v2051 = vadd.f32 %v1903, %v2050
      %v2052 = vpop.f32.mrb[0].mxu0
      %2053 = vmatprep.mubr.bf16.mxu0 0
      %2054 = vmatmul.mubr.bf16.gmra.mrb[0].mxu0 %v1963
      %v2055 = vpop.f32.mrb[0].mxu0
      %v2056 = vadd.f32 %v1903, %v2055
      %v2057 = vpop.f32.mrb[0].mxu0
      %v2058 = vpop.f32.mrb[0].mxu0
      %v2059 = vadd.f32 %v1903, %v2058
      %v2060 = vpop.f32.mrb[0].mxu0
      %2061 = vdwg.mxu0
      %v2062 = vadd.f32 %v2000, %v1082
      %v2063 = vadd.f32 %v2003, %v1083
      %v2064 = vadd.f32 %v2008, %v1084
      %v2065 = vadd.f32 %v2011, %v1085
      %v2066 = vadd.f32 %v2016, %v1086
      %v2067 = vadd.f32 %v2019, %v1087
      %v2068 = vadd.f32 %v2024, %v1088
      %v2069 = vadd.f32 %v2027, %v1089
      %v2070 = vadd.f32 %v2032, %v1090
      %v2071 = vadd.f32 %v2035, %v1091
      %v2072 = vadd.f32 %v2040, %v1092
      %v2073 = vadd.f32 %v2043, %v1093
      %v2074 = vadd.f32 %v2048, %v1094
      %v2075 = vadd.f32 %v2051, %v1095
      %v2076 = vadd.f32 %v2056, %v1096
      %v2077 = vadd.f32 %v2059, %v1097
      %v2078 = vmax.f32 %v2062, 0.0
      %v2079 = vmax.f32 %v2063, 0.0
      %v2080 = vmax.f32 %v2064, 0.0
      %v2081 = vmax.f32 %v2065, 0.0
      %v2082 = vmax.f32 %v2066, 0.0
      %v2083 = vmax.f32 %v2067, 0.0
      %v2084 = vmax.f32 %v2068, 0.0
      %v2085 = vmax.f32 %v2069, 0.0
      %v2086 = vmax.f32 %v2070, 0.0
      %v2087 = vmax.f32 %v2071, 0.0
      %v2088 = vmax.f32 %v2072, 0.0
      %v2089 = vmax.f32 %v2073, 0.0
      %v2090 = vmax.f32 %v2074, 0.0
      %v2091 = vmax.f32 %v2075, 0.0
      %v2092 = vmax.f32 %v2076, 0.0
      %v2093 = vmax.f32 %v2077, 0.0
      %p2094 = scmp.lt.s32.totalorder %s24, 1
      // Predicated region
      $region69: #{tpu_custom_call.1} parent=63 // pred_check
        %p2095 = pneg %p2094
      $region70: #{tpu_custom_call.1} parent=63 // pred_check_branch
        %2097 = sbr.rel (%p2095) target = $region72
      $region71: #{tpu_custom_call.1} parent=63 // pred_region
        %2098 = vst.msk [vmem:[#allocation2] sm:$0xff] %vm951, %v2078
        %2099 = vst.msk [vmem:[#allocation2 + $0x8] sm:$0xff] %vm951, %v2079
        %2100 = vst.msk [vmem:[#allocation2 + $0x10] sm:$0xff] %vm951, %v2080
        %2101 = vst.msk [vmem:[#allocation2 + $0x18] sm:$0xff] %vm951, %v2081
        %2102 = vst.msk [vmem:[#allocation2 + $0x20] sm:$0xff] %vm951, %v2082
        %2103 = vst.msk [vmem:[#allocation2 + $0x28] sm:$0xff] %vm951, %v2083
        %2104 = vst.msk [vmem:[#allocation2 + $0x30] sm:$0xff] %vm951, %v2084
        %2105 = vst.msk [vmem:[#allocation2 + $0x38] sm:$0xff] %vm951, %v2085
        %2106 = vst.msk [vmem:[#allocation2 + $0x40] sm:$0xff] %vm951, %v2086
        %2107 = vst.msk [vmem:[#allocation2 + $0x48] sm:$0xff] %vm951, %v2087
        %2108 = vst.msk [vmem:[#allocation2 + $0x50] sm:$0xff] %vm951, %v2088
        %2109 = vst.msk [vmem:[#allocation2 + $0x58] sm:$0xff] %vm951, %v2089
        %2110 = vst.msk [vmem:[#allocation2 + $0x60] sm:$0xff] %vm951, %v2090
        %2111 = vst.msk [vmem:[#allocation2 + $0x68] sm:$0xff] %vm951, %v2091
        %2112 = vst.msk [vmem:[#allocation2 + $0x70] sm:$0xff] %vm951, %v2092
        %2113 = vst.msk [vmem:[#allocation2 + $0x78] sm:$0xff] %vm951, %v2093
      $region72: #{tpu_custom_call.1} parent=63 // pred_fallthru
        _
      %p2114 = scmp.eq.s32.totalorder %s24, 1
      // Predicated region
      $region73: #{tpu_custom_call.1} parent=63 // pred_check
        %p2115 = pneg %p2114
      $region74: #{tpu_custom_call.1} parent=63 // pred_check_branch
        %2117 = sbr.rel (%p2115) target = $region76
      $region75: #{tpu_custom_call.1} parent=63 // pred_region
        %v2118 = vld [vmem:[%s9] sm:$0xff]
        %v2119 = vld [vmem:[%s9 + $0x8] sm:$0xff]
        %v2120 = vld [vmem:[%s9 + $0x10] sm:$0xff]
        %v2121 = vld [vmem:[%s9 + $0x18] sm:$0xff]
        %v2122 = vld [vmem:[#allocation3] sm:$0x1]
        %v2124 = vlaneseq
        %v2125 = vshrl.u32 %v2124, 7
        %v2126 = vsub.s32 0, %v2125
        %v2127 = vrot.slane %v2122, %v2126
        %2128 = vset.pattern.permute.xlu0 0
        %2129 = vperm.xlu0 %2128, %v2127
        %v2130 = vpop.permute.xlu0 %2129
        %v2133 = vsel %vm951, %v2078, 0
        %v2136 = vsel %vm951, %v2079, 0
        %v2139 = vsel %vm951, %v2080, 0
        %v2142 = vsel %vm951, %v2081, 0
        %v2145 = vsel %vm951, %v2082, 0
        %v2148 = vsel %vm951, %v2083, 0
        %v2151 = vsel %vm951, %v2084, 0
        %v2154 = vsel %vm951, %v2085, 0
        %v2157 = vsel %vm951, %v2086, 0
        %v2160 = vsel %vm951, %v2087, 0
        %v2163 = vsel %vm951, %v2088, 0
        %v2166 = vsel %vm951, %v2089, 0
        %v2169 = vsel %vm951, %v2090, 0
        %v2172 = vsel %vm951, %v2091, 0
        %v2175 = vsel %vm951, %v2092, 0
        %v2178 = vsel %vm951, %v2093, 0
        %2180 = vmatprep.subr.mxu0 0.0
        %2181 = vmatpush1.msra.mxu0 %v2118
        %2182 = vmatprep.subr.mxu0 0.0
        %2183 = vmatpush1.msra.mxu0 %v2119
        %2184 = vmatprep.subr.mxu0 0.0
        %2185 = vmatpush1.msra.mxu0 %v2120
        %2186 = vmatprep.subr.mxu0 0.0
        %2187 = vmatpush1.msra.mxu0 %v2121
        %2188 = vmatprep.subr.mxu0 0.0
        %2189 = vmatpush1.msra.mxu0 0.0
        %2190 = vmatprep.subr.mxu0 0.0
        %2191 = vmatpush1.msra.mxu0 0.0
        %2192 = vmatprep.subr.mxu0 0.0
        %2193 = vmatpush1.msra.mxu0 0.0
        %2194 = vmatprep.subr.mxu0 0.0
        %2195 = vmatpush1.msra.mxu0 0.0
        %2196 = vmatprep.subr.mxu0 0.0
        %2197 = vmatpush1.msra.mxu0 0.0
        %2198 = vmatprep.subr.mxu0 0.0
        %2199 = vmatpush1.msra.mxu0 0.0
        %2200 = vmatprep.subr.mxu0 0.0
        %2201 = vmatpush1.msra.mxu0 0.0
        %2202 = vmatprep.subr.mxu0 0.0
        %2203 = vmatpush1.msra.mxu0 0.0
        %2204 = vmatprep.subr.mxu0 0.0
        %2205 = vmatpush1.msra.mxu0 0.0
        %2206 = vmatprep.subr.mxu0 0.0
        %2207 = vmatpush1.msra.mxu0 0.0
        %2208 = vmatprep.subr.mxu0 0.0
        %2209 = vmatpush1.msra.mxu0 0.0
        %2210 = vmatprep.subr.mxu0 0.0
        %2211 = vmatpush1.msra.mxu0 0.0
        %2212 = vmatprep.subr.mxu0 0.0
        %2213 = vmatpush1.msra.mxu0 0.0
        %2214 = vmatprep.subr.mxu0 0.0
        %2215 = vmatpush1.msra.mxu0 0.0
        %2216 = vmatprep.subr.mxu0 0.0
        %2217 = vmatpush1.msra.mxu0 0.0
        %2218 = vmatprep.subr.mxu0 0.0
        %2219 = vmatpush1.msra.mxu0 0.0
        %2220 = vmatprep.subr.mxu0 0.0
        %2221 = vmatpush1.msra.mxu0 0.0
        %2222 = vmatprep.subr.mxu0 0.0
        %2223 = vmatpush1.msra.mxu0 0.0
        %2224 = vmatprep.subr.mxu0 0.0
        %2225 = vmatpush1.msra.mxu0 0.0
        %2226 = vmatprep.subr.mxu0 0.0
        %2227 = vmatpush1.msra.mxu0 0.0
        %2228 = vmatprep.subr.mxu0 0.0
        %2229 = vmatpush1.msra.mxu0 0.0
        %2230 = vmatprep.subr.mxu0 0.0
        %2231 = vmatpush1.msra.mxu0 0.0
        %2232 = vmatprep.subr.mxu0 0.0
        %2233 = vmatpush1.msra.mxu0 0.0
        %2234 = vmatprep.subr.mxu0 0.0
        %2235 = vmatpush1.msra.mxu0 0.0
        %2236 = vmatprep.subr.mxu0 0.0
        %2237 = vmatpush1.msra.mxu0 0.0
        %2238 = vmatprep.subr.mxu0 0.0
        %2239 = vmatpush1.msra.mxu0 0.0
        %2240 = vmatprep.subr.mxu0 0.0
        %2241 = vmatpush1.msra.mxu0 0.0
        %2242 = vmatprep.subr.mxu0 0.0
        %2243 = vmatpush1.msra.mxu0 0.0
        %2244 = vmatprep.mubr.f32.mxu0 0.0
        %2245 = vmatmul.mubr.f32.gmra.mrb[0].mxu0 %v2133
        %v2246 = vpop.f32.mrb[0].mxu0
        %v2247 = vadd.f32 %v2130, %v2246
        %v2248 = vpop.f32.mrb[0].mxu0
        %2249 = vmatprep.mubr.f32.mxu0 0.0
        %2250 = vmatmul.mubr.f32.gmra.mrb[0].mxu0 %v2136
        %v2251 = vpop.f32.mrb[0].mxu0
        %v2252 = vadd.f32 %v2130, %v2251
        %v2253 = vpop.f32.mrb[0].mxu0
        %2254 = vmatprep.mubr.f32.mxu0 0.0
        %2255 = vmatmul.mubr.f32.gmra.mrb[0].mxu0 %v2139
        %v2256 = vpop.f32.mrb[0].mxu0
        %v2257 = vadd.f32 %v2130, %v2256
        %v2258 = vpop.f32.mrb[0].mxu0
        %2259 = vmatprep.mubr.f32.mxu0 0.0
        %2260 = vmatmul.mubr.f32.gmra.mrb[0].mxu0 %v2142
        %v2261 = vpop.f32.mrb[0].mxu0
        %v2262 = vadd.f32 %v2130, %v2261
        %v2263 = vpop.f32.mrb[0].mxu0
        %2264 = vmatprep.mubr.f32.mxu0 0.0
        %2265 = vmatmul.mubr.f32.gmra.mrb[0].mxu0 %v2145
        %v2266 = vpop.f32.mrb[0].mxu0
        %v2267 = vadd.f32 %v2130, %v2266
        %v2268 = vpop.f32.mrb[0].mxu0
        %2269 = vmatprep.mubr.f32.mxu0 0.0
        %2270 = vmatmul.mubr.f32.gmra.mrb[0].mxu0 %v2148
        %v2271 = vpop.f32.mrb[0].mxu0
        %v2272 = vadd.f32 %v2130, %v2271
        %v2273 = vpop.f32.mrb[0].mxu0
        %2274 = vmatprep.mubr.f32.mxu0 0.0
        %2275 = vmatmul.mubr.f32.gmra.mrb[0].mxu0 %v2151
        %v2276 = vpop.f32.mrb[0].mxu0
        %v2277 = vadd.f32 %v2130, %v2276
        %v2278 = vpop.f32.mrb[0].mxu0
        %2279 = vmatprep.mubr.f32.mxu0 0.0
        %2280 = vmatmul.mubr.f32.gmra.mrb[0].mxu0 %v2154
        %v2281 = vpop.f32.mrb[0].mxu0
        %v2282 = vadd.f32 %v2130, %v2281
        %v2283 = vpop.f32.mrb[0].mxu0
        %2284 = vmatprep.mubr.f32.mxu0 0.0
        %2285 = vmatmul.mubr.f32.gmra.mrb[0].mxu0 %v2157
        %v2286 = vpop.f32.mrb[0].mxu0
        %v2287 = vadd.f32 %v2130, %v2286
        %v2288 = vpop.f32.mrb[0].mxu0
        %2289 = vmatprep.mubr.f32.mxu0 0.0
        %2290 = vmatmul.mubr.f32.gmra.mrb[0].mxu0 %v2160
        %v2291 = vpop.f32.mrb[0].mxu0
        %v2292 = vadd.f32 %v2130, %v2291
        %v2293 = vpop.f32.mrb[0].mxu0
        %2294 = vmatprep.mubr.f32.mxu0 0.0
        %2295 = vmatmul.mubr.f32.gmra.mrb[0].mxu0 %v2163
        %v2296 = vpop.f32.mrb[0].mxu0
        %v2297 = vadd.f32 %v2130, %v2296
        %v2298 = vpop.f32.mrb[0].mxu0
        %2299 = vmatprep.mubr.f32.mxu0 0.0
        %2300 = vmatmul.mubr.f32.gmra.mrb[0].mxu0 %v2166
        %v2301 = vpop.f32.mrb[0].mxu0
        %v2302 = vadd.f32 %v2130, %v2301
        %v2303 = vpop.f32.mrb[0].mxu0
        %2304 = vmatprep.mubr.f32.mxu0 0.0
        %2305 = vmatmul.mubr.f32.gmra.mrb[0].mxu0 %v2169
        %v2306 = vpop.f32.mrb[0].mxu0
        %v2307 = vadd.f32 %v2130, %v2306
        %v2308 = vpop.f32.mrb[0].mxu0
        %2309 = vmatprep.mubr.f32.mxu0 0.0
        %2310 = vmatmul.mubr.f32.gmra.mrb[0].mxu0 %v2172
        %v2311 = vpop.f32.mrb[0].mxu0
        %v2312 = vadd.f32 %v2130, %v2311
        %v2313 = vpop.f32.mrb[0].mxu0
        %2314 = vmatprep.mubr.f32.mxu0 0.0
        %2315 = vmatmul.mubr.f32.gmra.mrb[0].mxu0 %v2175
        %v2316 = vpop.f32.mrb[0].mxu0
        %v2317 = vadd.f32 %v2130, %v2316
        %v2318 = vpop.f32.mrb[0].mxu0
        %2319 = vmatprep.mubr.f32.mxu0 0.0
        %2320 = vmatmul.mubr.f32.gmra.mrb[0].mxu0 %v2178
        %v2321 = vpop.f32.mrb[0].mxu0
        %v2322 = vadd.f32 %v2130, %v2321
        %v2323 = vpop.f32.mrb[0].mxu0
        %2324 = vdwg.mxu0
        %vm2325 = vcmask 15360
        %2326 = vst.msk [vmem:[%s11] sm:$0xff] %vm2325, %v2247
        %2327 = vst.msk [vmem:[%s11 + $0x8] sm:$0xff] %vm2325, %v2252
        %2328 = vst.msk [vmem:[%s11 + $0x10] sm:$0xff] %vm2325, %v2257
        %2329 = vst.msk [vmem:[%s11 + $0x18] sm:$0xff] %vm2325, %v2262
        %2330 = vst.msk [vmem:[%s11 + $0x20] sm:$0xff] %vm2325, %v2267
        %2331 = vst.msk [vmem:[%s11 + $0x28] sm:$0xff] %vm2325, %v2272
        %2332 = vst.msk [vmem:[%s11 + $0x30] sm:$0xff] %vm2325, %v2277
        %2333 = vst.msk [vmem:[%s11 + $0x38] sm:$0xff] %vm2325, %v2282
        %2334 = vst.msk [vmem:[%s11 + $0x40] sm:$0xff] %vm2325, %v2287
        %2335 = vst.msk [vmem:[%s11 + $0x48] sm:$0xff] %vm2325, %v2292
        %2336 = vst.msk [vmem:[%s11 + $0x50] sm:$0xff] %vm2325, %v2297
        %2337 = vst.msk [vmem:[%s11 + $0x58] sm:$0xff] %vm2325, %v2302
        %2338 = vst.msk [vmem:[%s11 + $0x60] sm:$0xff] %vm2325, %v2307
        %2339 = vst.msk [vmem:[%s11 + $0x68] sm:$0xff] %vm2325, %v2312
        %2340 = vst.msk [vmem:[%s11 + $0x70] sm:$0xff] %vm2325, %v2317
        %2341 = vst.msk [vmem:[%s11 + $0x78] sm:$0xff] %vm2325, %v2322
      $region76: #{tpu_custom_call.1} parent=63 // pred_fallthru
        _
      // Predicated region
      $region77: #{tpu_custom_call.1} parent=63 // pred_check
        %p2342 = pneg %p298
      $region78: #{tpu_custom_call.1} parent=63 // pred_check_branch
        %2344 = sbr.rel (%p2342) target = $region80
      $region79: #{tpu_custom_call.1} parent=63 // pred_region
        _
      $region80: #{tpu_custom_call.1} parent=63 // pred_fallthru
        _
      // Predicated region
      $region81: #{tpu_custom_call.1} parent=63 // pred_check
        %p2345 = pneg %p298
      $region82: #{tpu_custom_call.1} parent=63 // pred_check_branch
        %2347 = sbr.rel (%p2345) target = $region84
      $region83: #{tpu_custom_call.1} parent=63 // pred_region
        _
      $region84: #{tpu_custom_call.1} parent=63 // pred_fallthru
        _
    $region64: #{tpu_custom_call.1} parent=5 // pred_fallthru
      _
    %p2348 = scmp.le.s32.totalorder 2, %s19
    // Predicated region
    $region85: #{tpu_custom_call.1} parent=5 // pred_check
      %p2349 = pneg %p2348
    $region86: #{tpu_custom_call.1} parent=5 // pred_check_branch
      %2351 = sbr.rel (%p2349) target = $region88
    $region87: #{tpu_custom_call.1} parent=5 // pred_region
      %s2352 = ssub.s32 %s19, 2
    $region88: #{tpu_custom_call.1} parent=5 // pred_fallthru
      _
  $region6: #{tpu_custom_call.1} parent=0 // loop_footer
    %s23 = sadd.s32 1, %s19
  $region7: #{tpu_custom_call.1} parent=0 // loop_footer_branch
    %18 = sbr.rel target = $region3
  $region8: #{tpu_custom_call.1} parent=0 // loop_exit
    _

</llo_original>
